<compile_context>
chip_gen: v6e
topology: v6e:2x2x1
jax: 0.10.0
libtpu: 0.0.40
codegen_flags: <defaults>
</compile_context>

<pallas_src>
import math

import jax
import jax.numpy as jnp
from jax.experimental import pallas as pl
from jax.experimental.pallas import tpu as pltpu

D_MODEL = 16
N_HEADS = 4
PFF_DIM = 32
HEAD_DIM = D_MODEL // N_HEADS
SCALE = math.sqrt(D_MODEL // N_HEADS)   # torch.sqrt(FloatTensor([d_model // n_heads]))
LN_EPS = 1e-5
NEG_INF = -1e10


def _layernorm(x, gamma, beta):
    mu = jnp.mean(x, axis=-1, keepdims=True)
    var = jnp.mean((x - mu) ** 2, axis=-1, keepdims=True)
    return (x - mu) * jax.lax.rsqrt(var + LN_EPS) * gamma + beta


def decoder_layer_kernel(
    # inputs (one batch block per grid step)
    trg_ref, enc_ref, tmask_ref, smask_ref,
    wqkv_ref, bqkv_ref, wo_ref, bo_ref,
    ln1_g_ref, ln1_b_ref, ln2_g_ref, ln2_b_ref,
    w1_ref, b1_ref, w2_ref, b2_ref,
    ln3_g_ref, ln3_b_ref,
    # outputs
    out_ref, attn_ref,
):
    CB, T, D = trg_ref.shape
    S = enc_ref.shape[1]

    x = trg_ref[...]                   # (CB, T, D)
    e = enc_ref[...]                   # (CB, S, D)
    tmask = tmask_ref[...][:, 0]       # (CB, T, T)
    smask = smask_ref[...][:, 0]       # (CB, 1, S)  -> broadcasts over the query axis

    wqkv = wqkv_ref[...]               # (D, 3D)  = wq | wk | wv
    bqkv = bqkv_ref[...]               # (1, 3D)
    wo = wo_ref[...]                   # (D, D)
    bo = bo_ref[...]                   # (1, D)

    # Fold batch onto the sublane axis for all dense projections.
    x_flat = x.reshape(CB * T, D)
    e_flat = e.reshape(CB * S, D)

    def attention_core(Q, K, V, mask, Tq, Tk):
        # Q: (CB*Tq, D); K, V: (CB*Tk, D); mask broadcastable to (CB, Tq, Tk)
        heads_w, heads_a = [], []
        for h in range(N_HEADS):                       # static unrolled loop (N_HEADS = 4)
            s0 = h * HEAD_DIM
            Qh = Q[:, s0:s0 + HEAD_DIM].reshape(CB, Tq, HEAD_DIM)
            Kh = K[:, s0:s0 + HEAD_DIM].reshape(CB, Tk, HEAD_DIM)
            Vh = V[:, s0:s0 + HEAD_DIM].reshape(CB, Tk, HEAD_DIM)
            energy = jnp.einsum("bqd,bkd->bqk", Qh, Kh,
                                preferred_element_type=jnp.float32) * (1.0 / SCALE)
            energy = jnp.where(mask == 0.0, NEG_INF, energy)
            energy = energy - jnp.max(energy, axis=-1, keepdims=True)
            p = jnp.exp(energy)
            denom = jnp.sum(p, axis=-1, keepdims=True)
            inv = pl.reciprocal(denom, approx=True)    # EUP; one Newton step restores f32 accuracy
            inv = inv * (2.0 - denom * inv)
            attn = p * inv
            heads_a.append(attn)
            heads_w.append(jnp.einsum("bqk,bkd->bqd", attn, Vh,
                                      preferred_element_type=jnp.float32))
        # concat over heads, then ONE output projection (instead of 4 accumulated matmuls)
        weighted = jnp.concatenate(heads_w, axis=-1).reshape(CB * Tq, D)
        out = jnp.dot(weighted, wo, preferred_element_type=jnp.float32) + bo
        attn_all = jnp.stack(heads_a, axis=1)          # (CB, N_HEADS, Tq, Tk)
        return out, attn_all

    # 1) masked self-attention: fused Q|K|V projection = a single MXU matmul
    qkv = jnp.dot(x_flat, wqkv, preferred_element_type=jnp.float32) + bqkv      # (CB*T, 3D)
    sa, _ = attention_core(qkv[:, :D], qkv[:, D:2 * D], qkv[:, 2 * D:], tmask, T, T)
    x1 = _layernorm(x_flat + sa, ln1_g_ref[...], ln1_b_ref[...])

    # 2) "encoder" attention (same SelfAttention weights, as in the reference forward)
    q2 = jnp.dot(x1, wqkv[:, :D], preferred_element_type=jnp.float32) + bqkv[:, :D]
    kv2 = jnp.dot(e_flat, wqkv[:, D:], preferred_element_type=jnp.float32) + bqkv[:, D:]
    ca, attn_all = attention_core(q2, kv2[:, :D], kv2[:, D:], smask, T, S)
    x2 = _layernorm(x1 + ca, ln2_g_ref[...], ln2_b_ref[...])

    # 3) position-wise feed-forward + residual + layernorm
    hdn = jnp.maximum(
        jnp.dot(x2, w1_ref[...], preferred_element_type=jnp.float32) + b1_ref[...], 0.0)
    ff = jnp.dot(hdn, w2_ref[...], preferred_element_type=jnp.float32) + b2_ref[...]
    x3 = _layernorm(x2 + ff, ln3_g_ref[...], ln3_b_ref[...])

    out_ref[...] = x3.reshape(CB, T, D).astype(out_ref.dtype)
    attn_ref[...] = attn_all.astype(attn_ref.dtype)    # single stacked store of all heads


def _default_num_batch_blocks(B):
    # v7x has 2 TensorCores per chip -> split the batch 2 ways ("parallel" grid axis).
    # v5e / v6e have a single TC: extra grid steps are pure serial overhead, so use 1 step.
    try:
        kind = jax.devices()[0].device_kind.lower()
    except Exception:
        kind = ""
    if "v7" in kind and B % 2 == 0:
        return 2
    return 1


def decoder_layer(trg, enc_src, trg_mask, src_mask, params, num_batch_blocks=None):
    (wq, bq, wk, bk, wv, bv, wo, bo,
     g1, be1, g2, be2, w1, b1, w2, b2, g3, be3) = params

    B, T, D = trg.shape
    S = enc_src.shape[1]
    assert D == D_MODEL

    if num_batch_blocks is None:
        num_batch_blocks = _default_num_batch_blocks(B)
    assert B % num_batch_blocks == 0
    CB = B // num_batch_blocks

    # Fuse the Q/K/V projection weights wrapper-side (one MXU push for self-attention).
    wqkv = jnp.concatenate([wq, wk, wv], axis=1)   # (D, 3D)
    bqkv = jnp.concatenate([bq, bk, bv], axis=1)   # (1, 3D)

    full = lambda shape: pl.BlockSpec(shape, lambda b: (0,) * len(shape))

    in_specs = [
        pl.BlockSpec((CB, T, D), lambda b: (b, 0, 0)),        # trg
        pl.BlockSpec((CB, S, D), lambda b: (b, 0, 0)),        # enc_src
        pl.BlockSpec((CB, 1, T, T), lambda b: (b, 0, 0, 0)),  # trg_mask
        pl.BlockSpec((CB, 1, 1, S), lambda b: (b, 0, 0, 0)),  # src_mask
        full((D, 3 * D)), full((1, 3 * D)),                   # fused wqkv, bqkv
        full((D, D)), full((1, D)),                           # wo, bo
        full((1, D)), full((1, D)),                           # ln1 gamma, beta
        full((1, D)), full((1, D)),                           # ln2 gamma, beta
        full((D, PFF_DIM)), full((1, PFF_DIM)),               # pff fc1
        full((PFF_DIM, D)), full((1, D)),                     # pff fc2
        full((1, D)), full((1, D)),                           # ln3 gamma, beta
    ]
    out_specs = [
        pl.BlockSpec((CB, T, D), lambda b: (b, 0, 0)),
        pl.BlockSpec((CB, N_HEADS, T, S), lambda b: (b, 0, 0, 0)),
    ]
    out_shape = [
        jax.ShapeDtypeStruct((B, T, D), jnp.float32),
        jax.ShapeDtypeStruct((B, N_HEADS, T, S), jnp.float32),
    ]

    return pl.pallas_call(
        decoder_layer_kernel,
        grid=(num_batch_blocks,),
        in_specs=in_specs,
        out_specs=out_specs,
        out_shape=out_shape,
        compiler_params=pltpu.CompilerParams(
            dimension_semantics=("parallel",)),
    )(trg, enc_src, trg_mask, src_mask,
      wqkv, bqkv, wo, bo, g1, be1, g2, be2, w1, b1, w2, b2, g3, be3)


# ---------------- pure-JAX reference (for verification) ----------------
def decoder_layer_ref(trg, enc_src, trg_mask, src_mask, params):
    (wq, bq, wk, bk, wv, bv, wo, bo,
     g1, be1, g2, be2, w1, b1, w2, b2, g3, be3) = params

    def ln(x, g, b):
        mu = jnp.mean(x, -1, keepdims=True)
        var = jnp.mean((x - mu) ** 2, -1, keepdims=True)
        return (x - mu) * jax.lax.rsqrt(var + LN_EPS) * g + b

    def mha(q_in, kv_in, mask):
        B, Tq, D = q_in.shape
        Tk = kv_in.shape[1]
        Q = (q_in @ wq + bq).reshape(B, Tq, N_HEADS, HEAD_DIM).transpose(0, 2, 1, 3)
        K = (kv_in @ wk + bk).reshape(B, Tk, N_HEADS, HEAD_DIM).transpose(0, 2, 1, 3)
        V = (kv_in @ wv + bv).reshape(B, Tk, N_HEADS, HEAD_DIM).transpose(0, 2, 1, 3)
        energy = jnp.einsum("bhqd,bhkd->bhqk", Q, K) / SCALE
        energy = jnp.where(mask == 0.0, NEG_INF, energy)
        attn = jax.nn.softmax(energy, axis=-1)
        weighted = jnp.einsum("bhqk,bhkd->bhqd", attn, V)
        weighted = weighted.transpose(0, 2, 1, 3).reshape(B, Tq, D)
        return weighted @ wo + bo, attn

    sa, _ = mha(trg, trg, trg_mask)
    x1 = ln(trg + sa, g1, be1)
    ca, attn = mha(x1, enc_src, src_mask)
    x2 = ln(x1 + ca, g2, be2)
    ff = jnp.maximum(x2 @ w1 + b1, 0.0) @ w2 + b2
    x3 = ln(x2 + ff, g3, be3)
    return x3, attn


def init_params(key):
    ks = jax.random.split(key, 12)

    def lin(k, fan_in, fan_out):
        kw, kb = jax.random.split(k)
        bound = 1.0 / math.sqrt(fan_in)
        w = jax.random.uniform(kw, (fan_in, fan_out), jnp.float32, -bound, bound)
        b = jax.random.uniform(kb, (1, fan_out), jnp.float32, -bound, bound)
        return w, b

    wq, bq = lin(ks[0], D_MODEL, D_MODEL)
    wk, bk = lin(ks[1], D_MODEL, D_MODEL)
    wv, bv = lin(ks[2], D_MODEL, D_MODEL)
    wo, bo = lin(ks[3], D_MODEL, D_MODEL)
    g1 = 1.0 + 0.1 * jax.random.normal(ks[4], (1, D_MODEL), jnp.float32)
    be1 = 0.1 * jax.random.normal(ks[5], (1, D_MODEL), jnp.float32)
    g2 = 1.0 + 0.1 * jax.random.normal(ks[6], (1, D_MODEL), jnp.float32)
    be2 = 0.1 * jax.random.normal(ks[7], (1, D_MODEL), jnp.float32)
    w1, b1 = lin(ks[8], D_MODEL, PFF_DIM)
    w2, b2 = lin(ks[9], PFF_DIM, D_MODEL)
    g3 = 1.0 + 0.1 * jax.random.normal(ks[10], (1, D_MODEL), jnp.float32)
    be3 = 0.1 * jax.random.normal(ks[11], (1, D_MODEL), jnp.float32)
    return (wq, bq, wk, bk, wv, bv, wo, bo,
            g1, be1, g2, be2, w1, b1, w2, b2, g3, be3)


if __name__ == "__main__":
    key = jax.random.PRNGKey(0)
    kp, kt, ke = jax.random.split(key, 3)

    B, T, S = 2, 8, 10   # batch, trg_len, src_len
    params = init_params(kp)

    trg = jax.random.normal(kt, (B, T, D_MODEL), jnp.float32)
    enc_src = jax.random.normal(ke, (B, S, D_MODEL), jnp.float32)
    # causal mask for the decoder self-attention; full visibility for enc-dec attention
    trg_mask = jnp.tril(jnp.ones((T, T), jnp.float32))[None, None].repeat(B, axis=0)
    src_mask = jnp.ones((B, 1, 1, S), jnp.float32)

    out, attn = decoder_layer(trg, enc_src, trg_mask, src_mask, params)
    out = jax.block_until_ready(out)
    attn = jax.block_until_ready(attn)

    ref_out, ref_attn = decoder_layer_ref(trg, enc_src, trg_mask, src_mask, params)
    assert out.shape == (B, T, D_MODEL) and attn.shape == (B, N_HEADS, T, S)
    assert jnp.allclose(out, ref_out, rtol=1e-4, atol=1e-4)
    assert jnp.allclose(attn, ref_attn, rtol=1e-4, atol=1e-4)

    print("KERNEL_OK")
</pallas_src>

<mosaic_0001>
module attributes {stable_mosaic.version = 11 : i64} {
  func.func @decoder_layer_kernel(%arg0: i32, %arg1: memref<2x8x16xf32, #tpu.memory_space<vmem>>, %arg2: memref<2x10x16xf32, #tpu.memory_space<vmem>>, %arg3: memref<2x1x8x8xf32, #tpu.memory_space<vmem>>, %arg4: memref<2x1x1x10xf32, #tpu.memory_space<vmem>>, %arg5: memref<16x48xf32, #tpu.memory_space<vmem>>, %arg6: memref<1x48xf32, #tpu.memory_space<vmem>>, %arg7: memref<16x16xf32, #tpu.memory_space<vmem>>, %arg8: memref<1x16xf32, #tpu.memory_space<vmem>>, %arg9: memref<1x16xf32, #tpu.memory_space<vmem>>, %arg10: memref<1x16xf32, #tpu.memory_space<vmem>>, %arg11: memref<1x16xf32, #tpu.memory_space<vmem>>, %arg12: memref<1x16xf32, #tpu.memory_space<vmem>>, %arg13: memref<16x32xf32, #tpu.memory_space<vmem>>, %arg14: memref<1x32xf32, #tpu.memory_space<vmem>>, %arg15: memref<32x16xf32, #tpu.memory_space<vmem>>, %arg16: memref<1x16xf32, #tpu.memory_space<vmem>>, %arg17: memref<1x16xf32, #tpu.memory_space<vmem>>, %arg18: memref<1x16xf32, #tpu.memory_space<vmem>>, %arg19: memref<2x8x16xf32, #tpu.memory_space<vmem>>, %arg20: memref<2x4x8x10xf32, #tpu.memory_space<vmem>>) attributes {dimension_semantics = [#tpu.dimension_semantics<parallel>], iteration_bounds = array<i64: 1>, scalar_prefetch = 0 : i64, scratch_operands = 0 : i64, tpu.core_type = #tpu.core_type<tc>, window_params = [{transform_indices = @transform_0, window_bounds = array<i64: 2, 8, 16>}, {transform_indices = @transform_1, window_bounds = array<i64: 2, 10, 16>}, {transform_indices = @transform_2, window_bounds = array<i64: 2, 1, 8, 8>}, {transform_indices = @transform_3, window_bounds = array<i64: 2, 1, 1, 10>}, {pipeline_mode = #tpu.pipeline_mode<synchronous>, transform_indices = @transform_4, window_bounds = array<i64: 16, 48>}, {pipeline_mode = #tpu.pipeline_mode<synchronous>, transform_indices = @transform_5, window_bounds = array<i64: 1, 48>}, {pipeline_mode = #tpu.pipeline_mode<synchronous>, transform_indices = @transform_6, window_bounds = array<i64: 16, 16>}, {pipeline_mode = #tpu.pipeline_mode<synchronous>, transform_indices = @transform_7, window_bounds = array<i64: 1, 16>}, {pipeline_mode = #tpu.pipeline_mode<synchronous>, transform_indices = @transform_8, window_bounds = array<i64: 1, 16>}, {pipeline_mode = #tpu.pipeline_mode<synchronous>, transform_indices = @transform_9, window_bounds = array<i64: 1, 16>}, {pipeline_mode = #tpu.pipeline_mode<synchronous>, transform_indices = @transform_10, window_bounds = array<i64: 1, 16>}, {pipeline_mode = #tpu.pipeline_mode<synchronous>, transform_indices = @transform_11, window_bounds = array<i64: 1, 16>}, {pipeline_mode = #tpu.pipeline_mode<synchronous>, transform_indices = @transform_12, window_bounds = array<i64: 16, 32>}, {pipeline_mode = #tpu.pipeline_mode<synchronous>, transform_indices = @transform_13, window_bounds = array<i64: 1, 32>}, {pipeline_mode = #tpu.pipeline_mode<synchronous>, transform_indices = @transform_14, window_bounds = array<i64: 32, 16>}, {pipeline_mode = #tpu.pipeline_mode<synchronous>, transform_indices = @transform_15, window_bounds = array<i64: 1, 16>}, {pipeline_mode = #tpu.pipeline_mode<synchronous>, transform_indices = @transform_16, window_bounds = array<i64: 1, 16>}, {pipeline_mode = #tpu.pipeline_mode<synchronous>, transform_indices = @transform_17, window_bounds = array<i64: 1, 16>}, {transform_indices = @transform_18, window_bounds = array<i64: 2, 8, 16>}, {transform_indices = @transform_19, window_bounds = array<i64: 2, 4, 8, 10>}]} {
    %c0 = arith.constant 0 : index
    %c0_0 = arith.constant 0 : index
    %c0_1 = arith.constant 0 : index
    %0 = vector.load %arg1[%c0, %c0_0, %c0_1] : memref<2x8x16xf32, #tpu.memory_space<vmem>>, vector<2x8x16xf32>
    %c0_2 = arith.constant 0 : index
    %c0_3 = arith.constant 0 : index
    %c0_4 = arith.constant 0 : index
    %1 = vector.load %arg2[%c0_2, %c0_3, %c0_4] : memref<2x10x16xf32, #tpu.memory_space<vmem>>, vector<2x10x16xf32>
    %c0_5 = arith.constant 0 : index
    %c0_6 = arith.constant 0 : index
    %c0_7 = arith.constant 0 : index
    %c0_8 = arith.constant 0 : index
    %2 = vector.load %arg3[%c0_5, %c0_6, %c0_7, %c0_8] : memref<2x1x8x8xf32, #tpu.memory_space<vmem>>, vector<2x1x8x8xf32>
    %3 = vector.shape_cast %2 : vector<2x1x8x8xf32> to vector<2x8x8xf32>
    %c0_9 = arith.constant 0 : index
    %c0_10 = arith.constant 0 : index
    %c0_11 = arith.constant 0 : index
    %c0_12 = arith.constant 0 : index
    %4 = vector.load %arg4[%c0_9, %c0_10, %c0_11, %c0_12] : memref<2x1x1x10xf32, #tpu.memory_space<vmem>>, vector<2x1x1x10xf32>
    %5 = vector.shape_cast %4 : vector<2x1x1x10xf32> to vector<2x1x10xf32>
    %c0_13 = arith.constant 0 : index
    %c0_14 = arith.constant 0 : index
    %6 = vector.load %arg5[%c0_13, %c0_14] : memref<16x48xf32, #tpu.memory_space<vmem>>, vector<16x48xf32>
    %c0_15 = arith.constant 0 : index
    %c0_16 = arith.constant 0 : index
    %7 = vector.load %arg6[%c0_15, %c0_16] : memref<1x48xf32, #tpu.memory_space<vmem>>, vector<1x48xf32>
    %c0_17 = arith.constant 0 : index
    %c0_18 = arith.constant 0 : index
    %8 = vector.load %arg7[%c0_17, %c0_18] : memref<16x16xf32, #tpu.memory_space<vmem>>, vector<16x16xf32>
    %c0_19 = arith.constant 0 : index
    %c0_20 = arith.constant 0 : index
    %9 = vector.load %arg8[%c0_19, %c0_20] : memref<1x16xf32, #tpu.memory_space<vmem>>, vector<1x16xf32>
    %10 = vector.shape_cast %0 : vector<2x8x16xf32> to vector<16x16xf32>
    %11 = vector.shape_cast %1 : vector<2x10x16xf32> to vector<20x16xf32>
    %cst = arith.constant dense<0.000000e+00> : vector<16x48xf32>
    %12 = tpu.matmul %10, %6, %cst {dimension_numbers = #tpu.dot_dimension_numbers<[1], [0], [0], [1], [0, 0, 1, 1], [], []>} : vector<16x16xf32>, vector<16x48xf32>, vector<16x48xf32> -> vector<16x48xf32>
    %13 = vector.broadcast %7 : vector<1x48xf32> to vector<16x48xf32>
    %14 = arith.addf %12, %13 : vector<16x48xf32>
    %15 = vector.extract_strided_slice %14 {offsets = [0, 0], sizes = [16, 16], strides = [1, 1]} : vector<16x48xf32> to vector<16x16xf32>
    %16 = vector.extract_strided_slice %14 {offsets = [0, 16], sizes = [16, 16], strides = [1, 1]} : vector<16x48xf32> to vector<16x16xf32>
    %17 = vector.extract_strided_slice %14 {offsets = [0, 32], sizes = [16, 16], strides = [1, 1]} : vector<16x48xf32> to vector<16x16xf32>
    %18 = vector.extract_strided_slice %15 {offsets = [0, 0], sizes = [16, 4], strides = [1, 1]} : vector<16x16xf32> to vector<16x4xf32>
    %19 = vector.shape_cast %18 : vector<16x4xf32> to vector<2x8x4xf32>
    %20 = vector.extract_strided_slice %16 {offsets = [0, 0], sizes = [16, 4], strides = [1, 1]} : vector<16x16xf32> to vector<16x4xf32>
    %21 = vector.shape_cast %20 : vector<16x4xf32> to vector<2x8x4xf32>
    %22 = vector.extract_strided_slice %17 {offsets = [0, 0], sizes = [16, 4], strides = [1, 1]} : vector<16x16xf32> to vector<16x4xf32>
    %23 = vector.shape_cast %22 : vector<16x4xf32> to vector<2x8x4xf32>
    "tpu.trace_start"() <{level = 10 : i32, message = "bqd,bkd->bqk"}> : () -> ()
    %cst_21 = arith.constant dense<0.000000e+00> : vector<2x8x8xf32>
    %24 = tpu.matmul %19, %21, %cst_21 {dimension_numbers = #tpu.dot_dimension_numbers<[2], [2], [1], [1], [0, 0, 0, 1, 1, 1], [0], [0]>} : vector<2x8x4xf32>, vector<2x8x4xf32>, vector<2x8x8xf32> -> vector<2x8x8xf32>
    "tpu.trace_stop"() : () -> ()
    %cst_22 = arith.constant 5.000000e-01 : f32
    %25 = vector.broadcast %cst_22 : f32 to vector<2x8x8xf32>
    %26 = arith.mulf %24, %25 : vector<2x8x8xf32>
    %cst_23 = arith.constant 0.000000e+00 : f32
    %27 = vector.broadcast %cst_23 : f32 to vector<2x8x8xf32>
    %28 = arith.cmpf oeq, %3, %27 : vector<2x8x8xf32>
    %cst_24 = arith.constant -1.000000e+10 : f32
    %29 = vector.broadcast %cst_24 : f32 to vector<2x8x8xf32>
    %30 = arith.select %28, %29, %26 : vector<2x8x8xi1>, vector<2x8x8xf32>
    %cst_25 = arith.constant dense<0xFF800000> : vector<2x8xf32>
    %31 = vector.multi_reduction <maximumf>, %30, %cst_25 [2] : vector<2x8x8xf32> to vector<2x8xf32>
    %32 = vector.shape_cast %31 : vector<2x8xf32> to vector<2x8x1xf32>
    %33 = vector.broadcast %32 : vector<2x8x1xf32> to vector<2x8x8xf32>
    %34 = arith.subf %30, %33 : vector<2x8x8xf32>
    %35 = math.exp %34 : vector<2x8x8xf32>
    %cst_26 = arith.constant dense<0.000000e+00> : vector<2x8xf32>
    %36 = vector.multi_reduction <add>, %35, %cst_26 [2] : vector<2x8x8xf32> to vector<2x8xf32>
    %37 = vector.shape_cast %36 : vector<2x8xf32> to vector<2x8x1xf32>
    %38 = tpu.reciprocal %37 {approx = true} : vector<2x8x1xf32> -> vector<2x8x1xf32>
    %39 = arith.mulf %37, %38 : vector<2x8x1xf32>
    %cst_27 = arith.constant 2.000000e+00 : f32
    %40 = vector.broadcast %cst_27 : f32 to vector<2x8x1xf32>
    %41 = arith.subf %40, %39 : vector<2x8x1xf32>
    %42 = arith.mulf %38, %41 : vector<2x8x1xf32>
    %43 = vector.broadcast %42 : vector<2x8x1xf32> to vector<2x8x8xf32>
    %44 = arith.mulf %35, %43 : vector<2x8x8xf32>
    "tpu.trace_start"() <{level = 10 : i32, message = "bqk,bkd->bqd"}> : () -> ()
    %cst_28 = arith.constant dense<0.000000e+00> : vector<2x8x4xf32>
    %45 = tpu.matmul %44, %23, %cst_28 {dimension_numbers = #tpu.dot_dimension_numbers<[2], [1], [1], [2], [0, 0, 0, 1, 1, 2], [0], [0]>} : vector<2x8x8xf32>, vector<2x8x4xf32>, vector<2x8x4xf32> -> vector<2x8x4xf32>
    "tpu.trace_stop"() : () -> ()
    %46 = vector.extract_strided_slice %15 {offsets = [0, 4], sizes = [16, 4], strides = [1, 1]} : vector<16x16xf32> to vector<16x4xf32>
    %47 = vector.shape_cast %46 : vector<16x4xf32> to vector<2x8x4xf32>
    %48 = vector.extract_strided_slice %16 {offsets = [0, 4], sizes = [16, 4], strides = [1, 1]} : vector<16x16xf32> to vector<16x4xf32>
    %49 = vector.shape_cast %48 : vector<16x4xf32> to vector<2x8x4xf32>
    %50 = vector.extract_strided_slice %17 {offsets = [0, 4], sizes = [16, 4], strides = [1, 1]} : vector<16x16xf32> to vector<16x4xf32>
    %51 = vector.shape_cast %50 : vector<16x4xf32> to vector<2x8x4xf32>
    "tpu.trace_start"() <{level = 10 : i32, message = "bqd,bkd->bqk"}> : () -> ()
    %cst_29 = arith.constant dense<0.000000e+00> : vector<2x8x8xf32>
    %52 = tpu.matmul %47, %49, %cst_29 {dimension_numbers = #tpu.dot_dimension_numbers<[2], [2], [1], [1], [0, 0, 0, 1, 1, 1], [0], [0]>} : vector<2x8x4xf32>, vector<2x8x4xf32>, vector<2x8x8xf32> -> vector<2x8x8xf32>
    "tpu.trace_stop"() : () -> ()
    %cst_30 = arith.constant 5.000000e-01 : f32
    %53 = vector.broadcast %cst_30 : f32 to vector<2x8x8xf32>
    %54 = arith.mulf %52, %53 : vector<2x8x8xf32>
    %cst_31 = arith.constant 0.000000e+00 : f32
    %55 = vector.broadcast %cst_31 : f32 to vector<2x8x8xf32>
    %56 = arith.cmpf oeq, %3, %55 : vector<2x8x8xf32>
    %cst_32 = arith.constant -1.000000e+10 : f32
    %57 = vector.broadcast %cst_32 : f32 to vector<2x8x8xf32>
    %58 = arith.select %56, %57, %54 : vector<2x8x8xi1>, vector<2x8x8xf32>
    %cst_33 = arith.constant dense<0xFF800000> : vector<2x8xf32>
    %59 = vector.multi_reduction <maximumf>, %58, %cst_33 [2] : vector<2x8x8xf32> to vector<2x8xf32>
    %60 = vector.shape_cast %59 : vector<2x8xf32> to vector<2x8x1xf32>
    %61 = vector.broadcast %60 : vector<2x8x1xf32> to vector<2x8x8xf32>
    %62 = arith.subf %58, %61 : vector<2x8x8xf32>
    %63 = math.exp %62 : vector<2x8x8xf32>
    %cst_34 = arith.constant dense<0.000000e+00> : vector<2x8xf32>
    %64 = vector.multi_reduction <add>, %63, %cst_34 [2] : vector<2x8x8xf32> to vector<2x8xf32>
    %65 = vector.shape_cast %64 : vector<2x8xf32> to vector<2x8x1xf32>
    %66 = tpu.reciprocal %65 {approx = true} : vector<2x8x1xf32> -> vector<2x8x1xf32>
    %67 = arith.mulf %65, %66 : vector<2x8x1xf32>
    %cst_35 = arith.constant 2.000000e+00 : f32
    %68 = vector.broadcast %cst_35 : f32 to vector<2x8x1xf32>
    %69 = arith.subf %68, %67 : vector<2x8x1xf32>
    %70 = arith.mulf %66, %69 : vector<2x8x1xf32>
    %71 = vector.broadcast %70 : vector<2x8x1xf32> to vector<2x8x8xf32>
    %72 = arith.mulf %63, %71 : vector<2x8x8xf32>
    "tpu.trace_start"() <{level = 10 : i32, message = "bqk,bkd->bqd"}> : () -> ()
    %cst_36 = arith.constant dense<0.000000e+00> : vector<2x8x4xf32>
    %73 = tpu.matmul %72, %51, %cst_36 {dimension_numbers = #tpu.dot_dimension_numbers<[2], [1], [1], [2], [0, 0, 0, 1, 1, 2], [0], [0]>} : vector<2x8x8xf32>, vector<2x8x4xf32>, vector<2x8x4xf32> -> vector<2x8x4xf32>
    "tpu.trace_stop"() : () -> ()
    %74 = vector.extract_strided_slice %15 {offsets = [0, 8], sizes = [16, 4], strides = [1, 1]} : vector<16x16xf32> to vector<16x4xf32>
    %75 = vector.shape_cast %74 : vector<16x4xf32> to vector<2x8x4xf32>
    %76 = vector.extract_strided_slice %16 {offsets = [0, 8], sizes = [16, 4], strides = [1, 1]} : vector<16x16xf32> to vector<16x4xf32>
    %77 = vector.shape_cast %76 : vector<16x4xf32> to vector<2x8x4xf32>
    %78 = vector.extract_strided_slice %17 {offsets = [0, 8], sizes = [16, 4], strides = [1, 1]} : vector<16x16xf32> to vector<16x4xf32>
    %79 = vector.shape_cast %78 : vector<16x4xf32> to vector<2x8x4xf32>
    "tpu.trace_start"() <{level = 10 : i32, message = "bqd,bkd->bqk"}> : () -> ()
    %cst_37 = arith.constant dense<0.000000e+00> : vector<2x8x8xf32>
    %80 = tpu.matmul %75, %77, %cst_37 {dimension_numbers = #tpu.dot_dimension_numbers<[2], [2], [1], [1], [0, 0, 0, 1, 1, 1], [0], [0]>} : vector<2x8x4xf32>, vector<2x8x4xf32>, vector<2x8x8xf32> -> vector<2x8x8xf32>
    "tpu.trace_stop"() : () -> ()
    %cst_38 = arith.constant 5.000000e-01 : f32
    %81 = vector.broadcast %cst_38 : f32 to vector<2x8x8xf32>
    %82 = arith.mulf %80, %81 : vector<2x8x8xf32>
    %cst_39 = arith.constant 0.000000e+00 : f32
    %83 = vector.broadcast %cst_39 : f32 to vector<2x8x8xf32>
    %84 = arith.cmpf oeq, %3, %83 : vector<2x8x8xf32>
    %cst_40 = arith.constant -1.000000e+10 : f32
    %85 = vector.broadcast %cst_40 : f32 to vector<2x8x8xf32>
    %86 = arith.select %84, %85, %82 : vector<2x8x8xi1>, vector<2x8x8xf32>
    %cst_41 = arith.constant dense<0xFF800000> : vector<2x8xf32>
    %87 = vector.multi_reduction <maximumf>, %86, %cst_41 [2] : vector<2x8x8xf32> to vector<2x8xf32>
    %88 = vector.shape_cast %87 : vector<2x8xf32> to vector<2x8x1xf32>
    %89 = vector.broadcast %88 : vector<2x8x1xf32> to vector<2x8x8xf32>
    %90 = arith.subf %86, %89 : vector<2x8x8xf32>
    %91 = math.exp %90 : vector<2x8x8xf32>
    %cst_42 = arith.constant dense<0.000000e+00> : vector<2x8xf32>
    %92 = vector.multi_reduction <add>, %91, %cst_42 [2] : vector<2x8x8xf32> to vector<2x8xf32>
    %93 = vector.shape_cast %92 : vector<2x8xf32> to vector<2x8x1xf32>
    %94 = tpu.reciprocal %93 {approx = true} : vector<2x8x1xf32> -> vector<2x8x1xf32>
    %95 = arith.mulf %93, %94 : vector<2x8x1xf32>
    %cst_43 = arith.constant 2.000000e+00 : f32
    %96 = vector.broadcast %cst_43 : f32 to vector<2x8x1xf32>
    %97 = arith.subf %96, %95 : vector<2x8x1xf32>
    %98 = arith.mulf %94, %97 : vector<2x8x1xf32>
    %99 = vector.broadcast %98 : vector<2x8x1xf32> to vector<2x8x8xf32>
    %100 = arith.mulf %91, %99 : vector<2x8x8xf32>
    "tpu.trace_start"() <{level = 10 : i32, message = "bqk,bkd->bqd"}> : () -> ()
    %cst_44 = arith.constant dense<0.000000e+00> : vector<2x8x4xf32>
    %101 = tpu.matmul %100, %79, %cst_44 {dimension_numbers = #tpu.dot_dimension_numbers<[2], [1], [1], [2], [0, 0, 0, 1, 1, 2], [0], [0]>} : vector<2x8x8xf32>, vector<2x8x4xf32>, vector<2x8x4xf32> -> vector<2x8x4xf32>
    "tpu.trace_stop"() : () -> ()
    %102 = vector.extract_strided_slice %15 {offsets = [0, 12], sizes = [16, 4], strides = [1, 1]} : vector<16x16xf32> to vector<16x4xf32>
    %103 = vector.shape_cast %102 : vector<16x4xf32> to vector<2x8x4xf32>
    %104 = vector.extract_strided_slice %16 {offsets = [0, 12], sizes = [16, 4], strides = [1, 1]} : vector<16x16xf32> to vector<16x4xf32>
    %105 = vector.shape_cast %104 : vector<16x4xf32> to vector<2x8x4xf32>
    %106 = vector.extract_strided_slice %17 {offsets = [0, 12], sizes = [16, 4], strides = [1, 1]} : vector<16x16xf32> to vector<16x4xf32>
    %107 = vector.shape_cast %106 : vector<16x4xf32> to vector<2x8x4xf32>
    "tpu.trace_start"() <{level = 10 : i32, message = "bqd,bkd->bqk"}> : () -> ()
    %cst_45 = arith.constant dense<0.000000e+00> : vector<2x8x8xf32>
    %108 = tpu.matmul %103, %105, %cst_45 {dimension_numbers = #tpu.dot_dimension_numbers<[2], [2], [1], [1], [0, 0, 0, 1, 1, 1], [0], [0]>} : vector<2x8x4xf32>, vector<2x8x4xf32>, vector<2x8x8xf32> -> vector<2x8x8xf32>
    "tpu.trace_stop"() : () -> ()
    %cst_46 = arith.constant 5.000000e-01 : f32
    %109 = vector.broadcast %cst_46 : f32 to vector<2x8x8xf32>
    %110 = arith.mulf %108, %109 : vector<2x8x8xf32>
    %cst_47 = arith.constant 0.000000e+00 : f32
    %111 = vector.broadcast %cst_47 : f32 to vector<2x8x8xf32>
    %112 = arith.cmpf oeq, %3, %111 : vector<2x8x8xf32>
    %cst_48 = arith.constant -1.000000e+10 : f32
    %113 = vector.broadcast %cst_48 : f32 to vector<2x8x8xf32>
    %114 = arith.select %112, %113, %110 : vector<2x8x8xi1>, vector<2x8x8xf32>
    %cst_49 = arith.constant dense<0xFF800000> : vector<2x8xf32>
    %115 = vector.multi_reduction <maximumf>, %114, %cst_49 [2] : vector<2x8x8xf32> to vector<2x8xf32>
    %116 = vector.shape_cast %115 : vector<2x8xf32> to vector<2x8x1xf32>
    %117 = vector.broadcast %116 : vector<2x8x1xf32> to vector<2x8x8xf32>
    %118 = arith.subf %114, %117 : vector<2x8x8xf32>
    %119 = math.exp %118 : vector<2x8x8xf32>
    %cst_50 = arith.constant dense<0.000000e+00> : vector<2x8xf32>
    %120 = vector.multi_reduction <add>, %119, %cst_50 [2] : vector<2x8x8xf32> to vector<2x8xf32>
    %121 = vector.shape_cast %120 : vector<2x8xf32> to vector<2x8x1xf32>
    %122 = tpu.reciprocal %121 {approx = true} : vector<2x8x1xf32> -> vector<2x8x1xf32>
    %123 = arith.mulf %121, %122 : vector<2x8x1xf32>
    %cst_51 = arith.constant 2.000000e+00 : f32
    %124 = vector.broadcast %cst_51 : f32 to vector<2x8x1xf32>
    %125 = arith.subf %124, %123 : vector<2x8x1xf32>
    %126 = arith.mulf %122, %125 : vector<2x8x1xf32>
    %127 = vector.broadcast %126 : vector<2x8x1xf32> to vector<2x8x8xf32>
    %128 = arith.mulf %119, %127 : vector<2x8x8xf32>
    "tpu.trace_start"() <{level = 10 : i32, message = "bqk,bkd->bqd"}> : () -> ()
    %cst_52 = arith.constant dense<0.000000e+00> : vector<2x8x4xf32>
    %129 = tpu.matmul %128, %107, %cst_52 {dimension_numbers = #tpu.dot_dimension_numbers<[2], [1], [1], [2], [0, 0, 0, 1, 1, 2], [0], [0]>} : vector<2x8x8xf32>, vector<2x8x4xf32>, vector<2x8x4xf32> -> vector<2x8x4xf32>
    "tpu.trace_stop"() : () -> ()
    %130 = tpu.concatenate %45, %73, %101, %129 in 2 : vector<2x8x4xf32>, vector<2x8x4xf32>, vector<2x8x4xf32>, vector<2x8x4xf32> -> vector<2x8x16xf32>
    %131 = vector.shape_cast %130 : vector<2x8x16xf32> to vector<16x16xf32>
    %cst_53 = arith.constant dense<0.000000e+00> : vector<16x16xf32>
    %132 = tpu.matmul %131, %8, %cst_53 {dimension_numbers = #tpu.dot_dimension_numbers<[1], [0], [0], [1], [0, 0, 1, 1], [], []>} : vector<16x16xf32>, vector<16x16xf32>, vector<16x16xf32> -> vector<16x16xf32>
    %133 = vector.broadcast %9 : vector<1x16xf32> to vector<16x16xf32>
    %134 = arith.addf %132, %133 : vector<16x16xf32>
    %135 = arith.addf %10, %134 : vector<16x16xf32>
    %c0_54 = arith.constant 0 : index
    %c0_55 = arith.constant 0 : index
    %136 = vector.load %arg9[%c0_54, %c0_55] : memref<1x16xf32, #tpu.memory_space<vmem>>, vector<1x16xf32>
    %c0_56 = arith.constant 0 : index
    %c0_57 = arith.constant 0 : index
    %137 = vector.load %arg10[%c0_56, %c0_57] : memref<1x16xf32, #tpu.memory_space<vmem>>, vector<1x16xf32>
    %cst_58 = arith.constant dense<0.000000e+00> : vector<16xf32>
    %138 = vector.multi_reduction <add>, %135, %cst_58 [1] : vector<16x16xf32> to vector<16xf32>
    %139 = vector.shape_cast %138 : vector<16xf32> to vector<16x1xf32>
    %cst_59 = arith.constant 1.600000e+01 : f32
    %140 = vector.broadcast %cst_59 : f32 to vector<16x1xf32>
    %141 = arith.divf %139, %140 : vector<16x1xf32>
    %142 = vector.broadcast %141 : vector<16x1xf32> to vector<16x16xf32>
    %143 = arith.subf %135, %142 : vector<16x16xf32>
    %144 = arith.mulf %143, %143 : vector<16x16xf32>
    %cst_60 = arith.constant dense<0.000000e+00> : vector<16xf32>
    %145 = vector.multi_reduction <add>, %144, %cst_60 [1] : vector<16x16xf32> to vector<16xf32>
    %146 = vector.shape_cast %145 : vector<16xf32> to vector<16x1xf32>
    %cst_61 = arith.constant 1.600000e+01 : f32
    %147 = vector.broadcast %cst_61 : f32 to vector<16x1xf32>
    %148 = arith.divf %146, %147 : vector<16x1xf32>
    %149 = vector.broadcast %141 : vector<16x1xf32> to vector<16x16xf32>
    %150 = arith.subf %135, %149 : vector<16x16xf32>
    %cst_62 = arith.constant 9.99999974E-6 : f32
    %151 = vector.broadcast %cst_62 : f32 to vector<16x1xf32>
    %152 = arith.addf %148, %151 : vector<16x1xf32>
    %153 = math.rsqrt %152 : vector<16x1xf32>
    %154 = vector.broadcast %153 : vector<16x1xf32> to vector<16x16xf32>
    %155 = arith.mulf %150, %154 : vector<16x16xf32>
    %156 = vector.broadcast %136 : vector<1x16xf32> to vector<16x16xf32>
    %157 = arith.mulf %155, %156 : vector<16x16xf32>
    %158 = vector.broadcast %137 : vector<1x16xf32> to vector<16x16xf32>
    %159 = arith.addf %157, %158 : vector<16x16xf32>
    %160 = vector.extract_strided_slice %6 {offsets = [0, 0], sizes = [16, 16], strides = [1, 1]} : vector<16x48xf32> to vector<16x16xf32>
    %cst_63 = arith.constant dense<0.000000e+00> : vector<16x16xf32>
    %161 = tpu.matmul %159, %160, %cst_63 {dimension_numbers = #tpu.dot_dimension_numbers<[1], [0], [0], [1], [0, 0, 1, 1], [], []>} : vector<16x16xf32>, vector<16x16xf32>, vector<16x16xf32> -> vector<16x16xf32>
    %162 = vector.extract_strided_slice %7 {offsets = [0, 0], sizes = [1, 16], strides = [1, 1]} : vector<1x48xf32> to vector<1x16xf32>
    %163 = vector.broadcast %162 : vector<1x16xf32> to vector<16x16xf32>
    %164 = arith.addf %161, %163 : vector<16x16xf32>
    %165 = vector.extract_strided_slice %6 {offsets = [0, 16], sizes = [16, 32], strides = [1, 1]} : vector<16x48xf32> to vector<16x32xf32>
    %cst_64 = arith.constant dense<0.000000e+00> : vector<20x32xf32>
    %166 = tpu.matmul %11, %165, %cst_64 {dimension_numbers = #tpu.dot_dimension_numbers<[1], [0], [0], [1], [0, 0, 1, 1], [], []>} : vector<20x16xf32>, vector<16x32xf32>, vector<20x32xf32> -> vector<20x32xf32>
    %167 = vector.extract_strided_slice %7 {offsets = [0, 16], sizes = [1, 32], strides = [1, 1]} : vector<1x48xf32> to vector<1x32xf32>
    %168 = vector.broadcast %167 : vector<1x32xf32> to vector<20x32xf32>
    %169 = arith.addf %166, %168 : vector<20x32xf32>
    %170 = vector.extract_strided_slice %169 {offsets = [0, 0], sizes = [20, 16], strides = [1, 1]} : vector<20x32xf32> to vector<20x16xf32>
    %171 = vector.extract_strided_slice %169 {offsets = [0, 16], sizes = [20, 16], strides = [1, 1]} : vector<20x32xf32> to vector<20x16xf32>
    %172 = vector.extract_strided_slice %164 {offsets = [0, 0], sizes = [16, 4], strides = [1, 1]} : vector<16x16xf32> to vector<16x4xf32>
    %173 = vector.shape_cast %172 : vector<16x4xf32> to vector<2x8x4xf32>
    %174 = vector.extract_strided_slice %170 {offsets = [0, 0], sizes = [20, 4], strides = [1, 1]} : vector<20x16xf32> to vector<20x4xf32>
    %175 = vector.shape_cast %174 : vector<20x4xf32> to vector<2x10x4xf32>
    %176 = vector.extract_strided_slice %171 {offsets = [0, 0], sizes = [20, 4], strides = [1, 1]} : vector<20x16xf32> to vector<20x4xf32>
    %177 = vector.shape_cast %176 : vector<20x4xf32> to vector<2x10x4xf32>
    "tpu.trace_start"() <{level = 10 : i32, message = "bqd,bkd->bqk"}> : () -> ()
    %cst_65 = arith.constant dense<0.000000e+00> : vector<2x8x10xf32>
    %178 = tpu.matmul %173, %175, %cst_65 {dimension_numbers = #tpu.dot_dimension_numbers<[2], [2], [1], [1], [0, 0, 0, 1, 1, 1], [0], [0]>} : vector<2x8x4xf32>, vector<2x10x4xf32>, vector<2x8x10xf32> -> vector<2x8x10xf32>
    "tpu.trace_stop"() : () -> ()
    %cst_66 = arith.constant 5.000000e-01 : f32
    %179 = vector.broadcast %cst_66 : f32 to vector<2x8x10xf32>
    %180 = arith.mulf %178, %179 : vector<2x8x10xf32>
    %cst_67 = arith.constant 0.000000e+00 : f32
    %181 = vector.broadcast %cst_67 : f32 to vector<2x1x10xf32>
    %182 = arith.cmpf oeq, %5, %181 : vector<2x1x10xf32>
    %cst_68 = arith.constant -1.000000e+10 : f32
    %183 = vector.shape_cast %182 : vector<2x1x10xi1> to vector<2x1x10xi1>
    %184 = vector.broadcast %183 : vector<2x1x10xi1> to vector<2x8x10xi1>
    %185 = vector.broadcast %cst_68 : f32 to vector<2x8x10xf32>
    %186 = arith.select %184, %185, %180 : vector<2x8x10xi1>, vector<2x8x10xf32>
    %cst_69 = arith.constant dense<0xFF800000> : vector<2x8xf32>
    %187 = vector.multi_reduction <maximumf>, %186, %cst_69 [2] : vector<2x8x10xf32> to vector<2x8xf32>
    %188 = vector.shape_cast %187 : vector<2x8xf32> to vector<2x8x1xf32>
    %189 = vector.broadcast %188 : vector<2x8x1xf32> to vector<2x8x10xf32>
    %190 = arith.subf %186, %189 : vector<2x8x10xf32>
    %191 = math.exp %190 : vector<2x8x10xf32>
    %cst_70 = arith.constant dense<0.000000e+00> : vector<2x8xf32>
    %192 = vector.multi_reduction <add>, %191, %cst_70 [2] : vector<2x8x10xf32> to vector<2x8xf32>
    %193 = vector.shape_cast %192 : vector<2x8xf32> to vector<2x8x1xf32>
    %194 = tpu.reciprocal %193 {approx = true} : vector<2x8x1xf32> -> vector<2x8x1xf32>
    %195 = arith.mulf %193, %194 : vector<2x8x1xf32>
    %cst_71 = arith.constant 2.000000e+00 : f32
    %196 = vector.broadcast %cst_71 : f32 to vector<2x8x1xf32>
    %197 = arith.subf %196, %195 : vector<2x8x1xf32>
    %198 = arith.mulf %194, %197 : vector<2x8x1xf32>
    %199 = vector.broadcast %198 : vector<2x8x1xf32> to vector<2x8x10xf32>
    %200 = arith.mulf %191, %199 : vector<2x8x10xf32>
    "tpu.trace_start"() <{level = 10 : i32, message = "bqk,bkd->bqd"}> : () -> ()
    %cst_72 = arith.constant dense<0.000000e+00> : vector<2x8x4xf32>
    %201 = tpu.matmul %200, %177, %cst_72 {dimension_numbers = #tpu.dot_dimension_numbers<[2], [1], [1], [2], [0, 0, 0, 1, 1, 2], [0], [0]>} : vector<2x8x10xf32>, vector<2x10x4xf32>, vector<2x8x4xf32> -> vector<2x8x4xf32>
    "tpu.trace_stop"() : () -> ()
    %202 = vector.extract_strided_slice %164 {offsets = [0, 4], sizes = [16, 4], strides = [1, 1]} : vector<16x16xf32> to vector<16x4xf32>
    %203 = vector.shape_cast %202 : vector<16x4xf32> to vector<2x8x4xf32>
    %204 = vector.extract_strided_slice %170 {offsets = [0, 4], sizes = [20, 4], strides = [1, 1]} : vector<20x16xf32> to vector<20x4xf32>
    %205 = vector.shape_cast %204 : vector<20x4xf32> to vector<2x10x4xf32>
    %206 = vector.extract_strided_slice %171 {offsets = [0, 4], sizes = [20, 4], strides = [1, 1]} : vector<20x16xf32> to vector<20x4xf32>
    %207 = vector.shape_cast %206 : vector<20x4xf32> to vector<2x10x4xf32>
    "tpu.trace_start"() <{level = 10 : i32, message = "bqd,bkd->bqk"}> : () -> ()
    %cst_73 = arith.constant dense<0.000000e+00> : vector<2x8x10xf32>
    %208 = tpu.matmul %203, %205, %cst_73 {dimension_numbers = #tpu.dot_dimension_numbers<[2], [2], [1], [1], [0, 0, 0, 1, 1, 1], [0], [0]>} : vector<2x8x4xf32>, vector<2x10x4xf32>, vector<2x8x10xf32> -> vector<2x8x10xf32>
    "tpu.trace_stop"() : () -> ()
    %cst_74 = arith.constant 5.000000e-01 : f32
    %209 = vector.broadcast %cst_74 : f32 to vector<2x8x10xf32>
    %210 = arith.mulf %208, %209 : vector<2x8x10xf32>
    %cst_75 = arith.constant 0.000000e+00 : f32
    %211 = vector.broadcast %cst_75 : f32 to vector<2x1x10xf32>
    %212 = arith.cmpf oeq, %5, %211 : vector<2x1x10xf32>
    %cst_76 = arith.constant -1.000000e+10 : f32
    %213 = vector.shape_cast %212 : vector<2x1x10xi1> to vector<2x1x10xi1>
    %214 = vector.broadcast %213 : vector<2x1x10xi1> to vector<2x8x10xi1>
    %215 = vector.broadcast %cst_76 : f32 to vector<2x8x10xf32>
    %216 = arith.select %214, %215, %210 : vector<2x8x10xi1>, vector<2x8x10xf32>
    %cst_77 = arith.constant dense<0xFF800000> : vector<2x8xf32>
    %217 = vector.multi_reduction <maximumf>, %216, %cst_77 [2] : vector<2x8x10xf32> to vector<2x8xf32>
    %218 = vector.shape_cast %217 : vector<2x8xf32> to vector<2x8x1xf32>
    %219 = vector.broadcast %218 : vector<2x8x1xf32> to vector<2x8x10xf32>
    %220 = arith.subf %216, %219 : vector<2x8x10xf32>
    %221 = math.exp %220 : vector<2x8x10xf32>
    %cst_78 = arith.constant dense<0.000000e+00> : vector<2x8xf32>
    %222 = vector.multi_reduction <add>, %221, %cst_78 [2] : vector<2x8x10xf32> to vector<2x8xf32>
    %223 = vector.shape_cast %222 : vector<2x8xf32> to vector<2x8x1xf32>
    %224 = tpu.reciprocal %223 {approx = true} : vector<2x8x1xf32> -> vector<2x8x1xf32>
    %225 = arith.mulf %223, %224 : vector<2x8x1xf32>
    %cst_79 = arith.constant 2.000000e+00 : f32
    %226 = vector.broadcast %cst_79 : f32 to vector<2x8x1xf32>
    %227 = arith.subf %226, %225 : vector<2x8x1xf32>
    %228 = arith.mulf %224, %227 : vector<2x8x1xf32>
    %229 = vector.broadcast %228 : vector<2x8x1xf32> to vector<2x8x10xf32>
    %230 = arith.mulf %221, %229 : vector<2x8x10xf32>
    "tpu.trace_start"() <{level = 10 : i32, message = "bqk,bkd->bqd"}> : () -> ()
    %cst_80 = arith.constant dense<0.000000e+00> : vector<2x8x4xf32>
    %231 = tpu.matmul %230, %207, %cst_80 {dimension_numbers = #tpu.dot_dimension_numbers<[2], [1], [1], [2], [0, 0, 0, 1, 1, 2], [0], [0]>} : vector<2x8x10xf32>, vector<2x10x4xf32>, vector<2x8x4xf32> -> vector<2x8x4xf32>
    "tpu.trace_stop"() : () -> ()
    %232 = vector.extract_strided_slice %164 {offsets = [0, 8], sizes = [16, 4], strides = [1, 1]} : vector<16x16xf32> to vector<16x4xf32>
    %233 = vector.shape_cast %232 : vector<16x4xf32> to vector<2x8x4xf32>
    %234 = vector.extract_strided_slice %170 {offsets = [0, 8], sizes = [20, 4], strides = [1, 1]} : vector<20x16xf32> to vector<20x4xf32>
    %235 = vector.shape_cast %234 : vector<20x4xf32> to vector<2x10x4xf32>
    %236 = vector.extract_strided_slice %171 {offsets = [0, 8], sizes = [20, 4], strides = [1, 1]} : vector<20x16xf32> to vector<20x4xf32>
    %237 = vector.shape_cast %236 : vector<20x4xf32> to vector<2x10x4xf32>
    "tpu.trace_start"() <{level = 10 : i32, message = "bqd,bkd->bqk"}> : () -> ()
    %cst_81 = arith.constant dense<0.000000e+00> : vector<2x8x10xf32>
    %238 = tpu.matmul %233, %235, %cst_81 {dimension_numbers = #tpu.dot_dimension_numbers<[2], [2], [1], [1], [0, 0, 0, 1, 1, 1], [0], [0]>} : vector<2x8x4xf32>, vector<2x10x4xf32>, vector<2x8x10xf32> -> vector<2x8x10xf32>
    "tpu.trace_stop"() : () -> ()
    %cst_82 = arith.constant 5.000000e-01 : f32
    %239 = vector.broadcast %cst_82 : f32 to vector<2x8x10xf32>
    %240 = arith.mulf %238, %239 : vector<2x8x10xf32>
    %cst_83 = arith.constant 0.000000e+00 : f32
    %241 = vector.broadcast %cst_83 : f32 to vector<2x1x10xf32>
    %242 = arith.cmpf oeq, %5, %241 : vector<2x1x10xf32>
    %cst_84 = arith.constant -1.000000e+10 : f32
    %243 = vector.shape_cast %242 : vector<2x1x10xi1> to vector<2x1x10xi1>
    %244 = vector.broadcast %243 : vector<2x1x10xi1> to vector<2x8x10xi1>
    %245 = vector.broadcast %cst_84 : f32 to vector<2x8x10xf32>
    %246 = arith.select %244, %245, %240 : vector<2x8x10xi1>, vector<2x8x10xf32>
    %cst_85 = arith.constant dense<0xFF800000> : vector<2x8xf32>
    %247 = vector.multi_reduction <maximumf>, %246, %cst_85 [2] : vector<2x8x10xf32> to vector<2x8xf32>
    %248 = vector.shape_cast %247 : vector<2x8xf32> to vector<2x8x1xf32>
    %249 = vector.broadcast %248 : vector<2x8x1xf32> to vector<2x8x10xf32>
    %250 = arith.subf %246, %249 : vector<2x8x10xf32>
    %251 = math.exp %250 : vector<2x8x10xf32>
    %cst_86 = arith.constant dense<0.000000e+00> : vector<2x8xf32>
    %252 = vector.multi_reduction <add>, %251, %cst_86 [2] : vector<2x8x10xf32> to vector<2x8xf32>
    %253 = vector.shape_cast %252 : vector<2x8xf32> to vector<2x8x1xf32>
    %254 = tpu.reciprocal %253 {approx = true} : vector<2x8x1xf32> -> vector<2x8x1xf32>
    %255 = arith.mulf %253, %254 : vector<2x8x1xf32>
    %cst_87 = arith.constant 2.000000e+00 : f32
    %256 = vector.broadcast %cst_87 : f32 to vector<2x8x1xf32>
    %257 = arith.subf %256, %255 : vector<2x8x1xf32>
    %258 = arith.mulf %254, %257 : vector<2x8x1xf32>
    %259 = vector.broadcast %258 : vector<2x8x1xf32> to vector<2x8x10xf32>
    %260 = arith.mulf %251, %259 : vector<2x8x10xf32>
    "tpu.trace_start"() <{level = 10 : i32, message = "bqk,bkd->bqd"}> : () -> ()
    %cst_88 = arith.constant dense<0.000000e+00> : vector<2x8x4xf32>
    %261 = tpu.matmul %260, %237, %cst_88 {dimension_numbers = #tpu.dot_dimension_numbers<[2], [1], [1], [2], [0, 0, 0, 1, 1, 2], [0], [0]>} : vector<2x8x10xf32>, vector<2x10x4xf32>, vector<2x8x4xf32> -> vector<2x8x4xf32>
    "tpu.trace_stop"() : () -> ()
    %262 = vector.extract_strided_slice %164 {offsets = [0, 12], sizes = [16, 4], strides = [1, 1]} : vector<16x16xf32> to vector<16x4xf32>
    %263 = vector.shape_cast %262 : vector<16x4xf32> to vector<2x8x4xf32>
    %264 = vector.extract_strided_slice %170 {offsets = [0, 12], sizes = [20, 4], strides = [1, 1]} : vector<20x16xf32> to vector<20x4xf32>
    %265 = vector.shape_cast %264 : vector<20x4xf32> to vector<2x10x4xf32>
    %266 = vector.extract_strided_slice %171 {offsets = [0, 12], sizes = [20, 4], strides = [1, 1]} : vector<20x16xf32> to vector<20x4xf32>
    %267 = vector.shape_cast %266 : vector<20x4xf32> to vector<2x10x4xf32>
    "tpu.trace_start"() <{level = 10 : i32, message = "bqd,bkd->bqk"}> : () -> ()
    %cst_89 = arith.constant dense<0.000000e+00> : vector<2x8x10xf32>
    %268 = tpu.matmul %263, %265, %cst_89 {dimension_numbers = #tpu.dot_dimension_numbers<[2], [2], [1], [1], [0, 0, 0, 1, 1, 1], [0], [0]>} : vector<2x8x4xf32>, vector<2x10x4xf32>, vector<2x8x10xf32> -> vector<2x8x10xf32>
    "tpu.trace_stop"() : () -> ()
    %cst_90 = arith.constant 5.000000e-01 : f32
    %269 = vector.broadcast %cst_90 : f32 to vector<2x8x10xf32>
    %270 = arith.mulf %268, %269 : vector<2x8x10xf32>
    %cst_91 = arith.constant 0.000000e+00 : f32
    %271 = vector.broadcast %cst_91 : f32 to vector<2x1x10xf32>
    %272 = arith.cmpf oeq, %5, %271 : vector<2x1x10xf32>
    %cst_92 = arith.constant -1.000000e+10 : f32
    %273 = vector.shape_cast %272 : vector<2x1x10xi1> to vector<2x1x10xi1>
    %274 = vector.broadcast %273 : vector<2x1x10xi1> to vector<2x8x10xi1>
    %275 = vector.broadcast %cst_92 : f32 to vector<2x8x10xf32>
    %276 = arith.select %274, %275, %270 : vector<2x8x10xi1>, vector<2x8x10xf32>
    %cst_93 = arith.constant dense<0xFF800000> : vector<2x8xf32>
    %277 = vector.multi_reduction <maximumf>, %276, %cst_93 [2] : vector<2x8x10xf32> to vector<2x8xf32>
    %278 = vector.shape_cast %277 : vector<2x8xf32> to vector<2x8x1xf32>
    %279 = vector.broadcast %278 : vector<2x8x1xf32> to vector<2x8x10xf32>
    %280 = arith.subf %276, %279 : vector<2x8x10xf32>
    %281 = math.exp %280 : vector<2x8x10xf32>
    %cst_94 = arith.constant dense<0.000000e+00> : vector<2x8xf32>
    %282 = vector.multi_reduction <add>, %281, %cst_94 [2] : vector<2x8x10xf32> to vector<2x8xf32>
    %283 = vector.shape_cast %282 : vector<2x8xf32> to vector<2x8x1xf32>
    %284 = tpu.reciprocal %283 {approx = true} : vector<2x8x1xf32> -> vector<2x8x1xf32>
    %285 = arith.mulf %283, %284 : vector<2x8x1xf32>
    %cst_95 = arith.constant 2.000000e+00 : f32
    %286 = vector.broadcast %cst_95 : f32 to vector<2x8x1xf32>
    %287 = arith.subf %286, %285 : vector<2x8x1xf32>
    %288 = arith.mulf %284, %287 : vector<2x8x1xf32>
    %289 = vector.broadcast %288 : vector<2x8x1xf32> to vector<2x8x10xf32>
    %290 = arith.mulf %281, %289 : vector<2x8x10xf32>
    "tpu.trace_start"() <{level = 10 : i32, message = "bqk,bkd->bqd"}> : () -> ()
    %cst_96 = arith.constant dense<0.000000e+00> : vector<2x8x4xf32>
    %291 = tpu.matmul %290, %267, %cst_96 {dimension_numbers = #tpu.dot_dimension_numbers<[2], [1], [1], [2], [0, 0, 0, 1, 1, 2], [0], [0]>} : vector<2x8x10xf32>, vector<2x10x4xf32>, vector<2x8x4xf32> -> vector<2x8x4xf32>
    "tpu.trace_stop"() : () -> ()
    %292 = tpu.concatenate %201, %231, %261, %291 in 2 : vector<2x8x4xf32>, vector<2x8x4xf32>, vector<2x8x4xf32>, vector<2x8x4xf32> -> vector<2x8x16xf32>
    %293 = vector.shape_cast %292 : vector<2x8x16xf32> to vector<16x16xf32>
    %cst_97 = arith.constant dense<0.000000e+00> : vector<16x16xf32>
    %294 = tpu.matmul %293, %8, %cst_97 {dimension_numbers = #tpu.dot_dimension_numbers<[1], [0], [0], [1], [0, 0, 1, 1], [], []>} : vector<16x16xf32>, vector<16x16xf32>, vector<16x16xf32> -> vector<16x16xf32>
    %295 = vector.broadcast %9 : vector<1x16xf32> to vector<16x16xf32>
    %296 = arith.addf %294, %295 : vector<16x16xf32>
    %297 = vector.shape_cast %200 : vector<2x8x10xf32> to vector<2x1x8x10xf32>
    %298 = vector.shape_cast %230 : vector<2x8x10xf32> to vector<2x1x8x10xf32>
    %299 = vector.shape_cast %260 : vector<2x8x10xf32> to vector<2x1x8x10xf32>
    %300 = vector.shape_cast %290 : vector<2x8x10xf32> to vector<2x1x8x10xf32>
    %301 = tpu.concatenate %297, %298, %299, %300 in 1 : vector<2x1x8x10xf32>, vector<2x1x8x10xf32>, vector<2x1x8x10xf32>, vector<2x1x8x10xf32> -> vector<2x4x8x10xf32>
    %302 = arith.addf %159, %296 : vector<16x16xf32>
    %c0_98 = arith.constant 0 : index
    %c0_99 = arith.constant 0 : index
    %303 = vector.load %arg11[%c0_98, %c0_99] : memref<1x16xf32, #tpu.memory_space<vmem>>, vector<1x16xf32>
    %c0_100 = arith.constant 0 : index
    %c0_101 = arith.constant 0 : index
    %304 = vector.load %arg12[%c0_100, %c0_101] : memref<1x16xf32, #tpu.memory_space<vmem>>, vector<1x16xf32>
    %cst_102 = arith.constant dense<0.000000e+00> : vector<16xf32>
    %305 = vector.multi_reduction <add>, %302, %cst_102 [1] : vector<16x16xf32> to vector<16xf32>
    %306 = vector.shape_cast %305 : vector<16xf32> to vector<16x1xf32>
    %cst_103 = arith.constant 1.600000e+01 : f32
    %307 = vector.broadcast %cst_103 : f32 to vector<16x1xf32>
    %308 = arith.divf %306, %307 : vector<16x1xf32>
    %309 = vector.broadcast %308 : vector<16x1xf32> to vector<16x16xf32>
    %310 = arith.subf %302, %309 : vector<16x16xf32>
    %311 = arith.mulf %310, %310 : vector<16x16xf32>
    %cst_104 = arith.constant dense<0.000000e+00> : vector<16xf32>
    %312 = vector.multi_reduction <add>, %311, %cst_104 [1] : vector<16x16xf32> to vector<16xf32>
    %313 = vector.shape_cast %312 : vector<16xf32> to vector<16x1xf32>
    %cst_105 = arith.constant 1.600000e+01 : f32
    %314 = vector.broadcast %cst_105 : f32 to vector<16x1xf32>
    %315 = arith.divf %313, %314 : vector<16x1xf32>
    %316 = vector.broadcast %308 : vector<16x1xf32> to vector<16x16xf32>
    %317 = arith.subf %302, %316 : vector<16x16xf32>
    %cst_106 = arith.constant 9.99999974E-6 : f32
    %318 = vector.broadcast %cst_106 : f32 to vector<16x1xf32>
    %319 = arith.addf %315, %318 : vector<16x1xf32>
    %320 = math.rsqrt %319 : vector<16x1xf32>
    %321 = vector.broadcast %320 : vector<16x1xf32> to vector<16x16xf32>
    %322 = arith.mulf %317, %321 : vector<16x16xf32>
    %323 = vector.broadcast %303 : vector<1x16xf32> to vector<16x16xf32>
    %324 = arith.mulf %322, %323 : vector<16x16xf32>
    %325 = vector.broadcast %304 : vector<1x16xf32> to vector<16x16xf32>
    %326 = arith.addf %324, %325 : vector<16x16xf32>
    %c0_107 = arith.constant 0 : index
    %c0_108 = arith.constant 0 : index
    %327 = vector.load %arg13[%c0_107, %c0_108] : memref<16x32xf32, #tpu.memory_space<vmem>>, vector<16x32xf32>
    %cst_109 = arith.constant dense<0.000000e+00> : vector<16x32xf32>
    %328 = tpu.matmul %326, %327, %cst_109 {dimension_numbers = #tpu.dot_dimension_numbers<[1], [0], [0], [1], [0, 0, 1, 1], [], []>} : vector<16x16xf32>, vector<16x32xf32>, vector<16x32xf32> -> vector<16x32xf32>
    %c0_110 = arith.constant 0 : index
    %c0_111 = arith.constant 0 : index
    %329 = vector.load %arg14[%c0_110, %c0_111] : memref<1x32xf32, #tpu.memory_space<vmem>>, vector<1x32xf32>
    %330 = vector.broadcast %329 : vector<1x32xf32> to vector<16x32xf32>
    %331 = arith.addf %328, %330 : vector<16x32xf32>
    %cst_112 = arith.constant 0.000000e+00 : f32
    %332 = vector.broadcast %cst_112 : f32 to vector<16x32xf32>
    %333 = arith.maximumf %331, %332 : vector<16x32xf32>
    %c0_113 = arith.constant 0 : index
    %c0_114 = arith.constant 0 : index
    %334 = vector.load %arg15[%c0_113, %c0_114] : memref<32x16xf32, #tpu.memory_space<vmem>>, vector<32x16xf32>
    %cst_115 = arith.constant dense<0.000000e+00> : vector<16x16xf32>
    %335 = tpu.matmul %333, %334, %cst_115 {dimension_numbers = #tpu.dot_dimension_numbers<[1], [0], [0], [1], [0, 0, 1, 1], [], []>} : vector<16x32xf32>, vector<32x16xf32>, vector<16x16xf32> -> vector<16x16xf32>
    %c0_116 = arith.constant 0 : index
    %c0_117 = arith.constant 0 : index
    %336 = vector.load %arg16[%c0_116, %c0_117] : memref<1x16xf32, #tpu.memory_space<vmem>>, vector<1x16xf32>
    %337 = vector.broadcast %336 : vector<1x16xf32> to vector<16x16xf32>
    %338 = arith.addf %335, %337 : vector<16x16xf32>
    %339 = arith.addf %326, %338 : vector<16x16xf32>
    %c0_118 = arith.constant 0 : index
    %c0_119 = arith.constant 0 : index
    %340 = vector.load %arg17[%c0_118, %c0_119] : memref<1x16xf32, #tpu.memory_space<vmem>>, vector<1x16xf32>
    %c0_120 = arith.constant 0 : index
    %c0_121 = arith.constant 0 : index
    %341 = vector.load %arg18[%c0_120, %c0_121] : memref<1x16xf32, #tpu.memory_space<vmem>>, vector<1x16xf32>
    %cst_122 = arith.constant dense<0.000000e+00> : vector<16xf32>
    %342 = vector.multi_reduction <add>, %339, %cst_122 [1] : vector<16x16xf32> to vector<16xf32>
    %343 = vector.shape_cast %342 : vector<16xf32> to vector<16x1xf32>
    %cst_123 = arith.constant 1.600000e+01 : f32
    %344 = vector.broadcast %cst_123 : f32 to vector<16x1xf32>
    %345 = arith.divf %343, %344 : vector<16x1xf32>
    %346 = vector.broadcast %345 : vector<16x1xf32> to vector<16x16xf32>
    %347 = arith.subf %339, %346 : vector<16x16xf32>
    %348 = arith.mulf %347, %347 : vector<16x16xf32>
    %cst_124 = arith.constant dense<0.000000e+00> : vector<16xf32>
    %349 = vector.multi_reduction <add>, %348, %cst_124 [1] : vector<16x16xf32> to vector<16xf32>
    %350 = vector.shape_cast %349 : vector<16xf32> to vector<16x1xf32>
    %cst_125 = arith.constant 1.600000e+01 : f32
    %351 = vector.broadcast %cst_125 : f32 to vector<16x1xf32>
    %352 = arith.divf %350, %351 : vector<16x1xf32>
    %353 = vector.broadcast %345 : vector<16x1xf32> to vector<16x16xf32>
    %354 = arith.subf %339, %353 : vector<16x16xf32>
    %cst_126 = arith.constant 9.99999974E-6 : f32
    %355 = vector.broadcast %cst_126 : f32 to vector<16x1xf32>
    %356 = arith.addf %352, %355 : vector<16x1xf32>
    %357 = math.rsqrt %356 : vector<16x1xf32>
    %358 = vector.broadcast %357 : vector<16x1xf32> to vector<16x16xf32>
    %359 = arith.mulf %354, %358 : vector<16x16xf32>
    %360 = vector.broadcast %340 : vector<1x16xf32> to vector<16x16xf32>
    %361 = arith.mulf %359, %360 : vector<16x16xf32>
    %362 = vector.broadcast %341 : vector<1x16xf32> to vector<16x16xf32>
    %363 = arith.addf %361, %362 : vector<16x16xf32>
    %364 = vector.shape_cast %363 : vector<16x16xf32> to vector<2x8x16xf32>
    %c0_127 = arith.constant 0 : index
    %c0_128 = arith.constant 0 : index
    %c0_129 = arith.constant 0 : index
    %365 = vector.load %arg19[%c0_127, %c0_128, %c0_129] : memref<2x8x16xf32, #tpu.memory_space<vmem>>, vector<2x8x16xf32>
    tpu.vector_store %arg19[%c0_127, %c0_128, %c0_129], %364 {strides = array<i32>} : memref<2x8x16xf32, #tpu.memory_space<vmem>>, vector<2x8x16xf32>,
    %c0_130 = arith.constant 0 : index
    %c0_131 = arith.constant 0 : index
    %c0_132 = arith.constant 0 : index
    %c0_133 = arith.constant 0 : index
    %366 = vector.load %arg20[%c0_130, %c0_131, %c0_132, %c0_133] : memref<2x4x8x10xf32, #tpu.memory_space<vmem>>, vector<2x4x8x10xf32>
    tpu.vector_store %arg20[%c0_130, %c0_131, %c0_132, %c0_133], %301 {strides = array<i32>} : memref<2x4x8x10xf32, #tpu.memory_space<vmem>>, vector<2x4x8x10xf32>,
    return
  }
  func.func @transform_0(%arg0: i32) -> (i32, i32, i32) {
    %c0_i32 = arith.constant 0 : i32
    %c0_i32_0 = arith.constant 0 : i32
    %c0_i32_1 = arith.constant 0 : i32
    return %arg0, %c0_i32, %c0_i32_0 : i32, i32, i32
  }
  func.func @transform_1(%arg0: i32) -> (i32, i32, i32) {
    %c0_i32 = arith.constant 0 : i32
    %c0_i32_0 = arith.constant 0 : i32
    %c0_i32_1 = arith.constant 0 : i32
    return %arg0, %c0_i32, %c0_i32_0 : i32, i32, i32
  }
  func.func @transform_2(%arg0: i32) -> (i32, i32, i32, i32) {
    %c0_i32 = arith.constant 0 : i32
    %c0_i32_0 = arith.constant 0 : i32
    %c0_i32_1 = arith.constant 0 : i32
    %c0_i32_2 = arith.constant 0 : i32
    return %arg0, %c0_i32, %c0_i32_0, %c0_i32_1 : i32, i32, i32, i32
  }
  func.func @transform_3(%arg0: i32) -> (i32, i32, i32, i32) {
    %c0_i32 = arith.constant 0 : i32
    %c0_i32_0 = arith.constant 0 : i32
    %c0_i32_1 = arith.constant 0 : i32
    %c0_i32_2 = arith.constant 0 : i32
    return %arg0, %c0_i32, %c0_i32_0, %c0_i32_1 : i32, i32, i32, i32
  }
  func.func @transform_4(%arg0: i32) -> (i32, i32) {
    %c0_i32 = arith.constant 0 : i32
    %c0_i32_0 = arith.constant 0 : i32
    %c0_i32_1 = arith.constant 0 : i32
    return %c0_i32, %c0_i32_0 : i32, i32
  }
  func.func @transform_5(%arg0: i32) -> (i32, i32) {
    %c0_i32 = arith.constant 0 : i32
    %c0_i32_0 = arith.constant 0 : i32
    %c0_i32_1 = arith.constant 0 : i32
    return %c0_i32, %c0_i32_0 : i32, i32
  }
  func.func @transform_6(%arg0: i32) -> (i32, i32) {
    %c0_i32 = arith.constant 0 : i32
    %c0_i32_0 = arith.constant 0 : i32
    %c0_i32_1 = arith.constant 0 : i32
    return %c0_i32, %c0_i32_0 : i32, i32
  }
  func.func @transform_7(%arg0: i32) -> (i32, i32) {
    %c0_i32 = arith.constant 0 : i32
    %c0_i32_0 = arith.constant 0 : i32
    %c0_i32_1 = arith.constant 0 : i32
    return %c0_i32, %c0_i32_0 : i32, i32
  }
  func.func @transform_8(%arg0: i32) -> (i32, i32) {
    %c0_i32 = arith.constant 0 : i32
    %c0_i32_0 = arith.constant 0 : i32
    %c0_i32_1 = arith.constant 0 : i32
    return %c0_i32, %c0_i32_0 : i32, i32
  }
  func.func @transform_9(%arg0: i32) -> (i32, i32) {
    %c0_i32 = arith.constant 0 : i32
    %c0_i32_0 = arith.constant 0 : i32
    %c0_i32_1 = arith.constant 0 : i32
    return %c0_i32, %c0_i32_0 : i32, i32
  }
  func.func @transform_10(%arg0: i32) -> (i32, i32) {
    %c0_i32 = arith.constant 0 : i32
    %c0_i32_0 = arith.constant 0 : i32
    %c0_i32_1 = arith.constant 0 : i32
    return %c0_i32, %c0_i32_0 : i32, i32
  }
  func.func @transform_11(%arg0: i32) -> (i32, i32) {
    %c0_i32 = arith.constant 0 : i32
    %c0_i32_0 = arith.constant 0 : i32
    %c0_i32_1 = arith.constant 0 : i32
    return %c0_i32, %c0_i32_0 : i32, i32
  }
  func.func @transform_12(%arg0: i32) -> (i32, i32) {
    %c0_i32 = arith.constant 0 : i32
    %c0_i32_0 = arith.constant 0 : i32
    %c0_i32_1 = arith.constant 0 : i32
    return %c0_i32, %c0_i32_0 : i32, i32
  }
  func.func @transform_13(%arg0: i32) -> (i32, i32) {
    %c0_i32 = arith.constant 0 : i32
    %c0_i32_0 = arith.constant 0 : i32
    %c0_i32_1 = arith.constant 0 : i32
    return %c0_i32, %c0_i32_0 : i32, i32
  }
  func.func @transform_14(%arg0: i32) -> (i32, i32) {
    %c0_i32 = arith.constant 0 : i32
    %c0_i32_0 = arith.constant 0 : i32
    %c0_i32_1 = arith.constant 0 : i32
    return %c0_i32, %c0_i32_0 : i32, i32
  }
  func.func @transform_15(%arg0: i32) -> (i32, i32) {
    %c0_i32 = arith.constant 0 : i32
    %c0_i32_0 = arith.constant 0 : i32
    %c0_i32_1 = arith.constant 0 : i32
    return %c0_i32, %c0_i32_0 : i32, i32
  }
  func.func @transform_16(%arg0: i32) -> (i32, i32) {
    %c0_i32 = arith.constant 0 : i32
    %c0_i32_0 = arith.constant 0 : i32
    %c0_i32_1 = arith.constant 0 : i32
    return %c0_i32, %c0_i32_0 : i32, i32
  }
  func.func @transform_17(%arg0: i32) -> (i32, i32) {
    %c0_i32 = arith.constant 0 : i32
    %c0_i32_0 = arith.constant 0 : i32
    %c0_i32_1 = arith.constant 0 : i32
    return %c0_i32, %c0_i32_0 : i32, i32
  }
  func.func @transform_18(%arg0: i32) -> (i32, i32, i32) {
    %c0_i32 = arith.constant 0 : i32
    %c0_i32_0 = arith.constant 0 : i32
    %c0_i32_1 = arith.constant 0 : i32
    return %arg0, %c0_i32, %c0_i32_0 : i32, i32, i32
  }
  func.func @transform_19(%arg0: i32) -> (i32, i32, i32, i32) {
    %c0_i32 = arith.constant 0 : i32
    %c0_i32_0 = arith.constant 0 : i32
    %c0_i32_1 = arith.constant 0 : i32
    %c0_i32_2 = arith.constant 0 : i32
    return %arg0, %c0_i32, %c0_i32_0, %c0_i32_1 : i32, i32, i32, i32
  }
}

</mosaic_0001>

<llo_original>
// kernel: tpu_custom_call.1
$region0: #{tpu_custom_call.1}
  #allocation0 [shape = 'u32[]', space=smem, size = 0x4, offset = 0x4, fixed_abs, tag = 'smem constant byte address 0x4 - core index']
  #allocation1 [shape = 'u32[144,128]{1,0:T(1,128)}', space=vmem, size = 0x12000, scoped, tag = 'internal scratch']
  %s0 = inlined_call_operand.vmem [shape: f32[2,8,16], index: 0, kind: input, shape index: {}]
  %s1 = inlined_call_operand.vmem [shape: f32[2,10,16], index: 1, kind: input, shape index: {}]
  %s2 = inlined_call_operand.vmem [shape: f32[2,1,8,8], index: 2, kind: input, shape index: {}]
  %s3 = inlined_call_operand.vmem [shape: f32[2,1,1,10], index: 3, kind: input, shape index: {}]
  %s4 = inlined_call_operand.vmem [shape: f32[16,48], index: 4, kind: input, shape index: {}]
  %s5 = inlined_call_operand.vmem [shape: f32[1,48], index: 5, kind: input, shape index: {}]
  %s6 = inlined_call_operand.vmem [shape: f32[16,16], index: 6, kind: input, shape index: {}]
  %s7 = inlined_call_operand.vmem [shape: f32[1,16], index: 7, kind: input, shape index: {}]
  %s8 = inlined_call_operand.vmem [shape: f32[1,16], index: 8, kind: input, shape index: {}]
  %s9 = inlined_call_operand.vmem [shape: f32[1,16], index: 9, kind: input, shape index: {}]
  %s10 = inlined_call_operand.vmem [shape: f32[1,16], index: 10, kind: input, shape index: {}]
  %s11 = inlined_call_operand.vmem [shape: f32[1,16], index: 11, kind: input, shape index: {}]
  %s12 = inlined_call_operand.vmem [shape: f32[16,32], index: 12, kind: input, shape index: {}]
  %s13 = inlined_call_operand.vmem [shape: f32[1,32], index: 13, kind: input, shape index: {}]
  %s14 = inlined_call_operand.vmem [shape: f32[32,16], index: 14, kind: input, shape index: {}]
  %s15 = inlined_call_operand.vmem [shape: f32[1,16], index: 15, kind: input, shape index: {}]
  %s16 = inlined_call_operand.vmem [shape: f32[1,16], index: 16, kind: input, shape index: {}]
  %s17 = inlined_call_operand.vmem [shape: f32[1,16], index: 17, kind: input, shape index: {}]
  %s18 = inlined_call_operand.hbm [shape: f32[2,8,16], index: 18, kind: output, shape index: {0}]
  %s19 = inlined_call_operand.hbm [shape: f32[2,4,8,10], index: 19, kind: output, shape index: {1}]
  %20 = xla_tuple %s18, %s19
  %s21 = sld [smem:[#allocation0]]
  $region90: #{tpu_custom_call.1} parent=0
    _
  %s23 = ssub.s32 1, %s21
  %s24 = scalar_select 0, %s23, %s21
  $region1: #{tpu_custom_call.1} parent=0
    #allocation2 [shape = 'u8[8192]{0}', space=vmem, size = 0x2000, scoped, tag = 'output window, operand 0, single buffered']
    #allocation3 [shape = 's32[1]{0}', space=sflag, size = 0x4, scoped, tag = 'scoped memory for tpu_custom_call.1']
    #allocation4 [shape = 'u8[32768]{0}', space=vmem, size = 0x8000, scoped, tag = 'output window, operand 1, single buffered']
    #allocation5 [shape = 's32[1]{0}', space=sflag, size = 0x4, scoped, tag = 'scoped memory for tpu_custom_call.1']
    %25 = vsyncpa [#allocation3], 0
    %26 = vsyncpa [#allocation5], 0
    // Predicated region
    $region2: #{tpu_custom_call.1} parent=1 // pred_check
      _
    $region3: #{tpu_custom_call.1} parent=1 // pred_check_branch
      %28 = sbr.rel (0) target = $region5
    $region4: #{tpu_custom_call.1} parent=1 // pred_region
      _
    $region5: #{tpu_custom_call.1} parent=1 // pred_fallthru
      _
    // Predicated region
    $region6: #{tpu_custom_call.1} parent=1 // pred_check
      _
    $region7: #{tpu_custom_call.1} parent=1 // pred_check_branch
      %30 = sbr.rel (0) target = $region9
    $region8: #{tpu_custom_call.1} parent=1 // pred_region
      _
    $region9: #{tpu_custom_call.1} parent=1 // pred_fallthru
      _
    // Predicated region
    $region10: #{tpu_custom_call.1} parent=1 // pred_check
      _
    $region11: #{tpu_custom_call.1} parent=1 // pred_check_branch
      %32 = sbr.rel (0) target = $region13
    $region12: #{tpu_custom_call.1} parent=1 // pred_region
      _
    $region13: #{tpu_custom_call.1} parent=1 // pred_fallthru
      _
    // Predicated region
    $region14: #{tpu_custom_call.1} parent=1 // pred_check
      _
    $region15: #{tpu_custom_call.1} parent=1 // pred_check_branch
      %34 = sbr.rel (0) target = $region17
    $region16: #{tpu_custom_call.1} parent=1 // pred_region
      _
    $region17: #{tpu_custom_call.1} parent=1 // pred_fallthru
      _
    // Predicated region
    $region18: #{tpu_custom_call.1} parent=1 // pred_check
      _
    $region19: #{tpu_custom_call.1} parent=1 // pred_check_branch
      %36 = sbr.rel (0) target = $region21
    $region20: #{tpu_custom_call.1} parent=1 // pred_region
      _
    $region21: #{tpu_custom_call.1} parent=1 // pred_fallthru
      _
    // Predicated region
    $region22: #{tpu_custom_call.1} parent=1 // pred_check
      _
    $region23: #{tpu_custom_call.1} parent=1 // pred_check_branch
      %38 = sbr.rel (0) target = $region25
    $region24: #{tpu_custom_call.1} parent=1 // pred_region
      _
    $region25: #{tpu_custom_call.1} parent=1 // pred_fallthru
      _
    // Predicated region
    $region26: #{tpu_custom_call.1} parent=1 // pred_check
      _
    $region27: #{tpu_custom_call.1} parent=1 // pred_check_branch
      %40 = sbr.rel (0) target = $region29
    $region28: #{tpu_custom_call.1} parent=1 // pred_region
      _
    $region29: #{tpu_custom_call.1} parent=1 // pred_fallthru
      _
    // Predicated region
    $region30: #{tpu_custom_call.1} parent=1 // pred_check
      _
    $region31: #{tpu_custom_call.1} parent=1 // pred_check_branch
      %42 = sbr.rel (0) target = $region33
    $region32: #{tpu_custom_call.1} parent=1 // pred_region
      _
    $region33: #{tpu_custom_call.1} parent=1 // pred_fallthru
      _
    // Predicated region
    $region34: #{tpu_custom_call.1} parent=1 // pred_check
      _
    $region35: #{tpu_custom_call.1} parent=1 // pred_check_branch
      %44 = sbr.rel (0) target = $region37
    $region36: #{tpu_custom_call.1} parent=1 // pred_region
      _
    $region37: #{tpu_custom_call.1} parent=1 // pred_fallthru
      _
    // Predicated region
    $region38: #{tpu_custom_call.1} parent=1 // pred_check
      _
    $region39: #{tpu_custom_call.1} parent=1 // pred_check_branch
      %46 = sbr.rel (0) target = $region41
    $region40: #{tpu_custom_call.1} parent=1 // pred_region
      _
    $region41: #{tpu_custom_call.1} parent=1 // pred_fallthru
      _
    // Predicated region
    $region42: #{tpu_custom_call.1} parent=1 // pred_check
      _
    $region43: #{tpu_custom_call.1} parent=1 // pred_check_branch
      %48 = sbr.rel (0) target = $region45
    $region44: #{tpu_custom_call.1} parent=1 // pred_region
      _
    $region45: #{tpu_custom_call.1} parent=1 // pred_fallthru
      _
    // Predicated region
    $region46: #{tpu_custom_call.1} parent=1 // pred_check
      _
    $region47: #{tpu_custom_call.1} parent=1 // pred_check_branch
      %50 = sbr.rel (0) target = $region49
    $region48: #{tpu_custom_call.1} parent=1 // pred_region
      _
    $region49: #{tpu_custom_call.1} parent=1 // pred_fallthru
      _
    // Predicated region
    $region50: #{tpu_custom_call.1} parent=1 // pred_check
      _
    $region51: #{tpu_custom_call.1} parent=1 // pred_check_branch
      %52 = sbr.rel (0) target = $region53
    $region52: #{tpu_custom_call.1} parent=1 // pred_region
      _
    $region53: #{tpu_custom_call.1} parent=1 // pred_fallthru
      _
    // Predicated region
    $region54: #{tpu_custom_call.1} parent=1 // pred_check
      _
    $region55: #{tpu_custom_call.1} parent=1 // pred_check_branch
      %54 = sbr.rel (0) target = $region57
    $region56: #{tpu_custom_call.1} parent=1 // pred_region
      _
    $region57: #{tpu_custom_call.1} parent=1 // pred_fallthru
      _
    // Predicated region
    $region58: #{tpu_custom_call.1} parent=1 // pred_check
      _
    $region59: #{tpu_custom_call.1} parent=1 // pred_check_branch
      %56 = sbr.rel (0) target = $region61
    $region60: #{tpu_custom_call.1} parent=1 // pred_region
      _
    $region61: #{tpu_custom_call.1} parent=1 // pred_fallthru
      _
    // Predicated region
    $region62: #{tpu_custom_call.1} parent=1 // pred_check
      _
    $region63: #{tpu_custom_call.1} parent=1 // pred_check_branch
      %58 = sbr.rel (0) target = $region65
    $region64: #{tpu_custom_call.1} parent=1 // pred_region
      _
    $region65: #{tpu_custom_call.1} parent=1 // pred_fallthru
      _
    // Predicated region
    $region66: #{tpu_custom_call.1} parent=1 // pred_check
      _
    $region67: #{tpu_custom_call.1} parent=1 // pred_check_branch
      %60 = sbr.rel (0) target = $region69
    $region68: #{tpu_custom_call.1} parent=1 // pred_region
      _
    $region69: #{tpu_custom_call.1} parent=1 // pred_fallthru
      _
    // Predicated region
    $region70: #{tpu_custom_call.1} parent=1 // pred_check
      _
    $region71: #{tpu_custom_call.1} parent=1 // pred_check_branch
      %62 = sbr.rel (0) target = $region73
    $region72: #{tpu_custom_call.1} parent=1 // pred_region
      _
    $region73: #{tpu_custom_call.1} parent=1 // pred_fallthru
      _
    %v63 = vld [vmem:[%s0] sm:$0xff]
    %v64 = vld [vmem:[%s0 + $0x8] sm:$0xff]
    %v65 = vld [vmem:[%s1] sm:$0xff]
    %v66 = vld [vmem:[%s1 + $0x8] sm:$0x3]
    %v67 = vld [vmem:[%s1 + $0x10] sm:$0xff]
    %v68 = vld [vmem:[%s1 + $0x18] sm:$0x3]
    %v69 = vld [vmem:[%s2] sm:$0xff]
    %v70 = vld [vmem:[%s2 + $0x8] sm:$0xff]
    %v71 = vld [vmem:[%s3] sm:$0x1]
    %v72 = vld [vmem:[%s3 + $0x1] sm:$0x1]
    %v73 = vld [vmem:[%s4] sm:$0xff]
    %v74 = vld [vmem:[%s4 + $0x8] sm:$0xff]
    %v75 = vld [vmem:[%s5] sm:$0x1]
    %v76 = vld [vmem:[%s6] sm:$0xff]
    %v77 = vld [vmem:[%s6 + $0x8] sm:$0xff]
    %v78 = vld [vmem:[%s7] sm:$0x1]
    %v83 = vcombine.high %v65, %v65
    %v85 = vunpack.c.l.s4 1983009808
    %v86 = vunpack.c.0.s8 %v85
    %v87 = vlaneseq
    %v88 = vshrl.u32 %v87, 7
    %v89 = vsub.s32 %v86, %v88
    %v90 = vrot.slane %v65, %v89
    %v92 = vunpack.c.l.s4 1983009808
    %v93 = vunpack.c.0.s8 %v92
    %v94 = vlaneseq
    %v95 = vshrl.u32 %v94, 7
    %v96 = vsub.s32 %v93, %v95
    %v97 = vrot.slane %v83, %v96
    %v98 = vcombine.high %v90, %v90
    %v99 = vcombine.high %v97, %v97
    %v101 = vunpack.c.l.s4 1983009808
    %v102 = vunpack.c.0.s8 %v101
    %v103 = vlaneseq
    %v104 = vshrl.u32 %v103, 7
    %v105 = vsub.s32 %v102, %v104
    %v106 = vrot.slane %v66, %v105
    %v107 = vcombine.high %v67, %v67
    %v109 = vunpack.c.l.s4 1983009808
    %v110 = vunpack.c.0.s8 %v109
    %v111 = vlaneseq
    %v112 = vshrl.u32 %v111, 7
    %v113 = vsub.s32 %v110, %v112
    %v114 = vrot.slane %v67, %v113
    %v116 = vunpack.c.l.s4 1983009808
    %v117 = vunpack.c.0.s8 %v116
    %v118 = vlaneseq
    %v119 = vshrl.u32 %v118, 7
    %v120 = vsub.s32 %v117, %v119
    %v121 = vrot.slane %v107, %v120
    %v122 = vcombine.high %v114, %v114
    %v123 = vcombine.high %v121, %v121
    %v125 = vunpack.c.l.s4 1983009808
    %v126 = vunpack.c.0.s8 %v125
    %v127 = vlaneseq
    %v128 = vshrl.u32 %v127, 7
    %v129 = vsub.s32 %v126, %v128
    %v130 = vrot.slane %v68, %v129
    %v132 = vlaneseq
    %v133 = vshrl.u32 %v132, 7
    %v134 = vsub.s32 0, %v133
    %v135 = vrot.slane %v75, %v134
    %vm137 = vcmask 130048
    %v139 = vsel %vm137, %v63, 0
    %v142 = vsel %vm137, %v64, 0
    %144 = vmatprep.subr.mxu0 0.0
    %145 = vmatpush1.msra.mxu0 0.0
    %146 = vmatprep.subr.mxu0 0.0
    %147 = vmatpush1.msra.mxu0 0.0
    %148 = vmatprep.subr.mxu0 0.0
    %149 = vmatpush1.msra.mxu0 0.0
    %150 = vmatprep.subr.mxu0 0.0
    %151 = vmatpush1.msra.mxu0 0.0
    %152 = vmatprep.subr.mxu0 0.0
    %153 = vmatpush1.msra.mxu0 0.0
    %154 = vmatprep.subr.mxu0 0.0
    %155 = vmatpush1.msra.mxu0 0.0
    %156 = vmatprep.subr.mxu0 0.0
    %157 = vmatpush1.msra.mxu0 0.0
    %158 = vmatprep.subr.mxu0 0.0
    %159 = vmatpush1.msra.mxu0 0.0
    %160 = vmatprep.subr.mxu0 0.0
    %161 = vmatpush1.msra.mxu0 0.0
    %162 = vmatprep.subr.mxu0 0.0
    %163 = vmatpush1.msra.mxu0 0.0
    %164 = vmatprep.subr.mxu0 0.0
    %165 = vmatpush1.msra.mxu0 0.0
    %166 = vmatprep.subr.mxu0 0.0
    %167 = vmatpush1.msra.mxu0 0.0
    %168 = vmatprep.subr.mxu0 0.0
    %169 = vmatpush1.msra.mxu0 0.0
    %170 = vmatprep.subr.mxu0 0.0
    %171 = vmatpush1.msra.mxu0 0.0
    %172 = vmatprep.subr.mxu0 0.0
    %173 = vmatpush1.msra.mxu0 %v74
    %174 = vmatprep.subr.mxu0 0.0
    %175 = vmatpush1.msra.mxu0 %v73
    %176 = vmatprep.subr.mxu0 0.0
    %177 = vmatpush2.msra.mxu0 0.0
    %178 = vmatprep.subr.mxu0 0.0
    %179 = vmatpush2.msra.mxu0 0.0
    %180 = vmatprep.subr.mxu0 0.0
    %181 = vmatpush2.msra.mxu0 0.0
    %182 = vmatprep.subr.mxu0 0.0
    %183 = vmatpush2.msra.mxu0 0.0
    %184 = vmatprep.subr.mxu0 0.0
    %185 = vmatpush2.msra.mxu0 0.0
    %186 = vmatprep.subr.mxu0 0.0
    %187 = vmatpush2.msra.mxu0 0.0
    %188 = vmatprep.subr.mxu0 0.0
    %189 = vmatpush2.msra.mxu0 0.0
    %190 = vmatprep.subr.mxu0 0.0
    %191 = vmatpush2.msra.mxu0 0.0
    %192 = vmatprep.subr.mxu0 0.0
    %193 = vmatpush2.msra.mxu0 0.0
    %194 = vmatprep.subr.mxu0 0.0
    %195 = vmatpush2.msra.mxu0 0.0
    %196 = vmatprep.subr.mxu0 0.0
    %197 = vmatpush2.msra.mxu0 0.0
    %198 = vmatprep.subr.mxu0 0.0
    %199 = vmatpush2.msra.mxu0 0.0
    %200 = vmatprep.subr.mxu0 0.0
    %201 = vmatpush2.msra.mxu0 0.0
    %202 = vmatprep.subr.mxu0 0.0
    %203 = vmatpush2.msra.mxu0 0.0
    %204 = vmatprep.subr.mxu0 0.0
    %205 = vmatpush2.msra.mxu0 0.0
    %206 = vmatprep.subr.mxu0 0.0
    %207 = vmatpush2.msra.mxu0 0.0
    %208 = vmatprep.mubr.f32.mxu0 0.0
    %209 = vmatmul.mubr.f32.gmra.mxu0 %v139
    %v210 = vpop.f32.mrf.mxu0
    %v211 = vadd.f32 %v135, %v210
    %v212 = vpop.f32.mrf.mxu0
    %213 = vmatprep.mubr.f32.mxu0 0.0
    %214 = vmatmul.mubr.f32.gmra.mxu0 %v142
    %v215 = vpop.f32.mrf.mxu0
    %v216 = vadd.f32 %v135, %v215
    %v217 = vpop.f32.mrf.mxu0
    %218 = vdwg.mxu0
    %220 = vrot.lane.b32.xlu0 %v211, 112
    %v221 = vpop.permute.xlu0 %220
    %vm222 = vcmask 31744
    %v223 = vsel %vm222, %v211, 0
    %v225 = vsel %vm222, %v221, 0
    %227 = vmatprep.subr.mxu0 0.0
    %228 = vmatpush1.xpose.msra.mxu0 0.0
    %229 = vmatprep.subr.mxu0 0.0
    %230 = vmatpush1.xpose.msra.mxu0 0.0
    %231 = vmatprep.subr.mxu0 0.0
    %232 = vmatpush1.xpose.msra.mxu0 0.0
    %233 = vmatprep.subr.mxu0 0.0
    %234 = vmatpush1.xpose.msra.mxu0 0.0
    %235 = vmatprep.subr.mxu0 0.0
    %236 = vmatpush1.xpose.msra.mxu0 0.0
    %237 = vmatprep.subr.mxu0 0.0
    %238 = vmatpush1.xpose.msra.mxu0 0.0
    %239 = vmatprep.subr.mxu0 0.0
    %240 = vmatpush1.xpose.msra.mxu0 0.0
    %241 = vmatprep.subr.mxu0 0.0
    %242 = vmatpush1.xpose.msra.mxu0 0.0
    %243 = vmatprep.subr.mxu0 0.0
    %244 = vmatpush1.xpose.msra.mxu0 0.0
    %245 = vmatprep.subr.mxu0 0.0
    %246 = vmatpush1.xpose.msra.mxu0 0.0
    %247 = vmatprep.subr.mxu0 0.0
    %248 = vmatpush1.xpose.msra.mxu0 0.0
    %249 = vmatprep.subr.mxu0 0.0
    %250 = vmatpush1.xpose.msra.mxu0 0.0
    %251 = vmatprep.subr.mxu0 0.0
    %252 = vmatpush1.xpose.msra.mxu0 0.0
    %253 = vmatprep.subr.mxu0 0.0
    %254 = vmatpush1.xpose.msra.mxu0 0.0
    %255 = vmatprep.subr.mxu0 0.0
    %256 = vmatpush1.xpose.msra.mxu0 0.0
    %257 = vmatprep.subr.mxu0 0.0
    %258 = vmatpush1.xpose.msra.mxu0 %v225
    %259 = vmatprep.subr.mxu0 0.0
    %260 = vmatpush2.xpose.msra.mxu0 0.0
    %261 = vmatprep.subr.mxu0 0.0
    %262 = vmatpush2.xpose.msra.mxu0 0.0
    %263 = vmatprep.subr.mxu0 0.0
    %264 = vmatpush2.xpose.msra.mxu0 0.0
    %265 = vmatprep.subr.mxu0 0.0
    %266 = vmatpush2.xpose.msra.mxu0 0.0
    %267 = vmatprep.subr.mxu0 0.0
    %268 = vmatpush2.xpose.msra.mxu0 0.0
    %269 = vmatprep.subr.mxu0 0.0
    %270 = vmatpush2.xpose.msra.mxu0 0.0
    %271 = vmatprep.subr.mxu0 0.0
    %272 = vmatpush2.xpose.msra.mxu0 0.0
    %273 = vmatprep.subr.mxu0 0.0
    %274 = vmatpush2.xpose.msra.mxu0 0.0
    %275 = vmatprep.subr.mxu0 0.0
    %276 = vmatpush2.xpose.msra.mxu0 0.0
    %277 = vmatprep.subr.mxu0 0.0
    %278 = vmatpush2.xpose.msra.mxu0 0.0
    %279 = vmatprep.subr.mxu0 0.0
    %280 = vmatpush2.xpose.msra.mxu0 0.0
    %281 = vmatprep.subr.mxu0 0.0
    %282 = vmatpush2.xpose.msra.mxu0 0.0
    %283 = vmatprep.subr.mxu0 0.0
    %284 = vmatpush2.xpose.msra.mxu0 0.0
    %285 = vmatprep.subr.mxu0 0.0
    %286 = vmatpush2.xpose.msra.mxu0 0.0
    %287 = vmatprep.subr.mxu0 0.0
    %288 = vmatpush2.xpose.msra.mxu0 0.0
    %289 = vmatprep.subr.mxu0 0.0
    %290 = vmatpush2.xpose.msra.mxu0 0.0
    %291 = vmatprep.mubr.f32.mxu0 0.0
    %292 = vmatmul.mubr.f32.gmra.mxu0 %v223
    %v293 = vpop.f32.mrf.mxu0
    %v294 = vadd.f32 0.0, %v293
    %v295 = vpop.f32.mrf.mxu0
    %296 = vdwg.mxu0
    %298 = vrot.lane.b32.xlu0 %v216, 112
    %v299 = vpop.permute.xlu0 %298
    %v300 = vsel %vm222, %v216, 0
    %v302 = vsel %vm222, %v299, 0
    %304 = vmatprep.subr.mxu0 0.0
    %305 = vmatpush1.xpose.msra.mxu0 0.0
    %306 = vmatprep.subr.mxu0 0.0
    %307 = vmatpush1.xpose.msra.mxu0 0.0
    %308 = vmatprep.subr.mxu0 0.0
    %309 = vmatpush1.xpose.msra.mxu0 0.0
    %310 = vmatprep.subr.mxu0 0.0
    %311 = vmatpush1.xpose.msra.mxu0 0.0
    %312 = vmatprep.subr.mxu0 0.0
    %313 = vmatpush1.xpose.msra.mxu0 0.0
    %314 = vmatprep.subr.mxu0 0.0
    %315 = vmatpush1.xpose.msra.mxu0 0.0
    %316 = vmatprep.subr.mxu0 0.0
    %317 = vmatpush1.xpose.msra.mxu0 0.0
    %318 = vmatprep.subr.mxu0 0.0
    %319 = vmatpush1.xpose.msra.mxu0 0.0
    %320 = vmatprep.subr.mxu0 0.0
    %321 = vmatpush1.xpose.msra.mxu0 0.0
    %322 = vmatprep.subr.mxu0 0.0
    %323 = vmatpush1.xpose.msra.mxu0 0.0
    %324 = vmatprep.subr.mxu0 0.0
    %325 = vmatpush1.xpose.msra.mxu0 0.0
    %326 = vmatprep.subr.mxu0 0.0
    %327 = vmatpush1.xpose.msra.mxu0 0.0
    %328 = vmatprep.subr.mxu0 0.0
    %329 = vmatpush1.xpose.msra.mxu0 0.0
    %330 = vmatprep.subr.mxu0 0.0
    %331 = vmatpush1.xpose.msra.mxu0 0.0
    %332 = vmatprep.subr.mxu0 0.0
    %333 = vmatpush1.xpose.msra.mxu0 0.0
    %334 = vmatprep.subr.mxu0 0.0
    %335 = vmatpush1.xpose.msra.mxu0 %v302
    %336 = vmatprep.subr.mxu0 0.0
    %337 = vmatpush2.xpose.msra.mxu0 0.0
    %338 = vmatprep.subr.mxu0 0.0
    %339 = vmatpush2.xpose.msra.mxu0 0.0
    %340 = vmatprep.subr.mxu0 0.0
    %341 = vmatpush2.xpose.msra.mxu0 0.0
    %342 = vmatprep.subr.mxu0 0.0
    %343 = vmatpush2.xpose.msra.mxu0 0.0
    %344 = vmatprep.subr.mxu0 0.0
    %345 = vmatpush2.xpose.msra.mxu0 0.0
    %346 = vmatprep.subr.mxu0 0.0
    %347 = vmatpush2.xpose.msra.mxu0 0.0
    %348 = vmatprep.subr.mxu0 0.0
    %349 = vmatpush2.xpose.msra.mxu0 0.0
    %350 = vmatprep.subr.mxu0 0.0
    %351 = vmatpush2.xpose.msra.mxu0 0.0
    %352 = vmatprep.subr.mxu0 0.0
    %353 = vmatpush2.xpose.msra.mxu0 0.0
    %354 = vmatprep.subr.mxu0 0.0
    %355 = vmatpush2.xpose.msra.mxu0 0.0
    %356 = vmatprep.subr.mxu0 0.0
    %357 = vmatpush2.xpose.msra.mxu0 0.0
    %358 = vmatprep.subr.mxu0 0.0
    %359 = vmatpush2.xpose.msra.mxu0 0.0
    %360 = vmatprep.subr.mxu0 0.0
    %361 = vmatpush2.xpose.msra.mxu0 0.0
    %362 = vmatprep.subr.mxu0 0.0
    %363 = vmatpush2.xpose.msra.mxu0 0.0
    %364 = vmatprep.subr.mxu0 0.0
    %365 = vmatpush2.xpose.msra.mxu0 0.0
    %366 = vmatprep.subr.mxu0 0.0
    %367 = vmatpush2.xpose.msra.mxu0 0.0
    %368 = vmatprep.mubr.f32.mxu0 0.0
    %369 = vmatmul.mubr.f32.gmra.mxu0 %v300
    %v370 = vpop.f32.mrf.mxu0
    %v371 = vadd.f32 0.0, %v370
    %v372 = vpop.f32.mrf.mxu0
    %373 = vdwg.mxu0
    %v374 = vmul.f32 %v294, 0.5
    %v375 = vmul.f32 %v371, 0.5
    %vm376 = vcmp.eq.f32.partialorder %v69, 0.0
    %vm377 = vcmp.eq.f32.partialorder %v70, 0.0
    %v378 = vsel %vm376, -1e+10, %v374
    %v379 = vsel %vm377, -1e+10, %v375
    %vm380 = vcmask 64512
    %v381 = vsel %vm380, %v378, -inf
    %382 = vmax.xlane.f32.xlu0 %v381
    %v383 = vpop.xlane.xlu0 %382
    %v384 = vsel %vm380, %v379, -inf
    %385 = vmax.xlane.f32.xlu0 %v384
    %v386 = vpop.xlane.xlu0 %385
    %v387 = vsub.f32 %v378, %v383
    %v388 = vsub.f32 %v379, %v386
    %v389 = vmul.f32 %v387, 1.442695
    %v390 = vpow.pop %v389
    %v391 = vmul.f32 %v388, 1.442695
    %v392 = vpow.pop %v391
    %v393 = vsel %vm380, %v390, 0.0
    %394 = vadd.xlane.f32.xlu0 %v393
    %v395 = vpop.xlane.xlu0 %394
    %v396 = vsel %vm380, %v392, 0.0
    %397 = vadd.xlane.f32.xlu0 %v396
    %v398 = vpop.xlane.xlu0 %397
    %v399 = vrcp.pop %v395
    %v400 = vrcp.pop %v398
    %v401 = vmul.f32 %v395, %v399
    %v402 = vmul.f32 %v398, %v400
    %v403 = vsub.f32 2.0, %v401
    %v404 = vsub.f32 2.0, %v402
    %v405 = vmul.f32 %v399, %v403
    %v406 = vmul.f32 %v400, %v404
    %v407 = vmul.f32 %v390, %v405
    %v408 = vmul.f32 %v392, %v406
    %409 = vrot.lane.b32.xlu0 %v211, 96
    %v410 = vpop.permute.xlu0 %409
    %v413 = vsel %vm380, %v407, 0
    %415 = vmatprep.subr.mxu0 0.0
    %416 = vmatpush1.msra.mxu0 0.0
    %417 = vmatprep.subr.mxu0 0.0
    %418 = vmatpush1.msra.mxu0 0.0
    %419 = vmatprep.subr.mxu0 0.0
    %420 = vmatpush1.msra.mxu0 0.0
    %421 = vmatprep.subr.mxu0 0.0
    %422 = vmatpush1.msra.mxu0 0.0
    %423 = vmatprep.subr.mxu0 0.0
    %424 = vmatpush1.msra.mxu0 0.0
    %425 = vmatprep.subr.mxu0 0.0
    %426 = vmatpush1.msra.mxu0 0.0
    %427 = vmatprep.subr.mxu0 0.0
    %428 = vmatpush1.msra.mxu0 0.0
    %429 = vmatprep.subr.mxu0 0.0
    %430 = vmatpush1.msra.mxu0 0.0
    %431 = vmatprep.subr.mxu0 0.0
    %432 = vmatpush1.msra.mxu0 0.0
    %433 = vmatprep.subr.mxu0 0.0
    %434 = vmatpush1.msra.mxu0 0.0
    %435 = vmatprep.subr.mxu0 0.0
    %436 = vmatpush1.msra.mxu0 0.0
    %437 = vmatprep.subr.mxu0 0.0
    %438 = vmatpush1.msra.mxu0 0.0
    %439 = vmatprep.subr.mxu0 0.0
    %440 = vmatpush1.msra.mxu0 0.0
    %441 = vmatprep.subr.mxu0 0.0
    %442 = vmatpush1.msra.mxu0 0.0
    %443 = vmatprep.subr.mxu0 0.0
    %444 = vmatpush1.msra.mxu0 0.0
    %445 = vmatprep.subr.mxu0 0.0
    %446 = vmatpush1.msra.mxu0 %v410
    %447 = vmatprep.subr.mxu0 0.0
    %448 = vmatpush2.msra.mxu0 0.0
    %449 = vmatprep.subr.mxu0 0.0
    %450 = vmatpush2.msra.mxu0 0.0
    %451 = vmatprep.subr.mxu0 0.0
    %452 = vmatpush2.msra.mxu0 0.0
    %453 = vmatprep.subr.mxu0 0.0
    %454 = vmatpush2.msra.mxu0 0.0
    %455 = vmatprep.subr.mxu0 0.0
    %456 = vmatpush2.msra.mxu0 0.0
    %457 = vmatprep.subr.mxu0 0.0
    %458 = vmatpush2.msra.mxu0 0.0
    %459 = vmatprep.subr.mxu0 0.0
    %460 = vmatpush2.msra.mxu0 0.0
    %461 = vmatprep.subr.mxu0 0.0
    %462 = vmatpush2.msra.mxu0 0.0
    %463 = vmatprep.subr.mxu0 0.0
    %464 = vmatpush2.msra.mxu0 0.0
    %465 = vmatprep.subr.mxu0 0.0
    %466 = vmatpush2.msra.mxu0 0.0
    %467 = vmatprep.subr.mxu0 0.0
    %468 = vmatpush2.msra.mxu0 0.0
    %469 = vmatprep.subr.mxu0 0.0
    %470 = vmatpush2.msra.mxu0 0.0
    %471 = vmatprep.subr.mxu0 0.0
    %472 = vmatpush2.msra.mxu0 0.0
    %473 = vmatprep.subr.mxu0 0.0
    %474 = vmatpush2.msra.mxu0 0.0
    %475 = vmatprep.subr.mxu0 0.0
    %476 = vmatpush2.msra.mxu0 0.0
    %477 = vmatprep.subr.mxu0 0.0
    %478 = vmatpush2.msra.mxu0 0.0
    %479 = vmatprep.mubr.f32.mxu0 0.0
    %480 = vmatmul.mubr.f32.gmra.mxu0 %v413
    %v481 = vpop.f32.mrf.mxu0
    %v482 = vadd.f32 0.0, %v481
    %v483 = vpop.f32.mrf.mxu0
    %484 = vdwg.mxu0
    %485 = vrot.lane.b32.xlu0 %v216, 96
    %v486 = vpop.permute.xlu0 %485
    %v489 = vsel %vm380, %v408, 0
    %491 = vmatprep.subr.mxu0 0.0
    %492 = vmatpush1.msra.mxu0 0.0
    %493 = vmatprep.subr.mxu0 0.0
    %494 = vmatpush1.msra.mxu0 0.0
    %495 = vmatprep.subr.mxu0 0.0
    %496 = vmatpush1.msra.mxu0 0.0
    %497 = vmatprep.subr.mxu0 0.0
    %498 = vmatpush1.msra.mxu0 0.0
    %499 = vmatprep.subr.mxu0 0.0
    %500 = vmatpush1.msra.mxu0 0.0
    %501 = vmatprep.subr.mxu0 0.0
    %502 = vmatpush1.msra.mxu0 0.0
    %503 = vmatprep.subr.mxu0 0.0
    %504 = vmatpush1.msra.mxu0 0.0
    %505 = vmatprep.subr.mxu0 0.0
    %506 = vmatpush1.msra.mxu0 0.0
    %507 = vmatprep.subr.mxu0 0.0
    %508 = vmatpush1.msra.mxu0 0.0
    %509 = vmatprep.subr.mxu0 0.0
    %510 = vmatpush1.msra.mxu0 0.0
    %511 = vmatprep.subr.mxu0 0.0
    %512 = vmatpush1.msra.mxu0 0.0
    %513 = vmatprep.subr.mxu0 0.0
    %514 = vmatpush1.msra.mxu0 0.0
    %515 = vmatprep.subr.mxu0 0.0
    %516 = vmatpush1.msra.mxu0 0.0
    %517 = vmatprep.subr.mxu0 0.0
    %518 = vmatpush1.msra.mxu0 0.0
    %519 = vmatprep.subr.mxu0 0.0
    %520 = vmatpush1.msra.mxu0 0.0
    %521 = vmatprep.subr.mxu0 0.0
    %522 = vmatpush1.msra.mxu0 %v486
    %523 = vmatprep.subr.mxu0 0.0
    %524 = vmatpush2.msra.mxu0 0.0
    %525 = vmatprep.subr.mxu0 0.0
    %526 = vmatpush2.msra.mxu0 0.0
    %527 = vmatprep.subr.mxu0 0.0
    %528 = vmatpush2.msra.mxu0 0.0
    %529 = vmatprep.subr.mxu0 0.0
    %530 = vmatpush2.msra.mxu0 0.0
    %531 = vmatprep.subr.mxu0 0.0
    %532 = vmatpush2.msra.mxu0 0.0
    %533 = vmatprep.subr.mxu0 0.0
    %534 = vmatpush2.msra.mxu0 0.0
    %535 = vmatprep.subr.mxu0 0.0
    %536 = vmatpush2.msra.mxu0 0.0
    %537 = vmatprep.subr.mxu0 0.0
    %538 = vmatpush2.msra.mxu0 0.0
    %539 = vmatprep.subr.mxu0 0.0
    %540 = vmatpush2.msra.mxu0 0.0
    %541 = vmatprep.subr.mxu0 0.0
    %542 = vmatpush2.msra.mxu0 0.0
    %543 = vmatprep.subr.mxu0 0.0
    %544 = vmatpush2.msra.mxu0 0.0
    %545 = vmatprep.subr.mxu0 0.0
    %546 = vmatpush2.msra.mxu0 0.0
    %547 = vmatprep.subr.mxu0 0.0
    %548 = vmatpush2.msra.mxu0 0.0
    %549 = vmatprep.subr.mxu0 0.0
    %550 = vmatpush2.msra.mxu0 0.0
    %551 = vmatprep.subr.mxu0 0.0
    %552 = vmatpush2.msra.mxu0 0.0
    %553 = vmatprep.subr.mxu0 0.0
    %554 = vmatpush2.msra.mxu0 0.0
    %555 = vmatprep.mubr.f32.mxu0 0.0
    %556 = vmatmul.mubr.f32.gmra.mxu0 %v489
    %v557 = vpop.f32.mrf.mxu0
    %v558 = vadd.f32 0.0, %v557
    %v559 = vpop.f32.mrf.mxu0
    %560 = vdwg.mxu0
    %561 = vrot.lane.b32.xlu0 %v211, 124
    %v562 = vpop.permute.xlu0 %561
    %563 = vrot.lane.b32.xlu0 %v211, 108
    %v564 = vpop.permute.xlu0 %563
    %v565 = vsel %vm222, %v562, 0
    %v567 = vsel %vm222, %v564, 0
    %569 = vmatprep.subr.mxu0 0.0
    %570 = vmatpush1.xpose.msra.mxu0 0.0
    %571 = vmatprep.subr.mxu0 0.0
    %572 = vmatpush1.xpose.msra.mxu0 0.0
    %573 = vmatprep.subr.mxu0 0.0
    %574 = vmatpush1.xpose.msra.mxu0 0.0
    %575 = vmatprep.subr.mxu0 0.0
    %576 = vmatpush1.xpose.msra.mxu0 0.0
    %577 = vmatprep.subr.mxu0 0.0
    %578 = vmatpush1.xpose.msra.mxu0 0.0
    %579 = vmatprep.subr.mxu0 0.0
    %580 = vmatpush1.xpose.msra.mxu0 0.0
    %581 = vmatprep.subr.mxu0 0.0
    %582 = vmatpush1.xpose.msra.mxu0 0.0
    %583 = vmatprep.subr.mxu0 0.0
    %584 = vmatpush1.xpose.msra.mxu0 0.0
    %585 = vmatprep.subr.mxu0 0.0
    %586 = vmatpush1.xpose.msra.mxu0 0.0
    %587 = vmatprep.subr.mxu0 0.0
    %588 = vmatpush1.xpose.msra.mxu0 0.0
    %589 = vmatprep.subr.mxu0 0.0
    %590 = vmatpush1.xpose.msra.mxu0 0.0
    %591 = vmatprep.subr.mxu0 0.0
    %592 = vmatpush1.xpose.msra.mxu0 0.0
    %593 = vmatprep.subr.mxu0 0.0
    %594 = vmatpush1.xpose.msra.mxu0 0.0
    %595 = vmatprep.subr.mxu0 0.0
    %596 = vmatpush1.xpose.msra.mxu0 0.0
    %597 = vmatprep.subr.mxu0 0.0
    %598 = vmatpush1.xpose.msra.mxu0 0.0
    %599 = vmatprep.subr.mxu0 0.0
    %600 = vmatpush1.xpose.msra.mxu0 %v567
    %601 = vmatprep.subr.mxu0 0.0
    %602 = vmatpush2.xpose.msra.mxu0 0.0
    %603 = vmatprep.subr.mxu0 0.0
    %604 = vmatpush2.xpose.msra.mxu0 0.0
    %605 = vmatprep.subr.mxu0 0.0
    %606 = vmatpush2.xpose.msra.mxu0 0.0
    %607 = vmatprep.subr.mxu0 0.0
    %608 = vmatpush2.xpose.msra.mxu0 0.0
    %609 = vmatprep.subr.mxu0 0.0
    %610 = vmatpush2.xpose.msra.mxu0 0.0
    %611 = vmatprep.subr.mxu0 0.0
    %612 = vmatpush2.xpose.msra.mxu0 0.0
    %613 = vmatprep.subr.mxu0 0.0
    %614 = vmatpush2.xpose.msra.mxu0 0.0
    %615 = vmatprep.subr.mxu0 0.0
    %616 = vmatpush2.xpose.msra.mxu0 0.0
    %617 = vmatprep.subr.mxu0 0.0
    %618 = vmatpush2.xpose.msra.mxu0 0.0
    %619 = vmatprep.subr.mxu0 0.0
    %620 = vmatpush2.xpose.msra.mxu0 0.0
    %621 = vmatprep.subr.mxu0 0.0
    %622 = vmatpush2.xpose.msra.mxu0 0.0
    %623 = vmatprep.subr.mxu0 0.0
    %624 = vmatpush2.xpose.msra.mxu0 0.0
    %625 = vmatprep.subr.mxu0 0.0
    %626 = vmatpush2.xpose.msra.mxu0 0.0
    %627 = vmatprep.subr.mxu0 0.0
    %628 = vmatpush2.xpose.msra.mxu0 0.0
    %629 = vmatprep.subr.mxu0 0.0
    %630 = vmatpush2.xpose.msra.mxu0 0.0
    %631 = vmatprep.subr.mxu0 0.0
    %632 = vmatpush2.xpose.msra.mxu0 0.0
    %633 = vmatprep.mubr.f32.mxu0 0.0
    %634 = vmatmul.mubr.f32.gmra.mxu0 %v565
    %v635 = vpop.f32.mrf.mxu0
    %v636 = vadd.f32 0.0, %v635
    %v637 = vpop.f32.mrf.mxu0
    %638 = vdwg.mxu0
    %639 = vrot.lane.b32.xlu0 %v216, 124
    %v640 = vpop.permute.xlu0 %639
    %641 = vrot.lane.b32.xlu0 %v216, 108
    %v642 = vpop.permute.xlu0 %641
    %v643 = vsel %vm222, %v640, 0
    %v645 = vsel %vm222, %v642, 0
    %647 = vmatprep.subr.mxu0 0.0
    %648 = vmatpush1.xpose.msra.mxu0 0.0
    %649 = vmatprep.subr.mxu0 0.0
    %650 = vmatpush1.xpose.msra.mxu0 0.0
    %651 = vmatprep.subr.mxu0 0.0
    %652 = vmatpush1.xpose.msra.mxu0 0.0
    %653 = vmatprep.subr.mxu0 0.0
    %654 = vmatpush1.xpose.msra.mxu0 0.0
    %655 = vmatprep.subr.mxu0 0.0
    %656 = vmatpush1.xpose.msra.mxu0 0.0
    %657 = vmatprep.subr.mxu0 0.0
    %658 = vmatpush1.xpose.msra.mxu0 0.0
    %659 = vmatprep.subr.mxu0 0.0
    %660 = vmatpush1.xpose.msra.mxu0 0.0
    %661 = vmatprep.subr.mxu0 0.0
    %662 = vmatpush1.xpose.msra.mxu0 0.0
    %663 = vmatprep.subr.mxu0 0.0
    %664 = vmatpush1.xpose.msra.mxu0 0.0
    %665 = vmatprep.subr.mxu0 0.0
    %666 = vmatpush1.xpose.msra.mxu0 0.0
    %667 = vmatprep.subr.mxu0 0.0
    %668 = vmatpush1.xpose.msra.mxu0 0.0
    %669 = vmatprep.subr.mxu0 0.0
    %670 = vmatpush1.xpose.msra.mxu0 0.0
    %671 = vmatprep.subr.mxu0 0.0
    %672 = vmatpush1.xpose.msra.mxu0 0.0
    %673 = vmatprep.subr.mxu0 0.0
    %674 = vmatpush1.xpose.msra.mxu0 0.0
    %675 = vmatprep.subr.mxu0 0.0
    %676 = vmatpush1.xpose.msra.mxu0 0.0
    %677 = vmatprep.subr.mxu0 0.0
    %678 = vmatpush1.xpose.msra.mxu0 %v645
    %679 = vmatprep.subr.mxu0 0.0
    %680 = vmatpush2.xpose.msra.mxu0 0.0
    %681 = vmatprep.subr.mxu0 0.0
    %682 = vmatpush2.xpose.msra.mxu0 0.0
    %683 = vmatprep.subr.mxu0 0.0
    %684 = vmatpush2.xpose.msra.mxu0 0.0
    %685 = vmatprep.subr.mxu0 0.0
    %686 = vmatpush2.xpose.msra.mxu0 0.0
    %687 = vmatprep.subr.mxu0 0.0
    %688 = vmatpush2.xpose.msra.mxu0 0.0
    %689 = vmatprep.subr.mxu0 0.0
    %690 = vmatpush2.xpose.msra.mxu0 0.0
    %691 = vmatprep.subr.mxu0 0.0
    %692 = vmatpush2.xpose.msra.mxu0 0.0
    %693 = vmatprep.subr.mxu0 0.0
    %694 = vmatpush2.xpose.msra.mxu0 0.0
    %695 = vmatprep.subr.mxu0 0.0
    %696 = vmatpush2.xpose.msra.mxu0 0.0
    %697 = vmatprep.subr.mxu0 0.0
    %698 = vmatpush2.xpose.msra.mxu0 0.0
    %699 = vmatprep.subr.mxu0 0.0
    %700 = vmatpush2.xpose.msra.mxu0 0.0
    %701 = vmatprep.subr.mxu0 0.0
    %702 = vmatpush2.xpose.msra.mxu0 0.0
    %703 = vmatprep.subr.mxu0 0.0
    %704 = vmatpush2.xpose.msra.mxu0 0.0
    %705 = vmatprep.subr.mxu0 0.0
    %706 = vmatpush2.xpose.msra.mxu0 0.0
    %707 = vmatprep.subr.mxu0 0.0
    %708 = vmatpush2.xpose.msra.mxu0 0.0
    %709 = vmatprep.subr.mxu0 0.0
    %710 = vmatpush2.xpose.msra.mxu0 0.0
    %711 = vmatprep.mubr.f32.mxu0 0.0
    %712 = vmatmul.mubr.f32.gmra.mxu0 %v643
    %v713 = vpop.f32.mrf.mxu0
    %v714 = vadd.f32 0.0, %v713
    %v715 = vpop.f32.mrf.mxu0
    %716 = vdwg.mxu0
    %v717 = vmul.f32 %v636, 0.5
    %v718 = vmul.f32 %v714, 0.5
    %v719 = vsel %vm376, -1e+10, %v717
    %v720 = vsel %vm377, -1e+10, %v718
    %v721 = vsel %vm380, %v719, -inf
    %722 = vmax.xlane.f32.xlu0 %v721
    %v723 = vpop.xlane.xlu0 %722
    %v724 = vsel %vm380, %v720, -inf
    %725 = vmax.xlane.f32.xlu0 %v724
    %v726 = vpop.xlane.xlu0 %725
    %v727 = vsub.f32 %v719, %v723
    %v728 = vsub.f32 %v720, %v726
    %v729 = vmul.f32 %v727, 1.442695
    %v730 = vpow.pop %v729
    %v731 = vmul.f32 %v728, 1.442695
    %v732 = vpow.pop %v731
    %v733 = vsel %vm380, %v730, 0.0
    %734 = vadd.xlane.f32.xlu0 %v733
    %v735 = vpop.xlane.xlu0 %734
    %v736 = vsel %vm380, %v732, 0.0
    %737 = vadd.xlane.f32.xlu0 %v736
    %v738 = vpop.xlane.xlu0 %737
    %v739 = vrcp.pop %v735
    %v740 = vrcp.pop %v738
    %v741 = vmul.f32 %v735, %v739
    %v742 = vmul.f32 %v738, %v740
    %v743 = vsub.f32 2.0, %v741
    %v744 = vsub.f32 2.0, %v742
    %v745 = vmul.f32 %v739, %v743
    %v746 = vmul.f32 %v740, %v744
    %v747 = vmul.f32 %v730, %v745
    %v748 = vmul.f32 %v732, %v746
    %749 = vrot.lane.b32.xlu0 %v211, 92
    %v750 = vpop.permute.xlu0 %749
    %v753 = vsel %vm380, %v747, 0
    %755 = vmatprep.subr.mxu0 0.0
    %756 = vmatpush1.msra.mxu0 0.0
    %757 = vmatprep.subr.mxu0 0.0
    %758 = vmatpush1.msra.mxu0 0.0
    %759 = vmatprep.subr.mxu0 0.0
    %760 = vmatpush1.msra.mxu0 0.0
    %761 = vmatprep.subr.mxu0 0.0
    %762 = vmatpush1.msra.mxu0 0.0
    %763 = vmatprep.subr.mxu0 0.0
    %764 = vmatpush1.msra.mxu0 0.0
    %765 = vmatprep.subr.mxu0 0.0
    %766 = vmatpush1.msra.mxu0 0.0
    %767 = vmatprep.subr.mxu0 0.0
    %768 = vmatpush1.msra.mxu0 0.0
    %769 = vmatprep.subr.mxu0 0.0
    %770 = vmatpush1.msra.mxu0 0.0
    %771 = vmatprep.subr.mxu0 0.0
    %772 = vmatpush1.msra.mxu0 0.0
    %773 = vmatprep.subr.mxu0 0.0
    %774 = vmatpush1.msra.mxu0 0.0
    %775 = vmatprep.subr.mxu0 0.0
    %776 = vmatpush1.msra.mxu0 0.0
    %777 = vmatprep.subr.mxu0 0.0
    %778 = vmatpush1.msra.mxu0 0.0
    %779 = vmatprep.subr.mxu0 0.0
    %780 = vmatpush1.msra.mxu0 0.0
    %781 = vmatprep.subr.mxu0 0.0
    %782 = vmatpush1.msra.mxu0 0.0
    %783 = vmatprep.subr.mxu0 0.0
    %784 = vmatpush1.msra.mxu0 0.0
    %785 = vmatprep.subr.mxu0 0.0
    %786 = vmatpush1.msra.mxu0 %v750
    %787 = vmatprep.subr.mxu0 0.0
    %788 = vmatpush2.msra.mxu0 0.0
    %789 = vmatprep.subr.mxu0 0.0
    %790 = vmatpush2.msra.mxu0 0.0
    %791 = vmatprep.subr.mxu0 0.0
    %792 = vmatpush2.msra.mxu0 0.0
    %793 = vmatprep.subr.mxu0 0.0
    %794 = vmatpush2.msra.mxu0 0.0
    %795 = vmatprep.subr.mxu0 0.0
    %796 = vmatpush2.msra.mxu0 0.0
    %797 = vmatprep.subr.mxu0 0.0
    %798 = vmatpush2.msra.mxu0 0.0
    %799 = vmatprep.subr.mxu0 0.0
    %800 = vmatpush2.msra.mxu0 0.0
    %801 = vmatprep.subr.mxu0 0.0
    %802 = vmatpush2.msra.mxu0 0.0
    %803 = vmatprep.subr.mxu0 0.0
    %804 = vmatpush2.msra.mxu0 0.0
    %805 = vmatprep.subr.mxu0 0.0
    %806 = vmatpush2.msra.mxu0 0.0
    %807 = vmatprep.subr.mxu0 0.0
    %808 = vmatpush2.msra.mxu0 0.0
    %809 = vmatprep.subr.mxu0 0.0
    %810 = vmatpush2.msra.mxu0 0.0
    %811 = vmatprep.subr.mxu0 0.0
    %812 = vmatpush2.msra.mxu0 0.0
    %813 = vmatprep.subr.mxu0 0.0
    %814 = vmatpush2.msra.mxu0 0.0
    %815 = vmatprep.subr.mxu0 0.0
    %816 = vmatpush2.msra.mxu0 0.0
    %817 = vmatprep.subr.mxu0 0.0
    %818 = vmatpush2.msra.mxu0 0.0
    %819 = vmatprep.mubr.f32.mxu0 0.0
    %820 = vmatmul.mubr.f32.gmra.mxu0 %v753
    %v821 = vpop.f32.mrf.mxu0
    %v822 = vadd.f32 0.0, %v821
    %v823 = vpop.f32.mrf.mxu0
    %824 = vdwg.mxu0
    %825 = vrot.lane.b32.xlu0 %v216, 92
    %v826 = vpop.permute.xlu0 %825
    %v829 = vsel %vm380, %v748, 0
    %831 = vmatprep.subr.mxu0 0.0
    %832 = vmatpush1.msra.mxu0 0.0
    %833 = vmatprep.subr.mxu0 0.0
    %834 = vmatpush1.msra.mxu0 0.0
    %835 = vmatprep.subr.mxu0 0.0
    %836 = vmatpush1.msra.mxu0 0.0
    %837 = vmatprep.subr.mxu0 0.0
    %838 = vmatpush1.msra.mxu0 0.0
    %839 = vmatprep.subr.mxu0 0.0
    %840 = vmatpush1.msra.mxu0 0.0
    %841 = vmatprep.subr.mxu0 0.0
    %842 = vmatpush1.msra.mxu0 0.0
    %843 = vmatprep.subr.mxu0 0.0
    %844 = vmatpush1.msra.mxu0 0.0
    %845 = vmatprep.subr.mxu0 0.0
    %846 = vmatpush1.msra.mxu0 0.0
    %847 = vmatprep.subr.mxu0 0.0
    %848 = vmatpush1.msra.mxu0 0.0
    %849 = vmatprep.subr.mxu0 0.0
    %850 = vmatpush1.msra.mxu0 0.0
    %851 = vmatprep.subr.mxu0 0.0
    %852 = vmatpush1.msra.mxu0 0.0
    %853 = vmatprep.subr.mxu0 0.0
    %854 = vmatpush1.msra.mxu0 0.0
    %855 = vmatprep.subr.mxu0 0.0
    %856 = vmatpush1.msra.mxu0 0.0
    %857 = vmatprep.subr.mxu0 0.0
    %858 = vmatpush1.msra.mxu0 0.0
    %859 = vmatprep.subr.mxu0 0.0
    %860 = vmatpush1.msra.mxu0 0.0
    %861 = vmatprep.subr.mxu0 0.0
    %862 = vmatpush1.msra.mxu0 %v826
    %863 = vmatprep.subr.mxu0 0.0
    %864 = vmatpush2.msra.mxu0 0.0
    %865 = vmatprep.subr.mxu0 0.0
    %866 = vmatpush2.msra.mxu0 0.0
    %867 = vmatprep.subr.mxu0 0.0
    %868 = vmatpush2.msra.mxu0 0.0
    %869 = vmatprep.subr.mxu0 0.0
    %870 = vmatpush2.msra.mxu0 0.0
    %871 = vmatprep.subr.mxu0 0.0
    %872 = vmatpush2.msra.mxu0 0.0
    %873 = vmatprep.subr.mxu0 0.0
    %874 = vmatpush2.msra.mxu0 0.0
    %875 = vmatprep.subr.mxu0 0.0
    %876 = vmatpush2.msra.mxu0 0.0
    %877 = vmatprep.subr.mxu0 0.0
    %878 = vmatpush2.msra.mxu0 0.0
    %879 = vmatprep.subr.mxu0 0.0
    %880 = vmatpush2.msra.mxu0 0.0
    %881 = vmatprep.subr.mxu0 0.0
    %882 = vmatpush2.msra.mxu0 0.0
    %883 = vmatprep.subr.mxu0 0.0
    %884 = vmatpush2.msra.mxu0 0.0
    %885 = vmatprep.subr.mxu0 0.0
    %886 = vmatpush2.msra.mxu0 0.0
    %887 = vmatprep.subr.mxu0 0.0
    %888 = vmatpush2.msra.mxu0 0.0
    %889 = vmatprep.subr.mxu0 0.0
    %890 = vmatpush2.msra.mxu0 0.0
    %891 = vmatprep.subr.mxu0 0.0
    %892 = vmatpush2.msra.mxu0 0.0
    %893 = vmatprep.subr.mxu0 0.0
    %894 = vmatpush2.msra.mxu0 0.0
    %895 = vmatprep.mubr.f32.mxu0 0.0
    %896 = vmatmul.mubr.f32.gmra.mxu0 %v829
    %v897 = vpop.f32.mrf.mxu0
    %v898 = vadd.f32 0.0, %v897
    %v899 = vpop.f32.mrf.mxu0
    %900 = vdwg.mxu0
    %901 = vrot.lane.b32.xlu0 %v211, 120
    %v902 = vpop.permute.xlu0 %901
    %903 = vrot.lane.b32.xlu0 %v211, 104
    %v904 = vpop.permute.xlu0 %903
    %v905 = vsel %vm222, %v902, 0
    %v907 = vsel %vm222, %v904, 0
    %909 = vmatprep.subr.mxu0 0.0
    %910 = vmatpush1.xpose.msra.mxu0 0.0
    %911 = vmatprep.subr.mxu0 0.0
    %912 = vmatpush1.xpose.msra.mxu0 0.0
    %913 = vmatprep.subr.mxu0 0.0
    %914 = vmatpush1.xpose.msra.mxu0 0.0
    %915 = vmatprep.subr.mxu0 0.0
    %916 = vmatpush1.xpose.msra.mxu0 0.0
    %917 = vmatprep.subr.mxu0 0.0
    %918 = vmatpush1.xpose.msra.mxu0 0.0
    %919 = vmatprep.subr.mxu0 0.0
    %920 = vmatpush1.xpose.msra.mxu0 0.0
    %921 = vmatprep.subr.mxu0 0.0
    %922 = vmatpush1.xpose.msra.mxu0 0.0
    %923 = vmatprep.subr.mxu0 0.0
    %924 = vmatpush1.xpose.msra.mxu0 0.0
    %925 = vmatprep.subr.mxu0 0.0
    %926 = vmatpush1.xpose.msra.mxu0 0.0
    %927 = vmatprep.subr.mxu0 0.0
    %928 = vmatpush1.xpose.msra.mxu0 0.0
    %929 = vmatprep.subr.mxu0 0.0
    %930 = vmatpush1.xpose.msra.mxu0 0.0
    %931 = vmatprep.subr.mxu0 0.0
    %932 = vmatpush1.xpose.msra.mxu0 0.0
    %933 = vmatprep.subr.mxu0 0.0
    %934 = vmatpush1.xpose.msra.mxu0 0.0
    %935 = vmatprep.subr.mxu0 0.0
    %936 = vmatpush1.xpose.msra.mxu0 0.0
    %937 = vmatprep.subr.mxu0 0.0
    %938 = vmatpush1.xpose.msra.mxu0 0.0
    %939 = vmatprep.subr.mxu0 0.0
    %940 = vmatpush1.xpose.msra.mxu0 %v907
    %941 = vmatprep.subr.mxu0 0.0
    %942 = vmatpush2.xpose.msra.mxu0 0.0
    %943 = vmatprep.subr.mxu0 0.0
    %944 = vmatpush2.xpose.msra.mxu0 0.0
    %945 = vmatprep.subr.mxu0 0.0
    %946 = vmatpush2.xpose.msra.mxu0 0.0
    %947 = vmatprep.subr.mxu0 0.0
    %948 = vmatpush2.xpose.msra.mxu0 0.0
    %949 = vmatprep.subr.mxu0 0.0
    %950 = vmatpush2.xpose.msra.mxu0 0.0
    %951 = vmatprep.subr.mxu0 0.0
    %952 = vmatpush2.xpose.msra.mxu0 0.0
    %953 = vmatprep.subr.mxu0 0.0
    %954 = vmatpush2.xpose.msra.mxu0 0.0
    %955 = vmatprep.subr.mxu0 0.0
    %956 = vmatpush2.xpose.msra.mxu0 0.0
    %957 = vmatprep.subr.mxu0 0.0
    %958 = vmatpush2.xpose.msra.mxu0 0.0
    %959 = vmatprep.subr.mxu0 0.0
    %960 = vmatpush2.xpose.msra.mxu0 0.0
    %961 = vmatprep.subr.mxu0 0.0
    %962 = vmatpush2.xpose.msra.mxu0 0.0
    %963 = vmatprep.subr.mxu0 0.0
    %964 = vmatpush2.xpose.msra.mxu0 0.0
    %965 = vmatprep.subr.mxu0 0.0
    %966 = vmatpush2.xpose.msra.mxu0 0.0
    %967 = vmatprep.subr.mxu0 0.0
    %968 = vmatpush2.xpose.msra.mxu0 0.0
    %969 = vmatprep.subr.mxu0 0.0
    %970 = vmatpush2.xpose.msra.mxu0 0.0
    %971 = vmatprep.subr.mxu0 0.0
    %972 = vmatpush2.xpose.msra.mxu0 0.0
    %973 = vmatprep.mubr.f32.mxu0 0.0
    %974 = vmatmul.mubr.f32.gmra.mxu0 %v905
    %v975 = vpop.f32.mrf.mxu0
    %v976 = vadd.f32 0.0, %v975
    %v977 = vpop.f32.mrf.mxu0
    %978 = vdwg.mxu0
    %979 = vrot.lane.b32.xlu0 %v216, 120
    %v980 = vpop.permute.xlu0 %979
    %981 = vrot.lane.b32.xlu0 %v216, 104
    %v982 = vpop.permute.xlu0 %981
    %v983 = vsel %vm222, %v980, 0
    %v985 = vsel %vm222, %v982, 0
    %987 = vmatprep.subr.mxu0 0.0
    %988 = vmatpush1.xpose.msra.mxu0 0.0
    %989 = vmatprep.subr.mxu0 0.0
    %990 = vmatpush1.xpose.msra.mxu0 0.0
    %991 = vmatprep.subr.mxu0 0.0
    %992 = vmatpush1.xpose.msra.mxu0 0.0
    %993 = vmatprep.subr.mxu0 0.0
    %994 = vmatpush1.xpose.msra.mxu0 0.0
    %995 = vmatprep.subr.mxu0 0.0
    %996 = vmatpush1.xpose.msra.mxu0 0.0
    %997 = vmatprep.subr.mxu0 0.0
    %998 = vmatpush1.xpose.msra.mxu0 0.0
    %999 = vmatprep.subr.mxu0 0.0
    %1000 = vmatpush1.xpose.msra.mxu0 0.0
    %1001 = vmatprep.subr.mxu0 0.0
    %1002 = vmatpush1.xpose.msra.mxu0 0.0
    %1003 = vmatprep.subr.mxu0 0.0
    %1004 = vmatpush1.xpose.msra.mxu0 0.0
    %1005 = vmatprep.subr.mxu0 0.0
    %1006 = vmatpush1.xpose.msra.mxu0 0.0
    %1007 = vmatprep.subr.mxu0 0.0
    %1008 = vmatpush1.xpose.msra.mxu0 0.0
    %1009 = vmatprep.subr.mxu0 0.0
    %1010 = vmatpush1.xpose.msra.mxu0 0.0
    %1011 = vmatprep.subr.mxu0 0.0
    %1012 = vmatpush1.xpose.msra.mxu0 0.0
    %1013 = vmatprep.subr.mxu0 0.0
    %1014 = vmatpush1.xpose.msra.mxu0 0.0
    %1015 = vmatprep.subr.mxu0 0.0
    %1016 = vmatpush1.xpose.msra.mxu0 0.0
    %1017 = vmatprep.subr.mxu0 0.0
    %1018 = vmatpush1.xpose.msra.mxu0 %v985
    %1019 = vmatprep.subr.mxu0 0.0
    %1020 = vmatpush2.xpose.msra.mxu0 0.0
    %1021 = vmatprep.subr.mxu0 0.0
    %1022 = vmatpush2.xpose.msra.mxu0 0.0
    %1023 = vmatprep.subr.mxu0 0.0
    %1024 = vmatpush2.xpose.msra.mxu0 0.0
    %1025 = vmatprep.subr.mxu0 0.0
    %1026 = vmatpush2.xpose.msra.mxu0 0.0
    %1027 = vmatprep.subr.mxu0 0.0
    %1028 = vmatpush2.xpose.msra.mxu0 0.0
    %1029 = vmatprep.subr.mxu0 0.0
    %1030 = vmatpush2.xpose.msra.mxu0 0.0
    %1031 = vmatprep.subr.mxu0 0.0
    %1032 = vmatpush2.xpose.msra.mxu0 0.0
    %1033 = vmatprep.subr.mxu0 0.0
    %1034 = vmatpush2.xpose.msra.mxu0 0.0
    %1035 = vmatprep.subr.mxu0 0.0
    %1036 = vmatpush2.xpose.msra.mxu0 0.0
    %1037 = vmatprep.subr.mxu0 0.0
    %1038 = vmatpush2.xpose.msra.mxu0 0.0
    %1039 = vmatprep.subr.mxu0 0.0
    %1040 = vmatpush2.xpose.msra.mxu0 0.0
    %1041 = vmatprep.subr.mxu0 0.0
    %1042 = vmatpush2.xpose.msra.mxu0 0.0
    %1043 = vmatprep.subr.mxu0 0.0
    %1044 = vmatpush2.xpose.msra.mxu0 0.0
    %1045 = vmatprep.subr.mxu0 0.0
    %1046 = vmatpush2.xpose.msra.mxu0 0.0
    %1047 = vmatprep.subr.mxu0 0.0
    %1048 = vmatpush2.xpose.msra.mxu0 0.0
    %1049 = vmatprep.subr.mxu0 0.0
    %1050 = vmatpush2.xpose.msra.mxu0 0.0
    %1051 = vmatprep.mubr.f32.mxu0 0.0
    %1052 = vmatmul.mubr.f32.gmra.mxu0 %v983
    %v1053 = vpop.f32.mrf.mxu0
    %v1054 = vadd.f32 0.0, %v1053
    %v1055 = vpop.f32.mrf.mxu0
    %1056 = vdwg.mxu0
    %v1057 = vmul.f32 %v976, 0.5
    %v1058 = vmul.f32 %v1054, 0.5
    %v1059 = vsel %vm376, -1e+10, %v1057
    %v1060 = vsel %vm377, -1e+10, %v1058
    %v1061 = vsel %vm380, %v1059, -inf
    %1062 = vmax.xlane.f32.xlu0 %v1061
    %v1063 = vpop.xlane.xlu0 %1062
    %v1064 = vsel %vm380, %v1060, -inf
    %1065 = vmax.xlane.f32.xlu0 %v1064
    %v1066 = vpop.xlane.xlu0 %1065
    %v1067 = vsub.f32 %v1059, %v1063
    %v1068 = vsub.f32 %v1060, %v1066
    %v1069 = vmul.f32 %v1067, 1.442695
    %v1070 = vpow.pop %v1069
    %v1071 = vmul.f32 %v1068, 1.442695
    %v1072 = vpow.pop %v1071
    %v1073 = vsel %vm380, %v1070, 0.0
    %1074 = vadd.xlane.f32.xlu0 %v1073
    %v1075 = vpop.xlane.xlu0 %1074
    %v1076 = vsel %vm380, %v1072, 0.0
    %1077 = vadd.xlane.f32.xlu0 %v1076
    %v1078 = vpop.xlane.xlu0 %1077
    %v1079 = vrcp.pop %v1075
    %v1080 = vrcp.pop %v1078
    %v1081 = vmul.f32 %v1075, %v1079
    %v1082 = vmul.f32 %v1078, %v1080
    %v1083 = vsub.f32 2.0, %v1081
    %v1084 = vsub.f32 2.0, %v1082
    %v1085 = vmul.f32 %v1079, %v1083
    %v1086 = vmul.f32 %v1080, %v1084
    %v1087 = vmul.f32 %v1070, %v1085
    %v1088 = vmul.f32 %v1072, %v1086
    %1089 = vrot.lane.b32.xlu0 %v211, 88
    %v1090 = vpop.permute.xlu0 %1089
    %v1093 = vsel %vm380, %v1087, 0
    %1095 = vmatprep.subr.mxu0 0.0
    %1096 = vmatpush1.msra.mxu0 0.0
    %1097 = vmatprep.subr.mxu0 0.0
    %1098 = vmatpush1.msra.mxu0 0.0
    %1099 = vmatprep.subr.mxu0 0.0
    %1100 = vmatpush1.msra.mxu0 0.0
    %1101 = vmatprep.subr.mxu0 0.0
    %1102 = vmatpush1.msra.mxu0 0.0
    %1103 = vmatprep.subr.mxu0 0.0
    %1104 = vmatpush1.msra.mxu0 0.0
    %1105 = vmatprep.subr.mxu0 0.0
    %1106 = vmatpush1.msra.mxu0 0.0
    %1107 = vmatprep.subr.mxu0 0.0
    %1108 = vmatpush1.msra.mxu0 0.0
    %1109 = vmatprep.subr.mxu0 0.0
    %1110 = vmatpush1.msra.mxu0 0.0
    %1111 = vmatprep.subr.mxu0 0.0
    %1112 = vmatpush1.msra.mxu0 0.0
    %1113 = vmatprep.subr.mxu0 0.0
    %1114 = vmatpush1.msra.mxu0 0.0
    %1115 = vmatprep.subr.mxu0 0.0
    %1116 = vmatpush1.msra.mxu0 0.0
    %1117 = vmatprep.subr.mxu0 0.0
    %1118 = vmatpush1.msra.mxu0 0.0
    %1119 = vmatprep.subr.mxu0 0.0
    %1120 = vmatpush1.msra.mxu0 0.0
    %1121 = vmatprep.subr.mxu0 0.0
    %1122 = vmatpush1.msra.mxu0 0.0
    %1123 = vmatprep.subr.mxu0 0.0
    %1124 = vmatpush1.msra.mxu0 0.0
    %1125 = vmatprep.subr.mxu0 0.0
    %1126 = vmatpush1.msra.mxu0 %v1090
    %1127 = vmatprep.subr.mxu0 0.0
    %1128 = vmatpush2.msra.mxu0 0.0
    %1129 = vmatprep.subr.mxu0 0.0
    %1130 = vmatpush2.msra.mxu0 0.0
    %1131 = vmatprep.subr.mxu0 0.0
    %1132 = vmatpush2.msra.mxu0 0.0
    %1133 = vmatprep.subr.mxu0 0.0
    %1134 = vmatpush2.msra.mxu0 0.0
    %1135 = vmatprep.subr.mxu0 0.0
    %1136 = vmatpush2.msra.mxu0 0.0
    %1137 = vmatprep.subr.mxu0 0.0
    %1138 = vmatpush2.msra.mxu0 0.0
    %1139 = vmatprep.subr.mxu0 0.0
    %1140 = vmatpush2.msra.mxu0 0.0
    %1141 = vmatprep.subr.mxu0 0.0
    %1142 = vmatpush2.msra.mxu0 0.0
    %1143 = vmatprep.subr.mxu0 0.0
    %1144 = vmatpush2.msra.mxu0 0.0
    %1145 = vmatprep.subr.mxu0 0.0
    %1146 = vmatpush2.msra.mxu0 0.0
    %1147 = vmatprep.subr.mxu0 0.0
    %1148 = vmatpush2.msra.mxu0 0.0
    %1149 = vmatprep.subr.mxu0 0.0
    %1150 = vmatpush2.msra.mxu0 0.0
    %1151 = vmatprep.subr.mxu0 0.0
    %1152 = vmatpush2.msra.mxu0 0.0
    %1153 = vmatprep.subr.mxu0 0.0
    %1154 = vmatpush2.msra.mxu0 0.0
    %1155 = vmatprep.subr.mxu0 0.0
    %1156 = vmatpush2.msra.mxu0 0.0
    %1157 = vmatprep.subr.mxu0 0.0
    %1158 = vmatpush2.msra.mxu0 0.0
    %1159 = vmatprep.mubr.f32.mxu0 0.0
    %1160 = vmatmul.mubr.f32.gmra.mxu0 %v1093
    %v1161 = vpop.f32.mrf.mxu0
    %v1162 = vadd.f32 0.0, %v1161
    %v1163 = vpop.f32.mrf.mxu0
    %1164 = vdwg.mxu0
    %1165 = vrot.lane.b32.xlu0 %v216, 88
    %v1166 = vpop.permute.xlu0 %1165
    %v1169 = vsel %vm380, %v1088, 0
    %1171 = vmatprep.subr.mxu0 0.0
    %1172 = vmatpush1.msra.mxu0 0.0
    %1173 = vmatprep.subr.mxu0 0.0
    %1174 = vmatpush1.msra.mxu0 0.0
    %1175 = vmatprep.subr.mxu0 0.0
    %1176 = vmatpush1.msra.mxu0 0.0
    %1177 = vmatprep.subr.mxu0 0.0
    %1178 = vmatpush1.msra.mxu0 0.0
    %1179 = vmatprep.subr.mxu0 0.0
    %1180 = vmatpush1.msra.mxu0 0.0
    %1181 = vmatprep.subr.mxu0 0.0
    %1182 = vmatpush1.msra.mxu0 0.0
    %1183 = vmatprep.subr.mxu0 0.0
    %1184 = vmatpush1.msra.mxu0 0.0
    %1185 = vmatprep.subr.mxu0 0.0
    %1186 = vmatpush1.msra.mxu0 0.0
    %1187 = vmatprep.subr.mxu0 0.0
    %1188 = vmatpush1.msra.mxu0 0.0
    %1189 = vmatprep.subr.mxu0 0.0
    %1190 = vmatpush1.msra.mxu0 0.0
    %1191 = vmatprep.subr.mxu0 0.0
    %1192 = vmatpush1.msra.mxu0 0.0
    %1193 = vmatprep.subr.mxu0 0.0
    %1194 = vmatpush1.msra.mxu0 0.0
    %1195 = vmatprep.subr.mxu0 0.0
    %1196 = vmatpush1.msra.mxu0 0.0
    %1197 = vmatprep.subr.mxu0 0.0
    %1198 = vmatpush1.msra.mxu0 0.0
    %1199 = vmatprep.subr.mxu0 0.0
    %1200 = vmatpush1.msra.mxu0 0.0
    %1201 = vmatprep.subr.mxu0 0.0
    %1202 = vmatpush1.msra.mxu0 %v1166
    %1203 = vmatprep.subr.mxu0 0.0
    %1204 = vmatpush2.msra.mxu0 0.0
    %1205 = vmatprep.subr.mxu0 0.0
    %1206 = vmatpush2.msra.mxu0 0.0
    %1207 = vmatprep.subr.mxu0 0.0
    %1208 = vmatpush2.msra.mxu0 0.0
    %1209 = vmatprep.subr.mxu0 0.0
    %1210 = vmatpush2.msra.mxu0 0.0
    %1211 = vmatprep.subr.mxu0 0.0
    %1212 = vmatpush2.msra.mxu0 0.0
    %1213 = vmatprep.subr.mxu0 0.0
    %1214 = vmatpush2.msra.mxu0 0.0
    %1215 = vmatprep.subr.mxu0 0.0
    %1216 = vmatpush2.msra.mxu0 0.0
    %1217 = vmatprep.subr.mxu0 0.0
    %1218 = vmatpush2.msra.mxu0 0.0
    %1219 = vmatprep.subr.mxu0 0.0
    %1220 = vmatpush2.msra.mxu0 0.0
    %1221 = vmatprep.subr.mxu0 0.0
    %1222 = vmatpush2.msra.mxu0 0.0
    %1223 = vmatprep.subr.mxu0 0.0
    %1224 = vmatpush2.msra.mxu0 0.0
    %1225 = vmatprep.subr.mxu0 0.0
    %1226 = vmatpush2.msra.mxu0 0.0
    %1227 = vmatprep.subr.mxu0 0.0
    %1228 = vmatpush2.msra.mxu0 0.0
    %1229 = vmatprep.subr.mxu0 0.0
    %1230 = vmatpush2.msra.mxu0 0.0
    %1231 = vmatprep.subr.mxu0 0.0
    %1232 = vmatpush2.msra.mxu0 0.0
    %1233 = vmatprep.subr.mxu0 0.0
    %1234 = vmatpush2.msra.mxu0 0.0
    %1235 = vmatprep.mubr.f32.mxu0 0.0
    %1236 = vmatmul.mubr.f32.gmra.mxu0 %v1169
    %v1237 = vpop.f32.mrf.mxu0
    %v1238 = vadd.f32 0.0, %v1237
    %v1239 = vpop.f32.mrf.mxu0
    %1240 = vdwg.mxu0
    %1241 = vrot.lane.b32.xlu0 %v211, 116
    %v1242 = vpop.permute.xlu0 %1241
    %1243 = vrot.lane.b32.xlu0 %v211, 100
    %v1244 = vpop.permute.xlu0 %1243
    %v1245 = vsel %vm222, %v1242, 0
    %v1247 = vsel %vm222, %v1244, 0
    %1249 = vmatprep.subr.mxu0 0.0
    %1250 = vmatpush1.xpose.msra.mxu0 0.0
    %1251 = vmatprep.subr.mxu0 0.0
    %1252 = vmatpush1.xpose.msra.mxu0 0.0
    %1253 = vmatprep.subr.mxu0 0.0
    %1254 = vmatpush1.xpose.msra.mxu0 0.0
    %1255 = vmatprep.subr.mxu0 0.0
    %1256 = vmatpush1.xpose.msra.mxu0 0.0
    %1257 = vmatprep.subr.mxu0 0.0
    %1258 = vmatpush1.xpose.msra.mxu0 0.0
    %1259 = vmatprep.subr.mxu0 0.0
    %1260 = vmatpush1.xpose.msra.mxu0 0.0
    %1261 = vmatprep.subr.mxu0 0.0
    %1262 = vmatpush1.xpose.msra.mxu0 0.0
    %1263 = vmatprep.subr.mxu0 0.0
    %1264 = vmatpush1.xpose.msra.mxu0 0.0
    %1265 = vmatprep.subr.mxu0 0.0
    %1266 = vmatpush1.xpose.msra.mxu0 0.0
    %1267 = vmatprep.subr.mxu0 0.0
    %1268 = vmatpush1.xpose.msra.mxu0 0.0
    %1269 = vmatprep.subr.mxu0 0.0
    %1270 = vmatpush1.xpose.msra.mxu0 0.0
    %1271 = vmatprep.subr.mxu0 0.0
    %1272 = vmatpush1.xpose.msra.mxu0 0.0
    %1273 = vmatprep.subr.mxu0 0.0
    %1274 = vmatpush1.xpose.msra.mxu0 0.0
    %1275 = vmatprep.subr.mxu0 0.0
    %1276 = vmatpush1.xpose.msra.mxu0 0.0
    %1277 = vmatprep.subr.mxu0 0.0
    %1278 = vmatpush1.xpose.msra.mxu0 0.0
    %1279 = vmatprep.subr.mxu0 0.0
    %1280 = vmatpush1.xpose.msra.mxu0 %v1247
    %1281 = vmatprep.subr.mxu0 0.0
    %1282 = vmatpush2.xpose.msra.mxu0 0.0
    %1283 = vmatprep.subr.mxu0 0.0
    %1284 = vmatpush2.xpose.msra.mxu0 0.0
    %1285 = vmatprep.subr.mxu0 0.0
    %1286 = vmatpush2.xpose.msra.mxu0 0.0
    %1287 = vmatprep.subr.mxu0 0.0
    %1288 = vmatpush2.xpose.msra.mxu0 0.0
    %1289 = vmatprep.subr.mxu0 0.0
    %1290 = vmatpush2.xpose.msra.mxu0 0.0
    %1291 = vmatprep.subr.mxu0 0.0
    %1292 = vmatpush2.xpose.msra.mxu0 0.0
    %1293 = vmatprep.subr.mxu0 0.0
    %1294 = vmatpush2.xpose.msra.mxu0 0.0
    %1295 = vmatprep.subr.mxu0 0.0
    %1296 = vmatpush2.xpose.msra.mxu0 0.0
    %1297 = vmatprep.subr.mxu0 0.0
    %1298 = vmatpush2.xpose.msra.mxu0 0.0
    %1299 = vmatprep.subr.mxu0 0.0
    %1300 = vmatpush2.xpose.msra.mxu0 0.0
    %1301 = vmatprep.subr.mxu0 0.0
    %1302 = vmatpush2.xpose.msra.mxu0 0.0
    %1303 = vmatprep.subr.mxu0 0.0
    %1304 = vmatpush2.xpose.msra.mxu0 0.0
    %1305 = vmatprep.subr.mxu0 0.0
    %1306 = vmatpush2.xpose.msra.mxu0 0.0
    %1307 = vmatprep.subr.mxu0 0.0
    %1308 = vmatpush2.xpose.msra.mxu0 0.0
    %1309 = vmatprep.subr.mxu0 0.0
    %1310 = vmatpush2.xpose.msra.mxu0 0.0
    %1311 = vmatprep.subr.mxu0 0.0
    %1312 = vmatpush2.xpose.msra.mxu0 0.0
    %1313 = vmatprep.mubr.f32.mxu0 0.0
    %1314 = vmatmul.mubr.f32.gmra.mxu0 %v1245
    %v1315 = vpop.f32.mrf.mxu0
    %v1316 = vadd.f32 0.0, %v1315
    %v1317 = vpop.f32.mrf.mxu0
    %1318 = vdwg.mxu0
    %1319 = vrot.lane.b32.xlu0 %v216, 116
    %v1320 = vpop.permute.xlu0 %1319
    %1321 = vrot.lane.b32.xlu0 %v216, 100
    %v1322 = vpop.permute.xlu0 %1321
    %v1323 = vsel %vm222, %v1320, 0
    %v1325 = vsel %vm222, %v1322, 0
    %1327 = vmatprep.subr.mxu0 0.0
    %1328 = vmatpush1.xpose.msra.mxu0 0.0
    %1329 = vmatprep.subr.mxu0 0.0
    %1330 = vmatpush1.xpose.msra.mxu0 0.0
    %1331 = vmatprep.subr.mxu0 0.0
    %1332 = vmatpush1.xpose.msra.mxu0 0.0
    %1333 = vmatprep.subr.mxu0 0.0
    %1334 = vmatpush1.xpose.msra.mxu0 0.0
    %1335 = vmatprep.subr.mxu0 0.0
    %1336 = vmatpush1.xpose.msra.mxu0 0.0
    %1337 = vmatprep.subr.mxu0 0.0
    %1338 = vmatpush1.xpose.msra.mxu0 0.0
    %1339 = vmatprep.subr.mxu0 0.0
    %1340 = vmatpush1.xpose.msra.mxu0 0.0
    %1341 = vmatprep.subr.mxu0 0.0
    %1342 = vmatpush1.xpose.msra.mxu0 0.0
    %1343 = vmatprep.subr.mxu0 0.0
    %1344 = vmatpush1.xpose.msra.mxu0 0.0
    %1345 = vmatprep.subr.mxu0 0.0
    %1346 = vmatpush1.xpose.msra.mxu0 0.0
    %1347 = vmatprep.subr.mxu0 0.0
    %1348 = vmatpush1.xpose.msra.mxu0 0.0
    %1349 = vmatprep.subr.mxu0 0.0
    %1350 = vmatpush1.xpose.msra.mxu0 0.0
    %1351 = vmatprep.subr.mxu0 0.0
    %1352 = vmatpush1.xpose.msra.mxu0 0.0
    %1353 = vmatprep.subr.mxu0 0.0
    %1354 = vmatpush1.xpose.msra.mxu0 0.0
    %1355 = vmatprep.subr.mxu0 0.0
    %1356 = vmatpush1.xpose.msra.mxu0 0.0
    %1357 = vmatprep.subr.mxu0 0.0
    %1358 = vmatpush1.xpose.msra.mxu0 %v1325
    %1359 = vmatprep.subr.mxu0 0.0
    %1360 = vmatpush2.xpose.msra.mxu0 0.0
    %1361 = vmatprep.subr.mxu0 0.0
    %1362 = vmatpush2.xpose.msra.mxu0 0.0
    %1363 = vmatprep.subr.mxu0 0.0
    %1364 = vmatpush2.xpose.msra.mxu0 0.0
    %1365 = vmatprep.subr.mxu0 0.0
    %1366 = vmatpush2.xpose.msra.mxu0 0.0
    %1367 = vmatprep.subr.mxu0 0.0
    %1368 = vmatpush2.xpose.msra.mxu0 0.0
    %1369 = vmatprep.subr.mxu0 0.0
    %1370 = vmatpush2.xpose.msra.mxu0 0.0
    %1371 = vmatprep.subr.mxu0 0.0
    %1372 = vmatpush2.xpose.msra.mxu0 0.0
    %1373 = vmatprep.subr.mxu0 0.0
    %1374 = vmatpush2.xpose.msra.mxu0 0.0
    %1375 = vmatprep.subr.mxu0 0.0
    %1376 = vmatpush2.xpose.msra.mxu0 0.0
    %1377 = vmatprep.subr.mxu0 0.0
    %1378 = vmatpush2.xpose.msra.mxu0 0.0
    %1379 = vmatprep.subr.mxu0 0.0
    %1380 = vmatpush2.xpose.msra.mxu0 0.0
    %1381 = vmatprep.subr.mxu0 0.0
    %1382 = vmatpush2.xpose.msra.mxu0 0.0
    %1383 = vmatprep.subr.mxu0 0.0
    %1384 = vmatpush2.xpose.msra.mxu0 0.0
    %1385 = vmatprep.subr.mxu0 0.0
    %1386 = vmatpush2.xpose.msra.mxu0 0.0
    %1387 = vmatprep.subr.mxu0 0.0
    %1388 = vmatpush2.xpose.msra.mxu0 0.0
    %1389 = vmatprep.subr.mxu0 0.0
    %1390 = vmatpush2.xpose.msra.mxu0 0.0
    %1391 = vmatprep.mubr.f32.mxu0 0.0
    %1392 = vmatmul.mubr.f32.gmra.mxu0 %v1323
    %v1393 = vpop.f32.mrf.mxu0
    %v1394 = vadd.f32 0.0, %v1393
    %v1395 = vpop.f32.mrf.mxu0
    %1396 = vdwg.mxu0
    %v1397 = vmul.f32 %v1316, 0.5
    %v1398 = vmul.f32 %v1394, 0.5
    %v1399 = vsel %vm376, -1e+10, %v1397
    %v1400 = vsel %vm377, -1e+10, %v1398
    %v1401 = vsel %vm380, %v1399, -inf
    %1402 = vmax.xlane.f32.xlu0 %v1401
    %v1403 = vpop.xlane.xlu0 %1402
    %v1404 = vsel %vm380, %v1400, -inf
    %1405 = vmax.xlane.f32.xlu0 %v1404
    %v1406 = vpop.xlane.xlu0 %1405
    %v1407 = vsub.f32 %v1399, %v1403
    %v1408 = vsub.f32 %v1400, %v1406
    %v1409 = vmul.f32 %v1407, 1.442695
    %v1410 = vpow.pop %v1409
    %v1411 = vmul.f32 %v1408, 1.442695
    %v1412 = vpow.pop %v1411
    %v1413 = vsel %vm380, %v1410, 0.0
    %1414 = vadd.xlane.f32.xlu0 %v1413
    %v1415 = vpop.xlane.xlu0 %1414
    %v1416 = vsel %vm380, %v1412, 0.0
    %1417 = vadd.xlane.f32.xlu0 %v1416
    %v1418 = vpop.xlane.xlu0 %1417
    %v1419 = vrcp.pop %v1415
    %v1420 = vrcp.pop %v1418
    %v1421 = vmul.f32 %v1415, %v1419
    %v1422 = vmul.f32 %v1418, %v1420
    %v1423 = vsub.f32 2.0, %v1421
    %v1424 = vsub.f32 2.0, %v1422
    %v1425 = vmul.f32 %v1419, %v1423
    %v1426 = vmul.f32 %v1420, %v1424
    %v1427 = vmul.f32 %v1410, %v1425
    %v1428 = vmul.f32 %v1412, %v1426
    %1429 = vrot.lane.b32.xlu0 %v211, 84
    %v1430 = vpop.permute.xlu0 %1429
    %v1433 = vsel %vm380, %v1427, 0
    %1435 = vmatprep.subr.mxu0 0.0
    %1436 = vmatpush1.msra.mxu0 0.0
    %1437 = vmatprep.subr.mxu0 0.0
    %1438 = vmatpush1.msra.mxu0 0.0
    %1439 = vmatprep.subr.mxu0 0.0
    %1440 = vmatpush1.msra.mxu0 0.0
    %1441 = vmatprep.subr.mxu0 0.0
    %1442 = vmatpush1.msra.mxu0 0.0
    %1443 = vmatprep.subr.mxu0 0.0
    %1444 = vmatpush1.msra.mxu0 0.0
    %1445 = vmatprep.subr.mxu0 0.0
    %1446 = vmatpush1.msra.mxu0 0.0
    %1447 = vmatprep.subr.mxu0 0.0
    %1448 = vmatpush1.msra.mxu0 0.0
    %1449 = vmatprep.subr.mxu0 0.0
    %1450 = vmatpush1.msra.mxu0 0.0
    %1451 = vmatprep.subr.mxu0 0.0
    %1452 = vmatpush1.msra.mxu0 0.0
    %1453 = vmatprep.subr.mxu0 0.0
    %1454 = vmatpush1.msra.mxu0 0.0
    %1455 = vmatprep.subr.mxu0 0.0
    %1456 = vmatpush1.msra.mxu0 0.0
    %1457 = vmatprep.subr.mxu0 0.0
    %1458 = vmatpush1.msra.mxu0 0.0
    %1459 = vmatprep.subr.mxu0 0.0
    %1460 = vmatpush1.msra.mxu0 0.0
    %1461 = vmatprep.subr.mxu0 0.0
    %1462 = vmatpush1.msra.mxu0 0.0
    %1463 = vmatprep.subr.mxu0 0.0
    %1464 = vmatpush1.msra.mxu0 0.0
    %1465 = vmatprep.subr.mxu0 0.0
    %1466 = vmatpush1.msra.mxu0 %v1430
    %1467 = vmatprep.subr.mxu0 0.0
    %1468 = vmatpush2.msra.mxu0 0.0
    %1469 = vmatprep.subr.mxu0 0.0
    %1470 = vmatpush2.msra.mxu0 0.0
    %1471 = vmatprep.subr.mxu0 0.0
    %1472 = vmatpush2.msra.mxu0 0.0
    %1473 = vmatprep.subr.mxu0 0.0
    %1474 = vmatpush2.msra.mxu0 0.0
    %1475 = vmatprep.subr.mxu0 0.0
    %1476 = vmatpush2.msra.mxu0 0.0
    %1477 = vmatprep.subr.mxu0 0.0
    %1478 = vmatpush2.msra.mxu0 0.0
    %1479 = vmatprep.subr.mxu0 0.0
    %1480 = vmatpush2.msra.mxu0 0.0
    %1481 = vmatprep.subr.mxu0 0.0
    %1482 = vmatpush2.msra.mxu0 0.0
    %1483 = vmatprep.subr.mxu0 0.0
    %1484 = vmatpush2.msra.mxu0 0.0
    %1485 = vmatprep.subr.mxu0 0.0
    %1486 = vmatpush2.msra.mxu0 0.0
    %1487 = vmatprep.subr.mxu0 0.0
    %1488 = vmatpush2.msra.mxu0 0.0
    %1489 = vmatprep.subr.mxu0 0.0
    %1490 = vmatpush2.msra.mxu0 0.0
    %1491 = vmatprep.subr.mxu0 0.0
    %1492 = vmatpush2.msra.mxu0 0.0
    %1493 = vmatprep.subr.mxu0 0.0
    %1494 = vmatpush2.msra.mxu0 0.0
    %1495 = vmatprep.subr.mxu0 0.0
    %1496 = vmatpush2.msra.mxu0 0.0
    %1497 = vmatprep.subr.mxu0 0.0
    %1498 = vmatpush2.msra.mxu0 0.0
    %1499 = vmatprep.mubr.f32.mxu0 0.0
    %1500 = vmatmul.mubr.f32.gmra.mxu0 %v1433
    %v1501 = vpop.f32.mrf.mxu0
    %v1502 = vadd.f32 0.0, %v1501
    %v1503 = vpop.f32.mrf.mxu0
    %1504 = vdwg.mxu0
    %1505 = vrot.lane.b32.xlu0 %v216, 84
    %v1506 = vpop.permute.xlu0 %1505
    %v1509 = vsel %vm380, %v1428, 0
    %1511 = vmatprep.subr.mxu0 0.0
    %1512 = vmatpush1.msra.mxu0 0.0
    %1513 = vmatprep.subr.mxu0 0.0
    %1514 = vmatpush1.msra.mxu0 0.0
    %1515 = vmatprep.subr.mxu0 0.0
    %1516 = vmatpush1.msra.mxu0 0.0
    %1517 = vmatprep.subr.mxu0 0.0
    %1518 = vmatpush1.msra.mxu0 0.0
    %1519 = vmatprep.subr.mxu0 0.0
    %1520 = vmatpush1.msra.mxu0 0.0
    %1521 = vmatprep.subr.mxu0 0.0
    %1522 = vmatpush1.msra.mxu0 0.0
    %1523 = vmatprep.subr.mxu0 0.0
    %1524 = vmatpush1.msra.mxu0 0.0
    %1525 = vmatprep.subr.mxu0 0.0
    %1526 = vmatpush1.msra.mxu0 0.0
    %1527 = vmatprep.subr.mxu0 0.0
    %1528 = vmatpush1.msra.mxu0 0.0
    %1529 = vmatprep.subr.mxu0 0.0
    %1530 = vmatpush1.msra.mxu0 0.0
    %1531 = vmatprep.subr.mxu0 0.0
    %1532 = vmatpush1.msra.mxu0 0.0
    %1533 = vmatprep.subr.mxu0 0.0
    %1534 = vmatpush1.msra.mxu0 0.0
    %1535 = vmatprep.subr.mxu0 0.0
    %1536 = vmatpush1.msra.mxu0 0.0
    %1537 = vmatprep.subr.mxu0 0.0
    %1538 = vmatpush1.msra.mxu0 0.0
    %1539 = vmatprep.subr.mxu0 0.0
    %1540 = vmatpush1.msra.mxu0 0.0
    %1541 = vmatprep.subr.mxu0 0.0
    %1542 = vmatpush1.msra.mxu0 %v1506
    %1543 = vmatprep.subr.mxu0 0.0
    %1544 = vmatpush2.msra.mxu0 0.0
    %1545 = vmatprep.subr.mxu0 0.0
    %1546 = vmatpush2.msra.mxu0 0.0
    %1547 = vmatprep.subr.mxu0 0.0
    %1548 = vmatpush2.msra.mxu0 0.0
    %1549 = vmatprep.subr.mxu0 0.0
    %1550 = vmatpush2.msra.mxu0 0.0
    %1551 = vmatprep.subr.mxu0 0.0
    %1552 = vmatpush2.msra.mxu0 0.0
    %1553 = vmatprep.subr.mxu0 0.0
    %1554 = vmatpush2.msra.mxu0 0.0
    %1555 = vmatprep.subr.mxu0 0.0
    %1556 = vmatpush2.msra.mxu0 0.0
    %1557 = vmatprep.subr.mxu0 0.0
    %1558 = vmatpush2.msra.mxu0 0.0
    %1559 = vmatprep.subr.mxu0 0.0
    %1560 = vmatpush2.msra.mxu0 0.0
    %1561 = vmatprep.subr.mxu0 0.0
    %1562 = vmatpush2.msra.mxu0 0.0
    %1563 = vmatprep.subr.mxu0 0.0
    %1564 = vmatpush2.msra.mxu0 0.0
    %1565 = vmatprep.subr.mxu0 0.0
    %1566 = vmatpush2.msra.mxu0 0.0
    %1567 = vmatprep.subr.mxu0 0.0
    %1568 = vmatpush2.msra.mxu0 0.0
    %1569 = vmatprep.subr.mxu0 0.0
    %1570 = vmatpush2.msra.mxu0 0.0
    %1571 = vmatprep.subr.mxu0 0.0
    %1572 = vmatpush2.msra.mxu0 0.0
    %1573 = vmatprep.subr.mxu0 0.0
    %1574 = vmatpush2.msra.mxu0 0.0
    %1575 = vmatprep.mubr.f32.mxu0 0.0
    %1576 = vmatmul.mubr.f32.gmra.mxu0 %v1509
    %v1577 = vpop.f32.mrf.mxu0
    %v1578 = vadd.f32 0.0, %v1577
    %v1579 = vpop.f32.mrf.mxu0
    %1580 = vdwg.mxu0
    %1583 = vrot.lane.b32.xlu0 %v822, 4
    %v1584 = vpop.permute.xlu0 %1583
    %1585 = vrot.lane.b32.xlu0 %v898, 4
    %v1586 = vpop.permute.xlu0 %1585
    %1591 = vrot.lane.b32.xlu0 %v1162, 8
    %v1592 = vpop.permute.xlu0 %1591
    %1593 = vrot.lane.b32.xlu0 %v1238, 8
    %v1594 = vpop.permute.xlu0 %1593
    %1599 = vrot.lane.b32.xlu0 %v1502, 12
    %v1600 = vpop.permute.xlu0 %1599
    %1601 = vrot.lane.b32.xlu0 %v1578, 12
    %v1602 = vpop.permute.xlu0 %1601
    %v1605 = vsel %vm222, %v482, %v1584
    %v1606 = vsel %vm222, %v558, %v1586
    %v1607 = vsel %vm380, %v1605, %v1592
    %v1608 = vsel %vm380, %v1606, %v1594
    %vm1609 = vcmask 97280
    %v1610 = vsel %vm1609, %v1607, %v1600
    %v1611 = vsel %vm1609, %v1608, %v1602
    %v1613 = vlaneseq
    %v1614 = vshrl.u32 %v1613, 7
    %v1615 = vsub.s32 0, %v1614
    %v1616 = vrot.slane %v78, %v1615
    %v1619 = vsel %vm137, %v1610, 0
    %v1622 = vsel %vm137, %v1611, 0
    %1624 = vmatprep.subr.mxu0 0.0
    %1625 = vmatpush1.msra.mxu0 0.0
    %1626 = vmatprep.subr.mxu0 0.0
    %1627 = vmatpush1.msra.mxu0 0.0
    %1628 = vmatprep.subr.mxu0 0.0
    %1629 = vmatpush1.msra.mxu0 0.0
    %1630 = vmatprep.subr.mxu0 0.0
    %1631 = vmatpush1.msra.mxu0 0.0
    %1632 = vmatprep.subr.mxu0 0.0
    %1633 = vmatpush1.msra.mxu0 0.0
    %1634 = vmatprep.subr.mxu0 0.0
    %1635 = vmatpush1.msra.mxu0 0.0
    %1636 = vmatprep.subr.mxu0 0.0
    %1637 = vmatpush1.msra.mxu0 0.0
    %1638 = vmatprep.subr.mxu0 0.0
    %1639 = vmatpush1.msra.mxu0 0.0
    %1640 = vmatprep.subr.mxu0 0.0
    %1641 = vmatpush1.msra.mxu0 0.0
    %1642 = vmatprep.subr.mxu0 0.0
    %1643 = vmatpush1.msra.mxu0 0.0
    %1644 = vmatprep.subr.mxu0 0.0
    %1645 = vmatpush1.msra.mxu0 0.0
    %1646 = vmatprep.subr.mxu0 0.0
    %1647 = vmatpush1.msra.mxu0 0.0
    %1648 = vmatprep.subr.mxu0 0.0
    %1649 = vmatpush1.msra.mxu0 0.0
    %1650 = vmatprep.subr.mxu0 0.0
    %1651 = vmatpush1.msra.mxu0 0.0
    %1652 = vmatprep.subr.mxu0 0.0
    %1653 = vmatpush1.msra.mxu0 %v77
    %1654 = vmatprep.subr.mxu0 0.0
    %1655 = vmatpush1.msra.mxu0 %v76
    %1656 = vmatprep.subr.mxu0 0.0
    %1657 = vmatpush2.msra.mxu0 0.0
    %1658 = vmatprep.subr.mxu0 0.0
    %1659 = vmatpush2.msra.mxu0 0.0
    %1660 = vmatprep.subr.mxu0 0.0
    %1661 = vmatpush2.msra.mxu0 0.0
    %1662 = vmatprep.subr.mxu0 0.0
    %1663 = vmatpush2.msra.mxu0 0.0
    %1664 = vmatprep.subr.mxu0 0.0
    %1665 = vmatpush2.msra.mxu0 0.0
    %1666 = vmatprep.subr.mxu0 0.0
    %1667 = vmatpush2.msra.mxu0 0.0
    %1668 = vmatprep.subr.mxu0 0.0
    %1669 = vmatpush2.msra.mxu0 0.0
    %1670 = vmatprep.subr.mxu0 0.0
    %1671 = vmatpush2.msra.mxu0 0.0
    %1672 = vmatprep.subr.mxu0 0.0
    %1673 = vmatpush2.msra.mxu0 0.0
    %1674 = vmatprep.subr.mxu0 0.0
    %1675 = vmatpush2.msra.mxu0 0.0
    %1676 = vmatprep.subr.mxu0 0.0
    %1677 = vmatpush2.msra.mxu0 0.0
    %1678 = vmatprep.subr.mxu0 0.0
    %1679 = vmatpush2.msra.mxu0 0.0
    %1680 = vmatprep.subr.mxu0 0.0
    %1681 = vmatpush2.msra.mxu0 0.0
    %1682 = vmatprep.subr.mxu0 0.0
    %1683 = vmatpush2.msra.mxu0 0.0
    %1684 = vmatprep.subr.mxu0 0.0
    %1685 = vmatpush2.msra.mxu0 0.0
    %1686 = vmatprep.subr.mxu0 0.0
    %1687 = vmatpush2.msra.mxu0 0.0
    %1688 = vmatprep.mubr.f32.mxu0 0.0
    %1689 = vmatmul.mubr.f32.gmra.mxu0 %v1619
    %v1690 = vpop.f32.mrf.mxu0
    %v1691 = vadd.f32 %v1616, %v1690
    %v1692 = vpop.f32.mrf.mxu0
    %1693 = vmatprep.mubr.f32.mxu0 0.0
    %1694 = vmatmul.mubr.f32.gmra.mxu0 %v1622
    %v1695 = vpop.f32.mrf.mxu0
    %v1696 = vadd.f32 %v1616, %v1695
    %v1697 = vpop.f32.mrf.mxu0
    %1698 = vdwg.mxu0
    %v1699 = vadd.f32 %v63, %v1691
    %v1700 = vadd.f32 %v64, %v1696
    %v1701 = vld [vmem:[%s8] sm:$0x1]
    %v1702 = vld [vmem:[%s9] sm:$0x1]
    %v1703 = vsel %vm137, %v1699, 0.0
    %1704 = vadd.xlane.f32.xlu0 %v1703
    %v1705 = vpop.xlane.xlu0 %1704
    %v1706 = vsel %vm137, %v1700, 0.0
    %1707 = vadd.xlane.f32.xlu0 %v1706
    %v1708 = vpop.xlane.xlu0 %1707
    %v1709 = vrcp.pop 16.0
    %v1710 = vmul.f32 %v1705, %v1709
    %v1711 = vmul.f32 %v1708, %v1709
    %v1712 = vsub.f32 %v1699, %v1710
    %v1713 = vsub.f32 %v1700, %v1711
    %v1714 = vmul.f32 %v1712, %v1712
    %v1715 = vmul.f32 %v1713, %v1713
    %v1716 = vsel %vm137, %v1714, 0.0
    %1717 = vadd.xlane.f32.xlu0 %v1716
    %v1718 = vpop.xlane.xlu0 %1717
    %v1719 = vsel %vm137, %v1715, 0.0
    %1720 = vadd.xlane.f32.xlu0 %v1719
    %v1721 = vpop.xlane.xlu0 %1720
    %v1722 = vmul.f32 %v1718, %v1709
    %v1723 = vmul.f32 %v1721, %v1709
    %v1724 = vadd.f32 %v1722, 1e-05
    %v1725 = vadd.f32 %v1723, 1e-05
    %v1726 = vrsqrt.pop %v1724
    %v1727 = vrsqrt.pop %v1725
    %v1728 = vmul.f32 %v1712, %v1726
    %v1729 = vmul.f32 %v1713, %v1727
    %v1731 = vlaneseq
    %v1732 = vshrl.u32 %v1731, 7
    %v1733 = vsub.s32 0, %v1732
    %v1734 = vrot.slane %v1701, %v1733
    %v1736 = vmul.f32 %v1728, %v1734
    %v1737 = vmul.f32 %v1729, %v1734
    %v1739 = vlaneseq
    %v1740 = vshrl.u32 %v1739, 7
    %v1741 = vsub.s32 0, %v1740
    %v1742 = vrot.slane %v1702, %v1741
    %v1744 = vadd.f32 %v1736, %v1742
    %v1745 = vadd.f32 %v1737, %v1742
    %v1747 = vsel %vm137, %v1744, 0
    %v1750 = vsel %vm137, %v1745, 0
    %1752 = vmatprep.subr.mxu0 0.0
    %1753 = vmatpush1.msra.mxu0 0.0
    %1754 = vmatprep.subr.mxu0 0.0
    %1755 = vmatpush1.msra.mxu0 0.0
    %1756 = vmatprep.subr.mxu0 0.0
    %1757 = vmatpush1.msra.mxu0 0.0
    %1758 = vmatprep.subr.mxu0 0.0
    %1759 = vmatpush1.msra.mxu0 0.0
    %1760 = vmatprep.subr.mxu0 0.0
    %1761 = vmatpush1.msra.mxu0 0.0
    %1762 = vmatprep.subr.mxu0 0.0
    %1763 = vmatpush1.msra.mxu0 0.0
    %1764 = vmatprep.subr.mxu0 0.0
    %1765 = vmatpush1.msra.mxu0 0.0
    %1766 = vmatprep.subr.mxu0 0.0
    %1767 = vmatpush1.msra.mxu0 0.0
    %1768 = vmatprep.subr.mxu0 0.0
    %1769 = vmatpush1.msra.mxu0 0.0
    %1770 = vmatprep.subr.mxu0 0.0
    %1771 = vmatpush1.msra.mxu0 0.0
    %1772 = vmatprep.subr.mxu0 0.0
    %1773 = vmatpush1.msra.mxu0 0.0
    %1774 = vmatprep.subr.mxu0 0.0
    %1775 = vmatpush1.msra.mxu0 0.0
    %1776 = vmatprep.subr.mxu0 0.0
    %1777 = vmatpush1.msra.mxu0 0.0
    %1778 = vmatprep.subr.mxu0 0.0
    %1779 = vmatpush1.msra.mxu0 0.0
    %1780 = vmatprep.subr.mxu0 0.0
    %1781 = vmatpush1.msra.mxu0 %v74
    %1782 = vmatprep.subr.mxu0 0.0
    %1783 = vmatpush1.msra.mxu0 %v73
    %1784 = vmatprep.subr.mxu0 0.0
    %1785 = vmatpush2.msra.mxu0 0.0
    %1786 = vmatprep.subr.mxu0 0.0
    %1787 = vmatpush2.msra.mxu0 0.0
    %1788 = vmatprep.subr.mxu0 0.0
    %1789 = vmatpush2.msra.mxu0 0.0
    %1790 = vmatprep.subr.mxu0 0.0
    %1791 = vmatpush2.msra.mxu0 0.0
    %1792 = vmatprep.subr.mxu0 0.0
    %1793 = vmatpush2.msra.mxu0 0.0
    %1794 = vmatprep.subr.mxu0 0.0
    %1795 = vmatpush2.msra.mxu0 0.0
    %1796 = vmatprep.subr.mxu0 0.0
    %1797 = vmatpush2.msra.mxu0 0.0
    %1798 = vmatprep.subr.mxu0 0.0
    %1799 = vmatpush2.msra.mxu0 0.0
    %1800 = vmatprep.subr.mxu0 0.0
    %1801 = vmatpush2.msra.mxu0 0.0
    %1802 = vmatprep.subr.mxu0 0.0
    %1803 = vmatpush2.msra.mxu0 0.0
    %1804 = vmatprep.subr.mxu0 0.0
    %1805 = vmatpush2.msra.mxu0 0.0
    %1806 = vmatprep.subr.mxu0 0.0
    %1807 = vmatpush2.msra.mxu0 0.0
    %1808 = vmatprep.subr.mxu0 0.0
    %1809 = vmatpush2.msra.mxu0 0.0
    %1810 = vmatprep.subr.mxu0 0.0
    %1811 = vmatpush2.msra.mxu0 0.0
    %1812 = vmatprep.subr.mxu0 0.0
    %1813 = vmatpush2.msra.mxu0 0.0
    %1814 = vmatprep.subr.mxu0 0.0
    %1815 = vmatpush2.msra.mxu0 0.0
    %1816 = vmatprep.mubr.f32.mxu0 0.0
    %1817 = vmatmul.mubr.f32.gmra.mxu0 %v1747
    %v1818 = vpop.f32.mrf.mxu0
    %v1819 = vadd.f32 %v135, %v1818
    %v1820 = vpop.f32.mrf.mxu0
    %1821 = vmatprep.mubr.f32.mxu0 0.0
    %1822 = vmatmul.mubr.f32.gmra.mxu0 %v1750
    %v1823 = vpop.f32.mrf.mxu0
    %v1824 = vadd.f32 %v135, %v1823
    %v1825 = vpop.f32.mrf.mxu0
    %1826 = vdwg.mxu0
    %v1827 = vcombine.low %v90, %v98
    %v1828 = vcombine.low %v97, %v99
    %v1830 = vunpack.c.l.s4 1983009808
    %v1831 = vunpack.c.0.s8 %v1830
    %v1832 = vlaneseq
    %v1833 = vshrl.u32 %v1832, 7
    %v1834 = vsub.s32 %v1831, %v1833
    %v1835 = vrot.slane %v1827, %v1834
    %v1837 = vunpack.c.l.s4 1983009808
    %v1838 = vunpack.c.0.s8 %v1837
    %v1839 = vlaneseq
    %v1840 = vshrl.u32 %v1839, 7
    %v1841 = vsub.s32 %v1838, %v1840
    %v1842 = vrot.slane %v1828, %v1841
    %v1843 = vcombine.low %v1835, %v1842
    %v1844 = vcombine.low %v106, %v114
    %v1845 = vcombine.low %v122, %v121
    %v1847 = vunpack.c.l.s4 1983009808
    %v1848 = vunpack.c.0.s8 %v1847
    %v1849 = vlaneseq
    %v1850 = vshrl.u32 %v1849, 7
    %v1851 = vsub.s32 %v1848, %v1850
    %v1852 = vrot.slane %v1844, %v1851
    %v1854 = vunpack.c.l.s4 1983009808
    %v1855 = vunpack.c.0.s8 %v1854
    %v1856 = vlaneseq
    %v1857 = vshrl.u32 %v1856, 7
    %v1858 = vsub.s32 %v1855, %v1857
    %v1859 = vrot.slane %v1845, %v1858
    %v1860 = vcombine.low %v1852, %v1859
    %v1861 = vcombine.low %v123, %v130
    %v1863 = vunpack.c.l.s4 1983009808
    %v1864 = vunpack.c.0.s8 %v1863
    %v1865 = vlaneseq
    %v1866 = vshrl.u32 %v1865, 7
    %v1867 = vsub.s32 %v1864, %v1866
    %v1868 = vrot.slane %v1861, %v1867
    %1871 = vrot.lane.b32.xlu0 %v73, 112
    %v1872 = vpop.permute.xlu0 %1871
    %1873 = vrot.lane.b32.xlu0 %v74, 112
    %v1874 = vpop.permute.xlu0 %1873
    %1877 = vrot.lane.b32.xlu0 %v135, 112
    %v1878 = vpop.permute.xlu0 %1877
    %v1880 = vsel %vm137, %v1843, 0
    %v1882 = vsel %vm137, %v1860, 0
    %v1884 = vsel %vm137, %v1868, 0
    %1886 = vmatprep.subr.mxu0 0.0
    %1887 = vmatpush1.msra.mxu0 0.0
    %1888 = vmatprep.subr.mxu0 0.0
    %1889 = vmatpush1.msra.mxu0 0.0
    %1890 = vmatprep.subr.mxu0 0.0
    %1891 = vmatpush1.msra.mxu0 0.0
    %1892 = vmatprep.subr.mxu0 0.0
    %1893 = vmatpush1.msra.mxu0 0.0
    %1894 = vmatprep.subr.mxu0 0.0
    %1895 = vmatpush1.msra.mxu0 0.0
    %1896 = vmatprep.subr.mxu0 0.0
    %1897 = vmatpush1.msra.mxu0 0.0
    %1898 = vmatprep.subr.mxu0 0.0
    %1899 = vmatpush1.msra.mxu0 0.0
    %1900 = vmatprep.subr.mxu0 0.0
    %1901 = vmatpush1.msra.mxu0 0.0
    %1902 = vmatprep.subr.mxu0 0.0
    %1903 = vmatpush1.msra.mxu0 0.0
    %1904 = vmatprep.subr.mxu0 0.0
    %1905 = vmatpush1.msra.mxu0 0.0
    %1906 = vmatprep.subr.mxu0 0.0
    %1907 = vmatpush1.msra.mxu0 0.0
    %1908 = vmatprep.subr.mxu0 0.0
    %1909 = vmatpush1.msra.mxu0 0.0
    %1910 = vmatprep.subr.mxu0 0.0
    %1911 = vmatpush1.msra.mxu0 0.0
    %1912 = vmatprep.subr.mxu0 0.0
    %1913 = vmatpush1.msra.mxu0 0.0
    %1914 = vmatprep.subr.mxu0 0.0
    %1915 = vmatpush1.msra.mxu0 %v1874
    %1916 = vmatprep.subr.mxu0 0.0
    %1917 = vmatpush1.msra.mxu0 %v1872
    %1918 = vmatprep.subr.mxu0 0.0
    %1919 = vmatpush2.msra.mxu0 0.0
    %1920 = vmatprep.subr.mxu0 0.0
    %1921 = vmatpush2.msra.mxu0 0.0
    %1922 = vmatprep.subr.mxu0 0.0
    %1923 = vmatpush2.msra.mxu0 0.0
    %1924 = vmatprep.subr.mxu0 0.0
    %1925 = vmatpush2.msra.mxu0 0.0
    %1926 = vmatprep.subr.mxu0 0.0
    %1927 = vmatpush2.msra.mxu0 0.0
    %1928 = vmatprep.subr.mxu0 0.0
    %1929 = vmatpush2.msra.mxu0 0.0
    %1930 = vmatprep.subr.mxu0 0.0
    %1931 = vmatpush2.msra.mxu0 0.0
    %1932 = vmatprep.subr.mxu0 0.0
    %1933 = vmatpush2.msra.mxu0 0.0
    %1934 = vmatprep.subr.mxu0 0.0
    %1935 = vmatpush2.msra.mxu0 0.0
    %1936 = vmatprep.subr.mxu0 0.0
    %1937 = vmatpush2.msra.mxu0 0.0
    %1938 = vmatprep.subr.mxu0 0.0
    %1939 = vmatpush2.msra.mxu0 0.0
    %1940 = vmatprep.subr.mxu0 0.0
    %1941 = vmatpush2.msra.mxu0 0.0
    %1942 = vmatprep.subr.mxu0 0.0
    %1943 = vmatpush2.msra.mxu0 0.0
    %1944 = vmatprep.subr.mxu0 0.0
    %1945 = vmatpush2.msra.mxu0 0.0
    %1946 = vmatprep.subr.mxu0 0.0
    %1947 = vmatpush2.msra.mxu0 0.0
    %1948 = vmatprep.subr.mxu0 0.0
    %1949 = vmatpush2.msra.mxu0 0.0
    %1950 = vmatprep.mubr.f32.mxu0 0.0
    %1951 = vmatmul.mubr.f32.gmra.mxu0 %v1880
    %v1952 = vpop.f32.mrf.mxu0
    %v1953 = vadd.f32 %v1878, %v1952
    %v1954 = vpop.f32.mrf.mxu0
    %1955 = vmatprep.mubr.f32.mxu0 0.0
    %1956 = vmatmul.mubr.f32.gmra.mxu0 %v1882
    %v1957 = vpop.f32.mrf.mxu0
    %v1958 = vadd.f32 %v1878, %v1957
    %v1959 = vpop.f32.mrf.mxu0
    %1960 = vmatprep.mubr.f32.mxu0 0.0
    %1961 = vmatmul.mubr.f32.gmra.mxu0 %v1884
    %v1962 = vpop.f32.mrf.mxu0
    %v1963 = vadd.f32 %v1878, %v1962
    %v1964 = vpop.f32.mrf.mxu0
    %1965 = vdwg.mxu0
    %v1969 = vcombine.high %v1953, %v1953
    %v1971 = vunpack.c.l.s4 1983009808
    %v1972 = vunpack.c.0.s8 %v1971
    %v1973 = vlaneseq
    %v1974 = vshrl.u32 %v1973, 7
    %v1975 = vsub.s32 %v1972, %v1974
    %v1976 = vrot.slane %v1953, %v1975
    %v1978 = vunpack.c.l.s4 1983009808
    %v1979 = vunpack.c.0.s8 %v1978
    %v1980 = vlaneseq
    %v1981 = vshrl.u32 %v1980, 7
    %v1982 = vsub.s32 %v1979, %v1981
    %v1983 = vrot.slane %v1969, %v1982
    %v1984 = vcombine.high %v1976, %v1976
    %v1985 = vcombine.high %v1983, %v1983
    %v1986 = vcombine.high %v1958, %v1958
    %v1988 = vunpack.c.l.s4 1983009808
    %v1989 = vunpack.c.0.s8 %v1988
    %v1990 = vlaneseq
    %v1991 = vshrl.u32 %v1990, 7
    %v1992 = vsub.s32 %v1989, %v1991
    %v1993 = vrot.slane %v1958, %v1992
    %v1995 = vunpack.c.l.s4 1983009808
    %v1996 = vunpack.c.0.s8 %v1995
    %v1997 = vlaneseq
    %v1998 = vshrl.u32 %v1997, 7
    %v1999 = vsub.s32 %v1996, %v1998
    %v2000 = vrot.slane %v1986, %v1999
    %v2001 = vcombine.high %v1993, %v1993
    %v2002 = vcombine.high %v2000, %v2000
    %v2004 = vunpack.c.l.s4 1983009808
    %v2005 = vunpack.c.0.s8 %v2004
    %v2006 = vlaneseq
    %v2007 = vshrl.u32 %v2006, 7
    %v2008 = vsub.s32 %v2005, %v2007
    %v2009 = vrot.slane %v1963, %v2008
    %v2010 = vcombine.high %v2009, %v2009
    %v2011 = vcombine.low %v1976, %v1984
    %v2012 = vcombine.low %v1983, %v1985
    %v2014 = vunpack.c.l.s4 1983009808
    %v2015 = vunpack.c.0.s8 %v2014
    %v2016 = vlaneseq
    %v2017 = vshrl.u32 %v2016, 7
    %v2018 = vsub.s32 %v2015, %v2017
    %v2019 = vrot.slane %v2011, %v2018
    %v2021 = vunpack.c.l.s4 1983009808
    %v2022 = vunpack.c.0.s8 %v2021
    %v2023 = vlaneseq
    %v2024 = vshrl.u32 %v2023, 7
    %v2025 = vsub.s32 %v2022, %v2024
    %v2026 = vrot.slane %v2012, %v2025
    %v2027 = vcombine.low %v2019, %v2026
    %v2029 = vunpack.c.l.s4 1983009808
    %v2030 = vunpack.c.0.s8 %v2029
    %v2031 = vlaneseq
    %v2032 = vshrl.u32 %v2031, 7
    %v2033 = vsub.s32 %v2030, %v2032
    %v2034 = vrot.slane %v1993, %v2033
    %v2036 = vsel %vm222, %v1819, 0
    %v2038 = vsel %vm222, %v2027, 0
    %v2040 = vsel %vm222, %v2034, 0
    %2042 = vmatprep.subr.mxu0 0.0
    %2043 = vmatpush1.xpose.msra.mxu0 0.0
    %2044 = vmatprep.subr.mxu0 0.0
    %2045 = vmatpush1.xpose.msra.mxu0 0.0
    %2046 = vmatprep.subr.mxu0 0.0
    %2047 = vmatpush1.xpose.msra.mxu0 0.0
    %2048 = vmatprep.subr.mxu0 0.0
    %2049 = vmatpush1.xpose.msra.mxu0 0.0
    %2050 = vmatprep.subr.mxu0 0.0
    %2051 = vmatpush1.xpose.msra.mxu0 0.0
    %2052 = vmatprep.subr.mxu0 0.0
    %2053 = vmatpush1.xpose.msra.mxu0 0.0
    %2054 = vmatprep.subr.mxu0 0.0
    %2055 = vmatpush1.xpose.msra.mxu0 0.0
    %2056 = vmatprep.subr.mxu0 0.0
    %2057 = vmatpush1.xpose.msra.mxu0 0.0
    %2058 = vmatprep.subr.mxu0 0.0
    %2059 = vmatpush1.xpose.msra.mxu0 0.0
    %2060 = vmatprep.subr.mxu0 0.0
    %2061 = vmatpush1.xpose.msra.mxu0 0.0
    %2062 = vmatprep.subr.mxu0 0.0
    %2063 = vmatpush1.xpose.msra.mxu0 0.0
    %2064 = vmatprep.subr.mxu0 0.0
    %2065 = vmatpush1.xpose.msra.mxu0 0.0
    %2066 = vmatprep.subr.mxu0 0.0
    %2067 = vmatpush1.xpose.msra.mxu0 0.0
    %2068 = vmatprep.subr.mxu0 0.0
    %2069 = vmatpush1.xpose.msra.mxu0 0.0
    %2070 = vmatprep.subr.mxu0 0.0
    %2071 = vmatpush1.xpose.msra.mxu0 %v2040
    %2072 = vmatprep.subr.mxu0 0.0
    %2073 = vmatpush1.xpose.msra.mxu0 %v2038
    %2074 = vmatprep.subr.mxu0 0.0
    %2075 = vmatpush2.xpose.msra.mxu0 0.0
    %2076 = vmatprep.subr.mxu0 0.0
    %2077 = vmatpush2.xpose.msra.mxu0 0.0
    %2078 = vmatprep.subr.mxu0 0.0
    %2079 = vmatpush2.xpose.msra.mxu0 0.0
    %2080 = vmatprep.subr.mxu0 0.0
    %2081 = vmatpush2.xpose.msra.mxu0 0.0
    %2082 = vmatprep.subr.mxu0 0.0
    %2083 = vmatpush2.xpose.msra.mxu0 0.0
    %2084 = vmatprep.subr.mxu0 0.0
    %2085 = vmatpush2.xpose.msra.mxu0 0.0
    %2086 = vmatprep.subr.mxu0 0.0
    %2087 = vmatpush2.xpose.msra.mxu0 0.0
    %2088 = vmatprep.subr.mxu0 0.0
    %2089 = vmatpush2.xpose.msra.mxu0 0.0
    %2090 = vmatprep.subr.mxu0 0.0
    %2091 = vmatpush2.xpose.msra.mxu0 0.0
    %2092 = vmatprep.subr.mxu0 0.0
    %2093 = vmatpush2.xpose.msra.mxu0 0.0
    %2094 = vmatprep.subr.mxu0 0.0
    %2095 = vmatpush2.xpose.msra.mxu0 0.0
    %2096 = vmatprep.subr.mxu0 0.0
    %2097 = vmatpush2.xpose.msra.mxu0 0.0
    %2098 = vmatprep.subr.mxu0 0.0
    %2099 = vmatpush2.xpose.msra.mxu0 0.0
    %2100 = vmatprep.subr.mxu0 0.0
    %2101 = vmatpush2.xpose.msra.mxu0 0.0
    %2102 = vmatprep.subr.mxu0 0.0
    %2103 = vmatpush2.xpose.msra.mxu0 0.0
    %2104 = vmatprep.subr.mxu0 0.0
    %2105 = vmatpush2.xpose.msra.mxu0 0.0
    %2106 = vmatprep.mubr.f32.mxu0 0.0
    %2107 = vmatmul.mubr.f32.gmra.mxu0 %v2036
    %v2108 = vpop.f32.mrf.mxu0
    %v2109 = vadd.f32 0.0, %v2108
    %v2110 = vpop.f32.mrf.mxu0
    %2111 = vdwg.mxu0
    %v2112 = vcombine.low %v2001, %v2000
    %v2113 = vcombine.low %v2002, %v2009
    %v2115 = vunpack.c.l.s4 1983009808
    %v2116 = vunpack.c.0.s8 %v2115
    %v2117 = vlaneseq
    %v2118 = vshrl.u32 %v2117, 7
    %v2119 = vsub.s32 %v2116, %v2118
    %v2120 = vrot.slane %v2112, %v2119
    %v2122 = vunpack.c.l.s4 1983009808
    %v2123 = vunpack.c.0.s8 %v2122
    %v2124 = vlaneseq
    %v2125 = vshrl.u32 %v2124, 7
    %v2126 = vsub.s32 %v2123, %v2125
    %v2127 = vrot.slane %v2113, %v2126
    %v2128 = vcombine.low %v2120, %v2127
    %v2130 = vunpack.c.l.s4 1983009808
    %v2131 = vunpack.c.0.s8 %v2130
    %v2132 = vlaneseq
    %v2133 = vshrl.u32 %v2132, 7
    %v2134 = vsub.s32 %v2131, %v2133
    %v2135 = vrot.slane %v2010, %v2134
    %v2137 = vsel %vm222, %v1824, 0
    %v2139 = vsel %vm222, %v2128, 0
    %v2141 = vsel %vm222, %v2135, 0
    %2143 = vmatprep.subr.mxu0 0.0
    %2144 = vmatpush1.xpose.msra.mxu0 0.0
    %2145 = vmatprep.subr.mxu0 0.0
    %2146 = vmatpush1.xpose.msra.mxu0 0.0
    %2147 = vmatprep.subr.mxu0 0.0
    %2148 = vmatpush1.xpose.msra.mxu0 0.0
    %2149 = vmatprep.subr.mxu0 0.0
    %2150 = vmatpush1.xpose.msra.mxu0 0.0
    %2151 = vmatprep.subr.mxu0 0.0
    %2152 = vmatpush1.xpose.msra.mxu0 0.0
    %2153 = vmatprep.subr.mxu0 0.0
    %2154 = vmatpush1.xpose.msra.mxu0 0.0
    %2155 = vmatprep.subr.mxu0 0.0
    %2156 = vmatpush1.xpose.msra.mxu0 0.0
    %2157 = vmatprep.subr.mxu0 0.0
    %2158 = vmatpush1.xpose.msra.mxu0 0.0
    %2159 = vmatprep.subr.mxu0 0.0
    %2160 = vmatpush1.xpose.msra.mxu0 0.0
    %2161 = vmatprep.subr.mxu0 0.0
    %2162 = vmatpush1.xpose.msra.mxu0 0.0
    %2163 = vmatprep.subr.mxu0 0.0
    %2164 = vmatpush1.xpose.msra.mxu0 0.0
    %2165 = vmatprep.subr.mxu0 0.0
    %2166 = vmatpush1.xpose.msra.mxu0 0.0
    %2167 = vmatprep.subr.mxu0 0.0
    %2168 = vmatpush1.xpose.msra.mxu0 0.0
    %2169 = vmatprep.subr.mxu0 0.0
    %2170 = vmatpush1.xpose.msra.mxu0 0.0
    %2171 = vmatprep.subr.mxu0 0.0
    %2172 = vmatpush1.xpose.msra.mxu0 %v2141
    %2173 = vmatprep.subr.mxu0 0.0
    %2174 = vmatpush1.xpose.msra.mxu0 %v2139
    %2175 = vmatprep.subr.mxu0 0.0
    %2176 = vmatpush2.xpose.msra.mxu0 0.0
    %2177 = vmatprep.subr.mxu0 0.0
    %2178 = vmatpush2.xpose.msra.mxu0 0.0
    %2179 = vmatprep.subr.mxu0 0.0
    %2180 = vmatpush2.xpose.msra.mxu0 0.0
    %2181 = vmatprep.subr.mxu0 0.0
    %2182 = vmatpush2.xpose.msra.mxu0 0.0
    %2183 = vmatprep.subr.mxu0 0.0
    %2184 = vmatpush2.xpose.msra.mxu0 0.0
    %2185 = vmatprep.subr.mxu0 0.0
    %2186 = vmatpush2.xpose.msra.mxu0 0.0
    %2187 = vmatprep.subr.mxu0 0.0
    %2188 = vmatpush2.xpose.msra.mxu0 0.0
    %2189 = vmatprep.subr.mxu0 0.0
    %2190 = vmatpush2.xpose.msra.mxu0 0.0
    %2191 = vmatprep.subr.mxu0 0.0
    %2192 = vmatpush2.xpose.msra.mxu0 0.0
    %2193 = vmatprep.subr.mxu0 0.0
    %2194 = vmatpush2.xpose.msra.mxu0 0.0
    %2195 = vmatprep.subr.mxu0 0.0
    %2196 = vmatpush2.xpose.msra.mxu0 0.0
    %2197 = vmatprep.subr.mxu0 0.0
    %2198 = vmatpush2.xpose.msra.mxu0 0.0
    %2199 = vmatprep.subr.mxu0 0.0
    %2200 = vmatpush2.xpose.msra.mxu0 0.0
    %2201 = vmatprep.subr.mxu0 0.0
    %2202 = vmatpush2.xpose.msra.mxu0 0.0
    %2203 = vmatprep.subr.mxu0 0.0
    %2204 = vmatpush2.xpose.msra.mxu0 0.0
    %2205 = vmatprep.subr.mxu0 0.0
    %2206 = vmatpush2.xpose.msra.mxu0 0.0
    %2207 = vmatprep.mubr.f32.mxu0 0.0
    %2208 = vmatmul.mubr.f32.gmra.mxu0 %v2137
    %v2209 = vpop.f32.mrf.mxu0
    %v2210 = vadd.f32 0.0, %v2209
    %v2211 = vpop.f32.mrf.mxu0
    %2212 = vdwg.mxu0
    %v2213 = vmul.f32 %v2109, 0.5
    %v2214 = vmul.f32 %v2210, 0.5
    %vm2215 = vcmp.eq.f32.partialorder %v71, 0.0
    %vm2216 = vcmp.eq.f32.partialorder %v72, 0.0
    %v2217 = vsel %vm2215, 1, 0
    %v2218 = vsel %vm2216, 1, 0
    %v2219 = vlaneseq
    %v2220 = vshrl.u32 %v2219, 7
    %v2221 = vsub.s32 0, %v2220
    %v2222 = vrot.slane %v2217, %v2221
    %v2223 = vlaneseq
    %v2224 = vshrl.u32 %v2223, 7
    %v2225 = vsub.s32 0, %v2224
    %v2226 = vrot.slane %v2218, %v2225
    %vm2227 = vcmp.eq.s32.totalorder %v2222, 1
    %vm2228 = vcmp.eq.s32.totalorder %v2226, 1
    %v2229 = vsel %vm2227, -1e+10, %v2213
    %v2230 = vsel %vm2228, -1e+10, %v2214
    %vm2231 = vcmask 80896
    %v2232 = vsel %vm2231, %v2229, -inf
    %2233 = vmax.xlane.f32.xlu0 %v2232
    %v2234 = vpop.xlane.xlu0 %2233
    %v2235 = vsel %vm2231, %v2230, -inf
    %2236 = vmax.xlane.f32.xlu0 %v2235
    %v2237 = vpop.xlane.xlu0 %2236
    %v2238 = vsub.f32 %v2229, %v2234
    %v2239 = vsub.f32 %v2230, %v2237
    %v2240 = vmul.f32 %v2238, 1.442695
    %v2241 = vpow.pop %v2240
    %v2242 = vmul.f32 %v2239, 1.442695
    %v2243 = vpow.pop %v2242
    %v2244 = vsel %vm2231, %v2241, 0.0
    %2245 = vadd.xlane.f32.xlu0 %v2244
    %v2246 = vpop.xlane.xlu0 %2245
    %v2247 = vsel %vm2231, %v2243, 0.0
    %2248 = vadd.xlane.f32.xlu0 %v2247
    %v2249 = vpop.xlane.xlu0 %2248
    %v2250 = vrcp.pop %v2246
    %v2251 = vrcp.pop %v2249
    %v2252 = vmul.f32 %v2246, %v2250
    %v2253 = vmul.f32 %v2249, %v2251
    %v2254 = vsub.f32 2.0, %v2252
    %v2255 = vsub.f32 2.0, %v2253
    %v2256 = vmul.f32 %v2250, %v2254
    %v2257 = vmul.f32 %v2251, %v2255
    %v2258 = vmul.f32 %v2241, %v2256
    %v2259 = vmul.f32 %v2243, %v2257
    %2260 = vrot.lane.b32.xlu0 %v2027, 112
    %v2261 = vpop.permute.xlu0 %2260
    %2262 = vrot.lane.b32.xlu0 %v2034, 112
    %v2263 = vpop.permute.xlu0 %2262
    %v2266 = vsel %vm2231, %v2258, 0
    %vm2268 = vcmask 1041408
    %v2269 = vsel %vm2268, %v2263, 0
    %2271 = vmatprep.subr.mxu0 0.0
    %2272 = vmatpush1.msra.mxu0 0.0
    %2273 = vmatprep.subr.mxu0 0.0
    %2274 = vmatpush1.msra.mxu0 0.0
    %2275 = vmatprep.subr.mxu0 0.0
    %2276 = vmatpush1.msra.mxu0 0.0
    %2277 = vmatprep.subr.mxu0 0.0
    %2278 = vmatpush1.msra.mxu0 0.0
    %2279 = vmatprep.subr.mxu0 0.0
    %2280 = vmatpush1.msra.mxu0 0.0
    %2281 = vmatprep.subr.mxu0 0.0
    %2282 = vmatpush1.msra.mxu0 0.0
    %2283 = vmatprep.subr.mxu0 0.0
    %2284 = vmatpush1.msra.mxu0 0.0
    %2285 = vmatprep.subr.mxu0 0.0
    %2286 = vmatpush1.msra.mxu0 0.0
    %2287 = vmatprep.subr.mxu0 0.0
    %2288 = vmatpush1.msra.mxu0 0.0
    %2289 = vmatprep.subr.mxu0 0.0
    %2290 = vmatpush1.msra.mxu0 0.0
    %2291 = vmatprep.subr.mxu0 0.0
    %2292 = vmatpush1.msra.mxu0 0.0
    %2293 = vmatprep.subr.mxu0 0.0
    %2294 = vmatpush1.msra.mxu0 0.0
    %2295 = vmatprep.subr.mxu0 0.0
    %2296 = vmatpush1.msra.mxu0 0.0
    %2297 = vmatprep.subr.mxu0 0.0
    %2298 = vmatpush1.msra.mxu0 0.0
    %2299 = vmatprep.subr.mxu0 0.0
    %2300 = vmatpush1.msra.mxu0 %v2269
    %2301 = vmatprep.subr.mxu0 0.0
    %2302 = vmatpush1.msra.mxu0 %v2261
    %2303 = vmatprep.subr.mxu0 0.0
    %2304 = vmatpush2.msra.mxu0 0.0
    %2305 = vmatprep.subr.mxu0 0.0
    %2306 = vmatpush2.msra.mxu0 0.0
    %2307 = vmatprep.subr.mxu0 0.0
    %2308 = vmatpush2.msra.mxu0 0.0
    %2309 = vmatprep.subr.mxu0 0.0
    %2310 = vmatpush2.msra.mxu0 0.0
    %2311 = vmatprep.subr.mxu0 0.0
    %2312 = vmatpush2.msra.mxu0 0.0
    %2313 = vmatprep.subr.mxu0 0.0
    %2314 = vmatpush2.msra.mxu0 0.0
    %2315 = vmatprep.subr.mxu0 0.0
    %2316 = vmatpush2.msra.mxu0 0.0
    %2317 = vmatprep.subr.mxu0 0.0
    %2318 = vmatpush2.msra.mxu0 0.0
    %2319 = vmatprep.subr.mxu0 0.0
    %2320 = vmatpush2.msra.mxu0 0.0
    %2321 = vmatprep.subr.mxu0 0.0
    %2322 = vmatpush2.msra.mxu0 0.0
    %2323 = vmatprep.subr.mxu0 0.0
    %2324 = vmatpush2.msra.mxu0 0.0
    %2325 = vmatprep.subr.mxu0 0.0
    %2326 = vmatpush2.msra.mxu0 0.0
    %2327 = vmatprep.subr.mxu0 0.0
    %2328 = vmatpush2.msra.mxu0 0.0
    %2329 = vmatprep.subr.mxu0 0.0
    %2330 = vmatpush2.msra.mxu0 0.0
    %2331 = vmatprep.subr.mxu0 0.0
    %2332 = vmatpush2.msra.mxu0 0.0
    %2333 = vmatprep.subr.mxu0 0.0
    %2334 = vmatpush2.msra.mxu0 0.0
    %2335 = vmatprep.mubr.f32.mxu0 0.0
    %2336 = vmatmul.mubr.f32.gmra.mxu0 %v2266
    %v2337 = vpop.f32.mrf.mxu0
    %v2338 = vadd.f32 0.0, %v2337
    %v2339 = vpop.f32.mrf.mxu0
    %2340 = vdwg.mxu0
    %2341 = vrot.lane.b32.xlu0 %v2128, 112
    %v2342 = vpop.permute.xlu0 %2341
    %2343 = vrot.lane.b32.xlu0 %v2135, 112
    %v2344 = vpop.permute.xlu0 %2343
    %v2347 = vsel %vm2231, %v2259, 0
    %v2349 = vsel %vm2268, %v2344, 0
    %2351 = vmatprep.subr.mxu0 0.0
    %2352 = vmatpush1.msra.mxu0 0.0
    %2353 = vmatprep.subr.mxu0 0.0
    %2354 = vmatpush1.msra.mxu0 0.0
    %2355 = vmatprep.subr.mxu0 0.0
    %2356 = vmatpush1.msra.mxu0 0.0
    %2357 = vmatprep.subr.mxu0 0.0
    %2358 = vmatpush1.msra.mxu0 0.0
    %2359 = vmatprep.subr.mxu0 0.0
    %2360 = vmatpush1.msra.mxu0 0.0
    %2361 = vmatprep.subr.mxu0 0.0
    %2362 = vmatpush1.msra.mxu0 0.0
    %2363 = vmatprep.subr.mxu0 0.0
    %2364 = vmatpush1.msra.mxu0 0.0
    %2365 = vmatprep.subr.mxu0 0.0
    %2366 = vmatpush1.msra.mxu0 0.0
    %2367 = vmatprep.subr.mxu0 0.0
    %2368 = vmatpush1.msra.mxu0 0.0
    %2369 = vmatprep.subr.mxu0 0.0
    %2370 = vmatpush1.msra.mxu0 0.0
    %2371 = vmatprep.subr.mxu0 0.0
    %2372 = vmatpush1.msra.mxu0 0.0
    %2373 = vmatprep.subr.mxu0 0.0
    %2374 = vmatpush1.msra.mxu0 0.0
    %2375 = vmatprep.subr.mxu0 0.0
    %2376 = vmatpush1.msra.mxu0 0.0
    %2377 = vmatprep.subr.mxu0 0.0
    %2378 = vmatpush1.msra.mxu0 0.0
    %2379 = vmatprep.subr.mxu0 0.0
    %2380 = vmatpush1.msra.mxu0 %v2349
    %2381 = vmatprep.subr.mxu0 0.0
    %2382 = vmatpush1.msra.mxu0 %v2342
    %2383 = vmatprep.subr.mxu0 0.0
    %2384 = vmatpush2.msra.mxu0 0.0
    %2385 = vmatprep.subr.mxu0 0.0
    %2386 = vmatpush2.msra.mxu0 0.0
    %2387 = vmatprep.subr.mxu0 0.0
    %2388 = vmatpush2.msra.mxu0 0.0
    %2389 = vmatprep.subr.mxu0 0.0
    %2390 = vmatpush2.msra.mxu0 0.0
    %2391 = vmatprep.subr.mxu0 0.0
    %2392 = vmatpush2.msra.mxu0 0.0
    %2393 = vmatprep.subr.mxu0 0.0
    %2394 = vmatpush2.msra.mxu0 0.0
    %2395 = vmatprep.subr.mxu0 0.0
    %2396 = vmatpush2.msra.mxu0 0.0
    %2397 = vmatprep.subr.mxu0 0.0
    %2398 = vmatpush2.msra.mxu0 0.0
    %2399 = vmatprep.subr.mxu0 0.0
    %2400 = vmatpush2.msra.mxu0 0.0
    %2401 = vmatprep.subr.mxu0 0.0
    %2402 = vmatpush2.msra.mxu0 0.0
    %2403 = vmatprep.subr.mxu0 0.0
    %2404 = vmatpush2.msra.mxu0 0.0
    %2405 = vmatprep.subr.mxu0 0.0
    %2406 = vmatpush2.msra.mxu0 0.0
    %2407 = vmatprep.subr.mxu0 0.0
    %2408 = vmatpush2.msra.mxu0 0.0
    %2409 = vmatprep.subr.mxu0 0.0
    %2410 = vmatpush2.msra.mxu0 0.0
    %2411 = vmatprep.subr.mxu0 0.0
    %2412 = vmatpush2.msra.mxu0 0.0
    %2413 = vmatprep.subr.mxu0 0.0
    %2414 = vmatpush2.msra.mxu0 0.0
    %2415 = vmatprep.mubr.f32.mxu0 0.0
    %2416 = vmatmul.mubr.f32.gmra.mxu0 %v2347
    %v2417 = vpop.f32.mrf.mxu0
    %v2418 = vadd.f32 0.0, %v2417
    %v2419 = vpop.f32.mrf.mxu0
    %2420 = vdwg.mxu0
    %2421 = vrot.lane.b32.xlu0 %v1819, 124
    %v2422 = vpop.permute.xlu0 %2421
    %2423 = vrot.lane.b32.xlu0 %v2027, 124
    %v2424 = vpop.permute.xlu0 %2423
    %2425 = vrot.lane.b32.xlu0 %v2034, 124
    %v2426 = vpop.permute.xlu0 %2425
    %v2427 = vsel %vm222, %v2422, 0
    %v2429 = vsel %vm222, %v2424, 0
    %v2431 = vsel %vm222, %v2426, 0
    %2433 = vmatprep.subr.mxu0 0.0
    %2434 = vmatpush1.xpose.msra.mxu0 0.0
    %2435 = vmatprep.subr.mxu0 0.0
    %2436 = vmatpush1.xpose.msra.mxu0 0.0
    %2437 = vmatprep.subr.mxu0 0.0
    %2438 = vmatpush1.xpose.msra.mxu0 0.0
    %2439 = vmatprep.subr.mxu0 0.0
    %2440 = vmatpush1.xpose.msra.mxu0 0.0
    %2441 = vmatprep.subr.mxu0 0.0
    %2442 = vmatpush1.xpose.msra.mxu0 0.0
    %2443 = vmatprep.subr.mxu0 0.0
    %2444 = vmatpush1.xpose.msra.mxu0 0.0
    %2445 = vmatprep.subr.mxu0 0.0
    %2446 = vmatpush1.xpose.msra.mxu0 0.0
    %2447 = vmatprep.subr.mxu0 0.0
    %2448 = vmatpush1.xpose.msra.mxu0 0.0
    %2449 = vmatprep.subr.mxu0 0.0
    %2450 = vmatpush1.xpose.msra.mxu0 0.0
    %2451 = vmatprep.subr.mxu0 0.0
    %2452 = vmatpush1.xpose.msra.mxu0 0.0
    %2453 = vmatprep.subr.mxu0 0.0
    %2454 = vmatpush1.xpose.msra.mxu0 0.0
    %2455 = vmatprep.subr.mxu0 0.0
    %2456 = vmatpush1.xpose.msra.mxu0 0.0
    %2457 = vmatprep.subr.mxu0 0.0
    %2458 = vmatpush1.xpose.msra.mxu0 0.0
    %2459 = vmatprep.subr.mxu0 0.0
    %2460 = vmatpush1.xpose.msra.mxu0 0.0
    %2461 = vmatprep.subr.mxu0 0.0
    %2462 = vmatpush1.xpose.msra.mxu0 %v2431
    %2463 = vmatprep.subr.mxu0 0.0
    %2464 = vmatpush1.xpose.msra.mxu0 %v2429
    %2465 = vmatprep.subr.mxu0 0.0
    %2466 = vmatpush2.xpose.msra.mxu0 0.0
    %2467 = vmatprep.subr.mxu0 0.0
    %2468 = vmatpush2.xpose.msra.mxu0 0.0
    %2469 = vmatprep.subr.mxu0 0.0
    %2470 = vmatpush2.xpose.msra.mxu0 0.0
    %2471 = vmatprep.subr.mxu0 0.0
    %2472 = vmatpush2.xpose.msra.mxu0 0.0
    %2473 = vmatprep.subr.mxu0 0.0
    %2474 = vmatpush2.xpose.msra.mxu0 0.0
    %2475 = vmatprep.subr.mxu0 0.0
    %2476 = vmatpush2.xpose.msra.mxu0 0.0
    %2477 = vmatprep.subr.mxu0 0.0
    %2478 = vmatpush2.xpose.msra.mxu0 0.0
    %2479 = vmatprep.subr.mxu0 0.0
    %2480 = vmatpush2.xpose.msra.mxu0 0.0
    %2481 = vmatprep.subr.mxu0 0.0
    %2482 = vmatpush2.xpose.msra.mxu0 0.0
    %2483 = vmatprep.subr.mxu0 0.0
    %2484 = vmatpush2.xpose.msra.mxu0 0.0
    %2485 = vmatprep.subr.mxu0 0.0
    %2486 = vmatpush2.xpose.msra.mxu0 0.0
    %2487 = vmatprep.subr.mxu0 0.0
    %2488 = vmatpush2.xpose.msra.mxu0 0.0
    %2489 = vmatprep.subr.mxu0 0.0
    %2490 = vmatpush2.xpose.msra.mxu0 0.0
    %2491 = vmatprep.subr.mxu0 0.0
    %2492 = vmatpush2.xpose.msra.mxu0 0.0
    %2493 = vmatprep.subr.mxu0 0.0
    %2494 = vmatpush2.xpose.msra.mxu0 0.0
    %2495 = vmatprep.subr.mxu0 0.0
    %2496 = vmatpush2.xpose.msra.mxu0 0.0
    %2497 = vmatprep.mubr.f32.mxu0 0.0
    %2498 = vmatmul.mubr.f32.gmra.mxu0 %v2427
    %v2499 = vpop.f32.mrf.mxu0
    %v2500 = vadd.f32 0.0, %v2499
    %v2501 = vpop.f32.mrf.mxu0
    %2502 = vdwg.mxu0
    %2503 = vrot.lane.b32.xlu0 %v1824, 124
    %v2504 = vpop.permute.xlu0 %2503
    %2505 = vrot.lane.b32.xlu0 %v2128, 124
    %v2506 = vpop.permute.xlu0 %2505
    %2507 = vrot.lane.b32.xlu0 %v2135, 124
    %v2508 = vpop.permute.xlu0 %2507
    %v2509 = vsel %vm222, %v2504, 0
    %v2511 = vsel %vm222, %v2506, 0
    %v2513 = vsel %vm222, %v2508, 0
    %2515 = vmatprep.subr.mxu0 0.0
    %2516 = vmatpush1.xpose.msra.mxu0 0.0
    %2517 = vmatprep.subr.mxu0 0.0
    %2518 = vmatpush1.xpose.msra.mxu0 0.0
    %2519 = vmatprep.subr.mxu0 0.0
    %2520 = vmatpush1.xpose.msra.mxu0 0.0
    %2521 = vmatprep.subr.mxu0 0.0
    %2522 = vmatpush1.xpose.msra.mxu0 0.0
    %2523 = vmatprep.subr.mxu0 0.0
    %2524 = vmatpush1.xpose.msra.mxu0 0.0
    %2525 = vmatprep.subr.mxu0 0.0
    %2526 = vmatpush1.xpose.msra.mxu0 0.0
    %2527 = vmatprep.subr.mxu0 0.0
    %2528 = vmatpush1.xpose.msra.mxu0 0.0
    %2529 = vmatprep.subr.mxu0 0.0
    %2530 = vmatpush1.xpose.msra.mxu0 0.0
    %2531 = vmatprep.subr.mxu0 0.0
    %2532 = vmatpush1.xpose.msra.mxu0 0.0
    %2533 = vmatprep.subr.mxu0 0.0
    %2534 = vmatpush1.xpose.msra.mxu0 0.0
    %2535 = vmatprep.subr.mxu0 0.0
    %2536 = vmatpush1.xpose.msra.mxu0 0.0
    %2537 = vmatprep.subr.mxu0 0.0
    %2538 = vmatpush1.xpose.msra.mxu0 0.0
    %2539 = vmatprep.subr.mxu0 0.0
    %2540 = vmatpush1.xpose.msra.mxu0 0.0
    %2541 = vmatprep.subr.mxu0 0.0
    %2542 = vmatpush1.xpose.msra.mxu0 0.0
    %2543 = vmatprep.subr.mxu0 0.0
    %2544 = vmatpush1.xpose.msra.mxu0 %v2513
    %2545 = vmatprep.subr.mxu0 0.0
    %2546 = vmatpush1.xpose.msra.mxu0 %v2511
    %2547 = vmatprep.subr.mxu0 0.0
    %2548 = vmatpush2.xpose.msra.mxu0 0.0
    %2549 = vmatprep.subr.mxu0 0.0
    %2550 = vmatpush2.xpose.msra.mxu0 0.0
    %2551 = vmatprep.subr.mxu0 0.0
    %2552 = vmatpush2.xpose.msra.mxu0 0.0
    %2553 = vmatprep.subr.mxu0 0.0
    %2554 = vmatpush2.xpose.msra.mxu0 0.0
    %2555 = vmatprep.subr.mxu0 0.0
    %2556 = vmatpush2.xpose.msra.mxu0 0.0
    %2557 = vmatprep.subr.mxu0 0.0
    %2558 = vmatpush2.xpose.msra.mxu0 0.0
    %2559 = vmatprep.subr.mxu0 0.0
    %2560 = vmatpush2.xpose.msra.mxu0 0.0
    %2561 = vmatprep.subr.mxu0 0.0
    %2562 = vmatpush2.xpose.msra.mxu0 0.0
    %2563 = vmatprep.subr.mxu0 0.0
    %2564 = vmatpush2.xpose.msra.mxu0 0.0
    %2565 = vmatprep.subr.mxu0 0.0
    %2566 = vmatpush2.xpose.msra.mxu0 0.0
    %2567 = vmatprep.subr.mxu0 0.0
    %2568 = vmatpush2.xpose.msra.mxu0 0.0
    %2569 = vmatprep.subr.mxu0 0.0
    %2570 = vmatpush2.xpose.msra.mxu0 0.0
    %2571 = vmatprep.subr.mxu0 0.0
    %2572 = vmatpush2.xpose.msra.mxu0 0.0
    %2573 = vmatprep.subr.mxu0 0.0
    %2574 = vmatpush2.xpose.msra.mxu0 0.0
    %2575 = vmatprep.subr.mxu0 0.0
    %2576 = vmatpush2.xpose.msra.mxu0 0.0
    %2577 = vmatprep.subr.mxu0 0.0
    %2578 = vmatpush2.xpose.msra.mxu0 0.0
    %2579 = vmatprep.mubr.f32.mxu0 0.0
    %2580 = vmatmul.mubr.f32.gmra.mxu0 %v2509
    %v2581 = vpop.f32.mrf.mxu0
    %v2582 = vadd.f32 0.0, %v2581
    %v2583 = vpop.f32.mrf.mxu0
    %2584 = vdwg.mxu0
    %v2585 = vmul.f32 %v2500, 0.5
    %v2586 = vmul.f32 %v2582, 0.5
    %v2587 = vsel %vm2227, -1e+10, %v2585
    %v2588 = vsel %vm2228, -1e+10, %v2586
    %v2589 = vsel %vm2231, %v2587, -inf
    %2590 = vmax.xlane.f32.xlu0 %v2589
    %v2591 = vpop.xlane.xlu0 %2590
    %v2592 = vsel %vm2231, %v2588, -inf
    %2593 = vmax.xlane.f32.xlu0 %v2592
    %v2594 = vpop.xlane.xlu0 %2593
    %v2595 = vsub.f32 %v2587, %v2591
    %v2596 = vsub.f32 %v2588, %v2594
    %v2597 = vmul.f32 %v2595, 1.442695
    %v2598 = vpow.pop %v2597
    %v2599 = vmul.f32 %v2596, 1.442695
    %v2600 = vpow.pop %v2599
    %v2601 = vsel %vm2231, %v2598, 0.0
    %2602 = vadd.xlane.f32.xlu0 %v2601
    %v2603 = vpop.xlane.xlu0 %2602
    %v2604 = vsel %vm2231, %v2600, 0.0
    %2605 = vadd.xlane.f32.xlu0 %v2604
    %v2606 = vpop.xlane.xlu0 %2605
    %v2607 = vrcp.pop %v2603
    %v2608 = vrcp.pop %v2606
    %v2609 = vmul.f32 %v2603, %v2607
    %v2610 = vmul.f32 %v2606, %v2608
    %v2611 = vsub.f32 2.0, %v2609
    %v2612 = vsub.f32 2.0, %v2610
    %v2613 = vmul.f32 %v2607, %v2611
    %v2614 = vmul.f32 %v2608, %v2612
    %v2615 = vmul.f32 %v2598, %v2613
    %v2616 = vmul.f32 %v2600, %v2614
    %2617 = vrot.lane.b32.xlu0 %v2027, 108
    %v2618 = vpop.permute.xlu0 %2617
    %2619 = vrot.lane.b32.xlu0 %v2034, 108
    %v2620 = vpop.permute.xlu0 %2619
    %v2623 = vsel %vm2231, %v2615, 0
    %v2625 = vsel %vm2268, %v2620, 0
    %2627 = vmatprep.subr.mxu0 0.0
    %2628 = vmatpush1.msra.mxu0 0.0
    %2629 = vmatprep.subr.mxu0 0.0
    %2630 = vmatpush1.msra.mxu0 0.0
    %2631 = vmatprep.subr.mxu0 0.0
    %2632 = vmatpush1.msra.mxu0 0.0
    %2633 = vmatprep.subr.mxu0 0.0
    %2634 = vmatpush1.msra.mxu0 0.0
    %2635 = vmatprep.subr.mxu0 0.0
    %2636 = vmatpush1.msra.mxu0 0.0
    %2637 = vmatprep.subr.mxu0 0.0
    %2638 = vmatpush1.msra.mxu0 0.0
    %2639 = vmatprep.subr.mxu0 0.0
    %2640 = vmatpush1.msra.mxu0 0.0
    %2641 = vmatprep.subr.mxu0 0.0
    %2642 = vmatpush1.msra.mxu0 0.0
    %2643 = vmatprep.subr.mxu0 0.0
    %2644 = vmatpush1.msra.mxu0 0.0
    %2645 = vmatprep.subr.mxu0 0.0
    %2646 = vmatpush1.msra.mxu0 0.0
    %2647 = vmatprep.subr.mxu0 0.0
    %2648 = vmatpush1.msra.mxu0 0.0
    %2649 = vmatprep.subr.mxu0 0.0
    %2650 = vmatpush1.msra.mxu0 0.0
    %2651 = vmatprep.subr.mxu0 0.0
    %2652 = vmatpush1.msra.mxu0 0.0
    %2653 = vmatprep.subr.mxu0 0.0
    %2654 = vmatpush1.msra.mxu0 0.0
    %2655 = vmatprep.subr.mxu0 0.0
    %2656 = vmatpush1.msra.mxu0 %v2625
    %2657 = vmatprep.subr.mxu0 0.0
    %2658 = vmatpush1.msra.mxu0 %v2618
    %2659 = vmatprep.subr.mxu0 0.0
    %2660 = vmatpush2.msra.mxu0 0.0
    %2661 = vmatprep.subr.mxu0 0.0
    %2662 = vmatpush2.msra.mxu0 0.0
    %2663 = vmatprep.subr.mxu0 0.0
    %2664 = vmatpush2.msra.mxu0 0.0
    %2665 = vmatprep.subr.mxu0 0.0
    %2666 = vmatpush2.msra.mxu0 0.0
    %2667 = vmatprep.subr.mxu0 0.0
    %2668 = vmatpush2.msra.mxu0 0.0
    %2669 = vmatprep.subr.mxu0 0.0
    %2670 = vmatpush2.msra.mxu0 0.0
    %2671 = vmatprep.subr.mxu0 0.0
    %2672 = vmatpush2.msra.mxu0 0.0
    %2673 = vmatprep.subr.mxu0 0.0
    %2674 = vmatpush2.msra.mxu0 0.0
    %2675 = vmatprep.subr.mxu0 0.0
    %2676 = vmatpush2.msra.mxu0 0.0
    %2677 = vmatprep.subr.mxu0 0.0
    %2678 = vmatpush2.msra.mxu0 0.0
    %2679 = vmatprep.subr.mxu0 0.0
    %2680 = vmatpush2.msra.mxu0 0.0
    %2681 = vmatprep.subr.mxu0 0.0
    %2682 = vmatpush2.msra.mxu0 0.0
    %2683 = vmatprep.subr.mxu0 0.0
    %2684 = vmatpush2.msra.mxu0 0.0
    %2685 = vmatprep.subr.mxu0 0.0
    %2686 = vmatpush2.msra.mxu0 0.0
    %2687 = vmatprep.subr.mxu0 0.0
    %2688 = vmatpush2.msra.mxu0 0.0
    %2689 = vmatprep.subr.mxu0 0.0
    %2690 = vmatpush2.msra.mxu0 0.0
    %2691 = vmatprep.mubr.f32.mxu0 0.0
    %2692 = vmatmul.mubr.f32.gmra.mxu0 %v2623
    %v2693 = vpop.f32.mrf.mxu0
    %v2694 = vadd.f32 0.0, %v2693
    %v2695 = vpop.f32.mrf.mxu0
    %2696 = vdwg.mxu0
    %2697 = vrot.lane.b32.xlu0 %v2128, 108
    %v2698 = vpop.permute.xlu0 %2697
    %2699 = vrot.lane.b32.xlu0 %v2135, 108
    %v2700 = vpop.permute.xlu0 %2699
    %v2703 = vsel %vm2231, %v2616, 0
    %v2705 = vsel %vm2268, %v2700, 0
    %2707 = vmatprep.subr.mxu0 0.0
    %2708 = vmatpush1.msra.mxu0 0.0
    %2709 = vmatprep.subr.mxu0 0.0
    %2710 = vmatpush1.msra.mxu0 0.0
    %2711 = vmatprep.subr.mxu0 0.0
    %2712 = vmatpush1.msra.mxu0 0.0
    %2713 = vmatprep.subr.mxu0 0.0
    %2714 = vmatpush1.msra.mxu0 0.0
    %2715 = vmatprep.subr.mxu0 0.0
    %2716 = vmatpush1.msra.mxu0 0.0
    %2717 = vmatprep.subr.mxu0 0.0
    %2718 = vmatpush1.msra.mxu0 0.0
    %2719 = vmatprep.subr.mxu0 0.0
    %2720 = vmatpush1.msra.mxu0 0.0
    %2721 = vmatprep.subr.mxu0 0.0
    %2722 = vmatpush1.msra.mxu0 0.0
    %2723 = vmatprep.subr.mxu0 0.0
    %2724 = vmatpush1.msra.mxu0 0.0
    %2725 = vmatprep.subr.mxu0 0.0
    %2726 = vmatpush1.msra.mxu0 0.0
    %2727 = vmatprep.subr.mxu0 0.0
    %2728 = vmatpush1.msra.mxu0 0.0
    %2729 = vmatprep.subr.mxu0 0.0
    %2730 = vmatpush1.msra.mxu0 0.0
    %2731 = vmatprep.subr.mxu0 0.0
    %2732 = vmatpush1.msra.mxu0 0.0
    %2733 = vmatprep.subr.mxu0 0.0
    %2734 = vmatpush1.msra.mxu0 0.0
    %2735 = vmatprep.subr.mxu0 0.0
    %2736 = vmatpush1.msra.mxu0 %v2705
    %2737 = vmatprep.subr.mxu0 0.0
    %2738 = vmatpush1.msra.mxu0 %v2698
    %2739 = vmatprep.subr.mxu0 0.0
    %2740 = vmatpush2.msra.mxu0 0.0
    %2741 = vmatprep.subr.mxu0 0.0
    %2742 = vmatpush2.msra.mxu0 0.0
    %2743 = vmatprep.subr.mxu0 0.0
    %2744 = vmatpush2.msra.mxu0 0.0
    %2745 = vmatprep.subr.mxu0 0.0
    %2746 = vmatpush2.msra.mxu0 0.0
    %2747 = vmatprep.subr.mxu0 0.0
    %2748 = vmatpush2.msra.mxu0 0.0
    %2749 = vmatprep.subr.mxu0 0.0
    %2750 = vmatpush2.msra.mxu0 0.0
    %2751 = vmatprep.subr.mxu0 0.0
    %2752 = vmatpush2.msra.mxu0 0.0
    %2753 = vmatprep.subr.mxu0 0.0
    %2754 = vmatpush2.msra.mxu0 0.0
    %2755 = vmatprep.subr.mxu0 0.0
    %2756 = vmatpush2.msra.mxu0 0.0
    %2757 = vmatprep.subr.mxu0 0.0
    %2758 = vmatpush2.msra.mxu0 0.0
    %2759 = vmatprep.subr.mxu0 0.0
    %2760 = vmatpush2.msra.mxu0 0.0
    %2761 = vmatprep.subr.mxu0 0.0
    %2762 = vmatpush2.msra.mxu0 0.0
    %2763 = vmatprep.subr.mxu0 0.0
    %2764 = vmatpush2.msra.mxu0 0.0
    %2765 = vmatprep.subr.mxu0 0.0
    %2766 = vmatpush2.msra.mxu0 0.0
    %2767 = vmatprep.subr.mxu0 0.0
    %2768 = vmatpush2.msra.mxu0 0.0
    %2769 = vmatprep.subr.mxu0 0.0
    %2770 = vmatpush2.msra.mxu0 0.0
    %2771 = vmatprep.mubr.f32.mxu0 0.0
    %2772 = vmatmul.mubr.f32.gmra.mxu0 %v2703
    %v2773 = vpop.f32.mrf.mxu0
    %v2774 = vadd.f32 0.0, %v2773
    %v2775 = vpop.f32.mrf.mxu0
    %2776 = vdwg.mxu0
    %2777 = vrot.lane.b32.xlu0 %v1819, 120
    %v2778 = vpop.permute.xlu0 %2777
    %2779 = vrot.lane.b32.xlu0 %v2027, 120
    %v2780 = vpop.permute.xlu0 %2779
    %2781 = vrot.lane.b32.xlu0 %v2034, 120
    %v2782 = vpop.permute.xlu0 %2781
    %v2783 = vsel %vm222, %v2778, 0
    %v2785 = vsel %vm222, %v2780, 0
    %v2787 = vsel %vm222, %v2782, 0
    %2789 = vmatprep.subr.mxu0 0.0
    %2790 = vmatpush1.xpose.msra.mxu0 0.0
    %2791 = vmatprep.subr.mxu0 0.0
    %2792 = vmatpush1.xpose.msra.mxu0 0.0
    %2793 = vmatprep.subr.mxu0 0.0
    %2794 = vmatpush1.xpose.msra.mxu0 0.0
    %2795 = vmatprep.subr.mxu0 0.0
    %2796 = vmatpush1.xpose.msra.mxu0 0.0
    %2797 = vmatprep.subr.mxu0 0.0
    %2798 = vmatpush1.xpose.msra.mxu0 0.0
    %2799 = vmatprep.subr.mxu0 0.0
    %2800 = vmatpush1.xpose.msra.mxu0 0.0
    %2801 = vmatprep.subr.mxu0 0.0
    %2802 = vmatpush1.xpose.msra.mxu0 0.0
    %2803 = vmatprep.subr.mxu0 0.0
    %2804 = vmatpush1.xpose.msra.mxu0 0.0
    %2805 = vmatprep.subr.mxu0 0.0
    %2806 = vmatpush1.xpose.msra.mxu0 0.0
    %2807 = vmatprep.subr.mxu0 0.0
    %2808 = vmatpush1.xpose.msra.mxu0 0.0
    %2809 = vmatprep.subr.mxu0 0.0
    %2810 = vmatpush1.xpose.msra.mxu0 0.0
    %2811 = vmatprep.subr.mxu0 0.0
    %2812 = vmatpush1.xpose.msra.mxu0 0.0
    %2813 = vmatprep.subr.mxu0 0.0
    %2814 = vmatpush1.xpose.msra.mxu0 0.0
    %2815 = vmatprep.subr.mxu0 0.0
    %2816 = vmatpush1.xpose.msra.mxu0 0.0
    %2817 = vmatprep.subr.mxu0 0.0
    %2818 = vmatpush1.xpose.msra.mxu0 %v2787
    %2819 = vmatprep.subr.mxu0 0.0
    %2820 = vmatpush1.xpose.msra.mxu0 %v2785
    %2821 = vmatprep.subr.mxu0 0.0
    %2822 = vmatpush2.xpose.msra.mxu0 0.0
    %2823 = vmatprep.subr.mxu0 0.0
    %2824 = vmatpush2.xpose.msra.mxu0 0.0
    %2825 = vmatprep.subr.mxu0 0.0
    %2826 = vmatpush2.xpose.msra.mxu0 0.0
    %2827 = vmatprep.subr.mxu0 0.0
    %2828 = vmatpush2.xpose.msra.mxu0 0.0
    %2829 = vmatprep.subr.mxu0 0.0
    %2830 = vmatpush2.xpose.msra.mxu0 0.0
    %2831 = vmatprep.subr.mxu0 0.0
    %2832 = vmatpush2.xpose.msra.mxu0 0.0
    %2833 = vmatprep.subr.mxu0 0.0
    %2834 = vmatpush2.xpose.msra.mxu0 0.0
    %2835 = vmatprep.subr.mxu0 0.0
    %2836 = vmatpush2.xpose.msra.mxu0 0.0
    %2837 = vmatprep.subr.mxu0 0.0
    %2838 = vmatpush2.xpose.msra.mxu0 0.0
    %2839 = vmatprep.subr.mxu0 0.0
    %2840 = vmatpush2.xpose.msra.mxu0 0.0
    %2841 = vmatprep.subr.mxu0 0.0
    %2842 = vmatpush2.xpose.msra.mxu0 0.0
    %2843 = vmatprep.subr.mxu0 0.0
    %2844 = vmatpush2.xpose.msra.mxu0 0.0
    %2845 = vmatprep.subr.mxu0 0.0
    %2846 = vmatpush2.xpose.msra.mxu0 0.0
    %2847 = vmatprep.subr.mxu0 0.0
    %2848 = vmatpush2.xpose.msra.mxu0 0.0
    %2849 = vmatprep.subr.mxu0 0.0
    %2850 = vmatpush2.xpose.msra.mxu0 0.0
    %2851 = vmatprep.subr.mxu0 0.0
    %2852 = vmatpush2.xpose.msra.mxu0 0.0
    %2853 = vmatprep.mubr.f32.mxu0 0.0
    %2854 = vmatmul.mubr.f32.gmra.mxu0 %v2783
    %v2855 = vpop.f32.mrf.mxu0
    %v2856 = vadd.f32 0.0, %v2855
    %v2857 = vpop.f32.mrf.mxu0
    %2858 = vdwg.mxu0
    %2859 = vrot.lane.b32.xlu0 %v1824, 120
    %v2860 = vpop.permute.xlu0 %2859
    %2861 = vrot.lane.b32.xlu0 %v2128, 120
    %v2862 = vpop.permute.xlu0 %2861
    %2863 = vrot.lane.b32.xlu0 %v2135, 120
    %v2864 = vpop.permute.xlu0 %2863
    %v2865 = vsel %vm222, %v2860, 0
    %v2867 = vsel %vm222, %v2862, 0
    %v2869 = vsel %vm222, %v2864, 0
    %2871 = vmatprep.subr.mxu0 0.0
    %2872 = vmatpush1.xpose.msra.mxu0 0.0
    %2873 = vmatprep.subr.mxu0 0.0
    %2874 = vmatpush1.xpose.msra.mxu0 0.0
    %2875 = vmatprep.subr.mxu0 0.0
    %2876 = vmatpush1.xpose.msra.mxu0 0.0
    %2877 = vmatprep.subr.mxu0 0.0
    %2878 = vmatpush1.xpose.msra.mxu0 0.0
    %2879 = vmatprep.subr.mxu0 0.0
    %2880 = vmatpush1.xpose.msra.mxu0 0.0
    %2881 = vmatprep.subr.mxu0 0.0
    %2882 = vmatpush1.xpose.msra.mxu0 0.0
    %2883 = vmatprep.subr.mxu0 0.0
    %2884 = vmatpush1.xpose.msra.mxu0 0.0
    %2885 = vmatprep.subr.mxu0 0.0
    %2886 = vmatpush1.xpose.msra.mxu0 0.0
    %2887 = vmatprep.subr.mxu0 0.0
    %2888 = vmatpush1.xpose.msra.mxu0 0.0
    %2889 = vmatprep.subr.mxu0 0.0
    %2890 = vmatpush1.xpose.msra.mxu0 0.0
    %2891 = vmatprep.subr.mxu0 0.0
    %2892 = vmatpush1.xpose.msra.mxu0 0.0
    %2893 = vmatprep.subr.mxu0 0.0
    %2894 = vmatpush1.xpose.msra.mxu0 0.0
    %2895 = vmatprep.subr.mxu0 0.0
    %2896 = vmatpush1.xpose.msra.mxu0 0.0
    %2897 = vmatprep.subr.mxu0 0.0
    %2898 = vmatpush1.xpose.msra.mxu0 0.0
    %2899 = vmatprep.subr.mxu0 0.0
    %2900 = vmatpush1.xpose.msra.mxu0 %v2869
    %2901 = vmatprep.subr.mxu0 0.0
    %2902 = vmatpush1.xpose.msra.mxu0 %v2867
    %2903 = vmatprep.subr.mxu0 0.0
    %2904 = vmatpush2.xpose.msra.mxu0 0.0
    %2905 = vmatprep.subr.mxu0 0.0
    %2906 = vmatpush2.xpose.msra.mxu0 0.0
    %2907 = vmatprep.subr.mxu0 0.0
    %2908 = vmatpush2.xpose.msra.mxu0 0.0
    %2909 = vmatprep.subr.mxu0 0.0
    %2910 = vmatpush2.xpose.msra.mxu0 0.0
    %2911 = vmatprep.subr.mxu0 0.0
    %2912 = vmatpush2.xpose.msra.mxu0 0.0
    %2913 = vmatprep.subr.mxu0 0.0
    %2914 = vmatpush2.xpose.msra.mxu0 0.0
    %2915 = vmatprep.subr.mxu0 0.0
    %2916 = vmatpush2.xpose.msra.mxu0 0.0
    %2917 = vmatprep.subr.mxu0 0.0
    %2918 = vmatpush2.xpose.msra.mxu0 0.0
    %2919 = vmatprep.subr.mxu0 0.0
    %2920 = vmatpush2.xpose.msra.mxu0 0.0
    %2921 = vmatprep.subr.mxu0 0.0
    %2922 = vmatpush2.xpose.msra.mxu0 0.0
    %2923 = vmatprep.subr.mxu0 0.0
    %2924 = vmatpush2.xpose.msra.mxu0 0.0
    %2925 = vmatprep.subr.mxu0 0.0
    %2926 = vmatpush2.xpose.msra.mxu0 0.0
    %2927 = vmatprep.subr.mxu0 0.0
    %2928 = vmatpush2.xpose.msra.mxu0 0.0
    %2929 = vmatprep.subr.mxu0 0.0
    %2930 = vmatpush2.xpose.msra.mxu0 0.0
    %2931 = vmatprep.subr.mxu0 0.0
    %2932 = vmatpush2.xpose.msra.mxu0 0.0
    %2933 = vmatprep.subr.mxu0 0.0
    %2934 = vmatpush2.xpose.msra.mxu0 0.0
    %2935 = vmatprep.mubr.f32.mxu0 0.0
    %2936 = vmatmul.mubr.f32.gmra.mxu0 %v2865
    %v2937 = vpop.f32.mrf.mxu0
    %v2938 = vadd.f32 0.0, %v2937
    %v2939 = vpop.f32.mrf.mxu0
    %2940 = vdwg.mxu0
    %v2941 = vmul.f32 %v2856, 0.5
    %v2942 = vmul.f32 %v2938, 0.5
    %v2943 = vsel %vm2227, -1e+10, %v2941
    %v2944 = vsel %vm2228, -1e+10, %v2942
    %v2945 = vsel %vm2231, %v2943, -inf
    %2946 = vmax.xlane.f32.xlu0 %v2945
    %v2947 = vpop.xlane.xlu0 %2946
    %v2948 = vsel %vm2231, %v2944, -inf
    %2949 = vmax.xlane.f32.xlu0 %v2948
    %v2950 = vpop.xlane.xlu0 %2949
    %v2951 = vsub.f32 %v2943, %v2947
    %v2952 = vsub.f32 %v2944, %v2950
    %v2953 = vmul.f32 %v2951, 1.442695
    %v2954 = vpow.pop %v2953
    %v2955 = vmul.f32 %v2952, 1.442695
    %v2956 = vpow.pop %v2955
    %v2957 = vsel %vm2231, %v2954, 0.0
    %2958 = vadd.xlane.f32.xlu0 %v2957
    %v2959 = vpop.xlane.xlu0 %2958
    %v2960 = vsel %vm2231, %v2956, 0.0
    %2961 = vadd.xlane.f32.xlu0 %v2960
    %v2962 = vpop.xlane.xlu0 %2961
    %v2963 = vrcp.pop %v2959
    %v2964 = vrcp.pop %v2962
    %v2965 = vmul.f32 %v2959, %v2963
    %v2966 = vmul.f32 %v2962, %v2964
    %v2967 = vsub.f32 2.0, %v2965
    %v2968 = vsub.f32 2.0, %v2966
    %v2969 = vmul.f32 %v2963, %v2967
    %v2970 = vmul.f32 %v2964, %v2968
    %v2971 = vmul.f32 %v2954, %v2969
    %v2972 = vmul.f32 %v2956, %v2970
    %2973 = vrot.lane.b32.xlu0 %v2027, 104
    %v2974 = vpop.permute.xlu0 %2973
    %2975 = vrot.lane.b32.xlu0 %v2034, 104
    %v2976 = vpop.permute.xlu0 %2975
    %v2979 = vsel %vm2231, %v2971, 0
    %v2981 = vsel %vm2268, %v2976, 0
    %2983 = vmatprep.subr.mxu0 0.0
    %2984 = vmatpush1.msra.mxu0 0.0
    %2985 = vmatprep.subr.mxu0 0.0
    %2986 = vmatpush1.msra.mxu0 0.0
    %2987 = vmatprep.subr.mxu0 0.0
    %2988 = vmatpush1.msra.mxu0 0.0
    %2989 = vmatprep.subr.mxu0 0.0
    %2990 = vmatpush1.msra.mxu0 0.0
    %2991 = vmatprep.subr.mxu0 0.0
    %2992 = vmatpush1.msra.mxu0 0.0
    %2993 = vmatprep.subr.mxu0 0.0
    %2994 = vmatpush1.msra.mxu0 0.0
    %2995 = vmatprep.subr.mxu0 0.0
    %2996 = vmatpush1.msra.mxu0 0.0
    %2997 = vmatprep.subr.mxu0 0.0
    %2998 = vmatpush1.msra.mxu0 0.0
    %2999 = vmatprep.subr.mxu0 0.0
    %3000 = vmatpush1.msra.mxu0 0.0
    %3001 = vmatprep.subr.mxu0 0.0
    %3002 = vmatpush1.msra.mxu0 0.0
    %3003 = vmatprep.subr.mxu0 0.0
    %3004 = vmatpush1.msra.mxu0 0.0
    %3005 = vmatprep.subr.mxu0 0.0
    %3006 = vmatpush1.msra.mxu0 0.0
    %3007 = vmatprep.subr.mxu0 0.0
    %3008 = vmatpush1.msra.mxu0 0.0
    %3009 = vmatprep.subr.mxu0 0.0
    %3010 = vmatpush1.msra.mxu0 0.0
    %3011 = vmatprep.subr.mxu0 0.0
    %3012 = vmatpush1.msra.mxu0 %v2981
    %3013 = vmatprep.subr.mxu0 0.0
    %3014 = vmatpush1.msra.mxu0 %v2974
    %3015 = vmatprep.subr.mxu0 0.0
    %3016 = vmatpush2.msra.mxu0 0.0
    %3017 = vmatprep.subr.mxu0 0.0
    %3018 = vmatpush2.msra.mxu0 0.0
    %3019 = vmatprep.subr.mxu0 0.0
    %3020 = vmatpush2.msra.mxu0 0.0
    %3021 = vmatprep.subr.mxu0 0.0
    %3022 = vmatpush2.msra.mxu0 0.0
    %3023 = vmatprep.subr.mxu0 0.0
    %3024 = vmatpush2.msra.mxu0 0.0
    %3025 = vmatprep.subr.mxu0 0.0
    %3026 = vmatpush2.msra.mxu0 0.0
    %3027 = vmatprep.subr.mxu0 0.0
    %3028 = vmatpush2.msra.mxu0 0.0
    %3029 = vmatprep.subr.mxu0 0.0
    %3030 = vmatpush2.msra.mxu0 0.0
    %3031 = vmatprep.subr.mxu0 0.0
    %3032 = vmatpush2.msra.mxu0 0.0
    %3033 = vmatprep.subr.mxu0 0.0
    %3034 = vmatpush2.msra.mxu0 0.0
    %3035 = vmatprep.subr.mxu0 0.0
    %3036 = vmatpush2.msra.mxu0 0.0
    %3037 = vmatprep.subr.mxu0 0.0
    %3038 = vmatpush2.msra.mxu0 0.0
    %3039 = vmatprep.subr.mxu0 0.0
    %3040 = vmatpush2.msra.mxu0 0.0
    %3041 = vmatprep.subr.mxu0 0.0
    %3042 = vmatpush2.msra.mxu0 0.0
    %3043 = vmatprep.subr.mxu0 0.0
    %3044 = vmatpush2.msra.mxu0 0.0
    %3045 = vmatprep.subr.mxu0 0.0
    %3046 = vmatpush2.msra.mxu0 0.0
    %3047 = vmatprep.mubr.f32.mxu0 0.0
    %3048 = vmatmul.mubr.f32.gmra.mxu0 %v2979
    %v3049 = vpop.f32.mrf.mxu0
    %v3050 = vadd.f32 0.0, %v3049
    %v3051 = vpop.f32.mrf.mxu0
    %3052 = vdwg.mxu0
    %3053 = vrot.lane.b32.xlu0 %v2128, 104
    %v3054 = vpop.permute.xlu0 %3053
    %3055 = vrot.lane.b32.xlu0 %v2135, 104
    %v3056 = vpop.permute.xlu0 %3055
    %v3059 = vsel %vm2231, %v2972, 0
    %v3061 = vsel %vm2268, %v3056, 0
    %3063 = vmatprep.subr.mxu0 0.0
    %3064 = vmatpush1.msra.mxu0 0.0
    %3065 = vmatprep.subr.mxu0 0.0
    %3066 = vmatpush1.msra.mxu0 0.0
    %3067 = vmatprep.subr.mxu0 0.0
    %3068 = vmatpush1.msra.mxu0 0.0
    %3069 = vmatprep.subr.mxu0 0.0
    %3070 = vmatpush1.msra.mxu0 0.0
    %3071 = vmatprep.subr.mxu0 0.0
    %3072 = vmatpush1.msra.mxu0 0.0
    %3073 = vmatprep.subr.mxu0 0.0
    %3074 = vmatpush1.msra.mxu0 0.0
    %3075 = vmatprep.subr.mxu0 0.0
    %3076 = vmatpush1.msra.mxu0 0.0
    %3077 = vmatprep.subr.mxu0 0.0
    %3078 = vmatpush1.msra.mxu0 0.0
    %3079 = vmatprep.subr.mxu0 0.0
    %3080 = vmatpush1.msra.mxu0 0.0
    %3081 = vmatprep.subr.mxu0 0.0
    %3082 = vmatpush1.msra.mxu0 0.0
    %3083 = vmatprep.subr.mxu0 0.0
    %3084 = vmatpush1.msra.mxu0 0.0
    %3085 = vmatprep.subr.mxu0 0.0
    %3086 = vmatpush1.msra.mxu0 0.0
    %3087 = vmatprep.subr.mxu0 0.0
    %3088 = vmatpush1.msra.mxu0 0.0
    %3089 = vmatprep.subr.mxu0 0.0
    %3090 = vmatpush1.msra.mxu0 0.0
    %3091 = vmatprep.subr.mxu0 0.0
    %3092 = vmatpush1.msra.mxu0 %v3061
    %3093 = vmatprep.subr.mxu0 0.0
    %3094 = vmatpush1.msra.mxu0 %v3054
    %3095 = vmatprep.subr.mxu0 0.0
    %3096 = vmatpush2.msra.mxu0 0.0
    %3097 = vmatprep.subr.mxu0 0.0
    %3098 = vmatpush2.msra.mxu0 0.0
    %3099 = vmatprep.subr.mxu0 0.0
    %3100 = vmatpush2.msra.mxu0 0.0
    %3101 = vmatprep.subr.mxu0 0.0
    %3102 = vmatpush2.msra.mxu0 0.0
    %3103 = vmatprep.subr.mxu0 0.0
    %3104 = vmatpush2.msra.mxu0 0.0
    %3105 = vmatprep.subr.mxu0 0.0
    %3106 = vmatpush2.msra.mxu0 0.0
    %3107 = vmatprep.subr.mxu0 0.0
    %3108 = vmatpush2.msra.mxu0 0.0
    %3109 = vmatprep.subr.mxu0 0.0
    %3110 = vmatpush2.msra.mxu0 0.0
    %3111 = vmatprep.subr.mxu0 0.0
    %3112 = vmatpush2.msra.mxu0 0.0
    %3113 = vmatprep.subr.mxu0 0.0
    %3114 = vmatpush2.msra.mxu0 0.0
    %3115 = vmatprep.subr.mxu0 0.0
    %3116 = vmatpush2.msra.mxu0 0.0
    %3117 = vmatprep.subr.mxu0 0.0
    %3118 = vmatpush2.msra.mxu0 0.0
    %3119 = vmatprep.subr.mxu0 0.0
    %3120 = vmatpush2.msra.mxu0 0.0
    %3121 = vmatprep.subr.mxu0 0.0
    %3122 = vmatpush2.msra.mxu0 0.0
    %3123 = vmatprep.subr.mxu0 0.0
    %3124 = vmatpush2.msra.mxu0 0.0
    %3125 = vmatprep.subr.mxu0 0.0
    %3126 = vmatpush2.msra.mxu0 0.0
    %3127 = vmatprep.mubr.f32.mxu0 0.0
    %3128 = vmatmul.mubr.f32.gmra.mxu0 %v3059
    %v3129 = vpop.f32.mrf.mxu0
    %v3130 = vadd.f32 0.0, %v3129
    %v3131 = vpop.f32.mrf.mxu0
    %3132 = vdwg.mxu0
    %3133 = vrot.lane.b32.xlu0 %v1819, 116
    %v3134 = vpop.permute.xlu0 %3133
    %3135 = vrot.lane.b32.xlu0 %v2027, 116
    %v3136 = vpop.permute.xlu0 %3135
    %3137 = vrot.lane.b32.xlu0 %v2034, 116
    %v3138 = vpop.permute.xlu0 %3137
    %v3139 = vsel %vm222, %v3134, 0
    %v3141 = vsel %vm222, %v3136, 0
    %v3143 = vsel %vm222, %v3138, 0
    %3145 = vmatprep.subr.mxu0 0.0
    %3146 = vmatpush1.xpose.msra.mxu0 0.0
    %3147 = vmatprep.subr.mxu0 0.0
    %3148 = vmatpush1.xpose.msra.mxu0 0.0
    %3149 = vmatprep.subr.mxu0 0.0
    %3150 = vmatpush1.xpose.msra.mxu0 0.0
    %3151 = vmatprep.subr.mxu0 0.0
    %3152 = vmatpush1.xpose.msra.mxu0 0.0
    %3153 = vmatprep.subr.mxu0 0.0
    %3154 = vmatpush1.xpose.msra.mxu0 0.0
    %3155 = vmatprep.subr.mxu0 0.0
    %3156 = vmatpush1.xpose.msra.mxu0 0.0
    %3157 = vmatprep.subr.mxu0 0.0
    %3158 = vmatpush1.xpose.msra.mxu0 0.0
    %3159 = vmatprep.subr.mxu0 0.0
    %3160 = vmatpush1.xpose.msra.mxu0 0.0
    %3161 = vmatprep.subr.mxu0 0.0
    %3162 = vmatpush1.xpose.msra.mxu0 0.0
    %3163 = vmatprep.subr.mxu0 0.0
    %3164 = vmatpush1.xpose.msra.mxu0 0.0
    %3165 = vmatprep.subr.mxu0 0.0
    %3166 = vmatpush1.xpose.msra.mxu0 0.0
    %3167 = vmatprep.subr.mxu0 0.0
    %3168 = vmatpush1.xpose.msra.mxu0 0.0
    %3169 = vmatprep.subr.mxu0 0.0
    %3170 = vmatpush1.xpose.msra.mxu0 0.0
    %3171 = vmatprep.subr.mxu0 0.0
    %3172 = vmatpush1.xpose.msra.mxu0 0.0
    %3173 = vmatprep.subr.mxu0 0.0
    %3174 = vmatpush1.xpose.msra.mxu0 %v3143
    %3175 = vmatprep.subr.mxu0 0.0
    %3176 = vmatpush1.xpose.msra.mxu0 %v3141
    %3177 = vmatprep.subr.mxu0 0.0
    %3178 = vmatpush2.xpose.msra.mxu0 0.0
    %3179 = vmatprep.subr.mxu0 0.0
    %3180 = vmatpush2.xpose.msra.mxu0 0.0
    %3181 = vmatprep.subr.mxu0 0.0
    %3182 = vmatpush2.xpose.msra.mxu0 0.0
    %3183 = vmatprep.subr.mxu0 0.0
    %3184 = vmatpush2.xpose.msra.mxu0 0.0
    %3185 = vmatprep.subr.mxu0 0.0
    %3186 = vmatpush2.xpose.msra.mxu0 0.0
    %3187 = vmatprep.subr.mxu0 0.0
    %3188 = vmatpush2.xpose.msra.mxu0 0.0
    %3189 = vmatprep.subr.mxu0 0.0
    %3190 = vmatpush2.xpose.msra.mxu0 0.0
    %3191 = vmatprep.subr.mxu0 0.0
    %3192 = vmatpush2.xpose.msra.mxu0 0.0
    %3193 = vmatprep.subr.mxu0 0.0
    %3194 = vmatpush2.xpose.msra.mxu0 0.0
    %3195 = vmatprep.subr.mxu0 0.0
    %3196 = vmatpush2.xpose.msra.mxu0 0.0
    %3197 = vmatprep.subr.mxu0 0.0
    %3198 = vmatpush2.xpose.msra.mxu0 0.0
    %3199 = vmatprep.subr.mxu0 0.0
    %3200 = vmatpush2.xpose.msra.mxu0 0.0
    %3201 = vmatprep.subr.mxu0 0.0
    %3202 = vmatpush2.xpose.msra.mxu0 0.0
    %3203 = vmatprep.subr.mxu0 0.0
    %3204 = vmatpush2.xpose.msra.mxu0 0.0
    %3205 = vmatprep.subr.mxu0 0.0
    %3206 = vmatpush2.xpose.msra.mxu0 0.0
    %3207 = vmatprep.subr.mxu0 0.0
    %3208 = vmatpush2.xpose.msra.mxu0 0.0
    %3209 = vmatprep.mubr.f32.mxu0 0.0
    %3210 = vmatmul.mubr.f32.gmra.mxu0 %v3139
    %v3211 = vpop.f32.mrf.mxu0
    %v3212 = vadd.f32 0.0, %v3211
    %v3213 = vpop.f32.mrf.mxu0
    %3214 = vdwg.mxu0
    %3215 = vrot.lane.b32.xlu0 %v1824, 116
    %v3216 = vpop.permute.xlu0 %3215
    %3217 = vrot.lane.b32.xlu0 %v2128, 116
    %v3218 = vpop.permute.xlu0 %3217
    %3219 = vrot.lane.b32.xlu0 %v2135, 116
    %v3220 = vpop.permute.xlu0 %3219
    %v3221 = vsel %vm222, %v3216, 0
    %v3223 = vsel %vm222, %v3218, 0
    %v3225 = vsel %vm222, %v3220, 0
    %3227 = vmatprep.subr.mxu0 0.0
    %3228 = vmatpush1.xpose.msra.mxu0 0.0
    %3229 = vmatprep.subr.mxu0 0.0
    %3230 = vmatpush1.xpose.msra.mxu0 0.0
    %3231 = vmatprep.subr.mxu0 0.0
    %3232 = vmatpush1.xpose.msra.mxu0 0.0
    %3233 = vmatprep.subr.mxu0 0.0
    %3234 = vmatpush1.xpose.msra.mxu0 0.0
    %3235 = vmatprep.subr.mxu0 0.0
    %3236 = vmatpush1.xpose.msra.mxu0 0.0
    %3237 = vmatprep.subr.mxu0 0.0
    %3238 = vmatpush1.xpose.msra.mxu0 0.0
    %3239 = vmatprep.subr.mxu0 0.0
    %3240 = vmatpush1.xpose.msra.mxu0 0.0
    %3241 = vmatprep.subr.mxu0 0.0
    %3242 = vmatpush1.xpose.msra.mxu0 0.0
    %3243 = vmatprep.subr.mxu0 0.0
    %3244 = vmatpush1.xpose.msra.mxu0 0.0
    %3245 = vmatprep.subr.mxu0 0.0
    %3246 = vmatpush1.xpose.msra.mxu0 0.0
    %3247 = vmatprep.subr.mxu0 0.0
    %3248 = vmatpush1.xpose.msra.mxu0 0.0
    %3249 = vmatprep.subr.mxu0 0.0
    %3250 = vmatpush1.xpose.msra.mxu0 0.0
    %3251 = vmatprep.subr.mxu0 0.0
    %3252 = vmatpush1.xpose.msra.mxu0 0.0
    %3253 = vmatprep.subr.mxu0 0.0
    %3254 = vmatpush1.xpose.msra.mxu0 0.0
    %3255 = vmatprep.subr.mxu0 0.0
    %3256 = vmatpush1.xpose.msra.mxu0 %v3225
    %3257 = vmatprep.subr.mxu0 0.0
    %3258 = vmatpush1.xpose.msra.mxu0 %v3223
    %3259 = vmatprep.subr.mxu0 0.0
    %3260 = vmatpush2.xpose.msra.mxu0 0.0
    %3261 = vmatprep.subr.mxu0 0.0
    %3262 = vmatpush2.xpose.msra.mxu0 0.0
    %3263 = vmatprep.subr.mxu0 0.0
    %3264 = vmatpush2.xpose.msra.mxu0 0.0
    %3265 = vmatprep.subr.mxu0 0.0
    %3266 = vmatpush2.xpose.msra.mxu0 0.0
    %3267 = vmatprep.subr.mxu0 0.0
    %3268 = vmatpush2.xpose.msra.mxu0 0.0
    %3269 = vmatprep.subr.mxu0 0.0
    %3270 = vmatpush2.xpose.msra.mxu0 0.0
    %3271 = vmatprep.subr.mxu0 0.0
    %3272 = vmatpush2.xpose.msra.mxu0 0.0
    %3273 = vmatprep.subr.mxu0 0.0
    %3274 = vmatpush2.xpose.msra.mxu0 0.0
    %3275 = vmatprep.subr.mxu0 0.0
    %3276 = vmatpush2.xpose.msra.mxu0 0.0
    %3277 = vmatprep.subr.mxu0 0.0
    %3278 = vmatpush2.xpose.msra.mxu0 0.0
    %3279 = vmatprep.subr.mxu0 0.0
    %3280 = vmatpush2.xpose.msra.mxu0 0.0
    %3281 = vmatprep.subr.mxu0 0.0
    %3282 = vmatpush2.xpose.msra.mxu0 0.0
    %3283 = vmatprep.subr.mxu0 0.0
    %3284 = vmatpush2.xpose.msra.mxu0 0.0
    %3285 = vmatprep.subr.mxu0 0.0
    %3286 = vmatpush2.xpose.msra.mxu0 0.0
    %3287 = vmatprep.subr.mxu0 0.0
    %3288 = vmatpush2.xpose.msra.mxu0 0.0
    %3289 = vmatprep.subr.mxu0 0.0
    %3290 = vmatpush2.xpose.msra.mxu0 0.0
    %3291 = vmatprep.mubr.f32.mxu0 0.0
    %3292 = vmatmul.mubr.f32.gmra.mxu0 %v3221
    %v3293 = vpop.f32.mrf.mxu0
    %v3294 = vadd.f32 0.0, %v3293
    %v3295 = vpop.f32.mrf.mxu0
    %3296 = vdwg.mxu0
    %v3297 = vmul.f32 %v3212, 0.5
    %v3298 = vmul.f32 %v3294, 0.5
    %v3299 = vsel %vm2227, -1e+10, %v3297
    %v3300 = vsel %vm2228, -1e+10, %v3298
    %v3301 = vsel %vm2231, %v3299, -inf
    %3302 = vmax.xlane.f32.xlu0 %v3301
    %v3303 = vpop.xlane.xlu0 %3302
    %v3304 = vsel %vm2231, %v3300, -inf
    %3305 = vmax.xlane.f32.xlu0 %v3304
    %v3306 = vpop.xlane.xlu0 %3305
    %v3307 = vsub.f32 %v3299, %v3303
    %v3308 = vsub.f32 %v3300, %v3306
    %v3309 = vmul.f32 %v3307, 1.442695
    %v3310 = vpow.pop %v3309
    %v3311 = vmul.f32 %v3308, 1.442695
    %v3312 = vpow.pop %v3311
    %v3313 = vsel %vm2231, %v3310, 0.0
    %3314 = vadd.xlane.f32.xlu0 %v3313
    %v3315 = vpop.xlane.xlu0 %3314
    %v3316 = vsel %vm2231, %v3312, 0.0
    %3317 = vadd.xlane.f32.xlu0 %v3316
    %v3318 = vpop.xlane.xlu0 %3317
    %v3319 = vrcp.pop %v3315
    %v3320 = vrcp.pop %v3318
    %v3321 = vmul.f32 %v3315, %v3319
    %v3322 = vmul.f32 %v3318, %v3320
    %v3323 = vsub.f32 2.0, %v3321
    %v3324 = vsub.f32 2.0, %v3322
    %v3325 = vmul.f32 %v3319, %v3323
    %v3326 = vmul.f32 %v3320, %v3324
    %v3327 = vmul.f32 %v3310, %v3325
    %v3328 = vmul.f32 %v3312, %v3326
    %3329 = vrot.lane.b32.xlu0 %v2027, 100
    %v3330 = vpop.permute.xlu0 %3329
    %3331 = vrot.lane.b32.xlu0 %v2034, 100
    %v3332 = vpop.permute.xlu0 %3331
    %v3335 = vsel %vm2231, %v3327, 0
    %v3337 = vsel %vm2268, %v3332, 0
    %3339 = vmatprep.subr.mxu0 0.0
    %3340 = vmatpush1.msra.mxu0 0.0
    %3341 = vmatprep.subr.mxu0 0.0
    %3342 = vmatpush1.msra.mxu0 0.0
    %3343 = vmatprep.subr.mxu0 0.0
    %3344 = vmatpush1.msra.mxu0 0.0
    %3345 = vmatprep.subr.mxu0 0.0
    %3346 = vmatpush1.msra.mxu0 0.0
    %3347 = vmatprep.subr.mxu0 0.0
    %3348 = vmatpush1.msra.mxu0 0.0
    %3349 = vmatprep.subr.mxu0 0.0
    %3350 = vmatpush1.msra.mxu0 0.0
    %3351 = vmatprep.subr.mxu0 0.0
    %3352 = vmatpush1.msra.mxu0 0.0
    %3353 = vmatprep.subr.mxu0 0.0
    %3354 = vmatpush1.msra.mxu0 0.0
    %3355 = vmatprep.subr.mxu0 0.0
    %3356 = vmatpush1.msra.mxu0 0.0
    %3357 = vmatprep.subr.mxu0 0.0
    %3358 = vmatpush1.msra.mxu0 0.0
    %3359 = vmatprep.subr.mxu0 0.0
    %3360 = vmatpush1.msra.mxu0 0.0
    %3361 = vmatprep.subr.mxu0 0.0
    %3362 = vmatpush1.msra.mxu0 0.0
    %3363 = vmatprep.subr.mxu0 0.0
    %3364 = vmatpush1.msra.mxu0 0.0
    %3365 = vmatprep.subr.mxu0 0.0
    %3366 = vmatpush1.msra.mxu0 0.0
    %3367 = vmatprep.subr.mxu0 0.0
    %3368 = vmatpush1.msra.mxu0 %v3337
    %3369 = vmatprep.subr.mxu0 0.0
    %3370 = vmatpush1.msra.mxu0 %v3330
    %3371 = vmatprep.subr.mxu0 0.0
    %3372 = vmatpush2.msra.mxu0 0.0
    %3373 = vmatprep.subr.mxu0 0.0
    %3374 = vmatpush2.msra.mxu0 0.0
    %3375 = vmatprep.subr.mxu0 0.0
    %3376 = vmatpush2.msra.mxu0 0.0
    %3377 = vmatprep.subr.mxu0 0.0
    %3378 = vmatpush2.msra.mxu0 0.0
    %3379 = vmatprep.subr.mxu0 0.0
    %3380 = vmatpush2.msra.mxu0 0.0
    %3381 = vmatprep.subr.mxu0 0.0
    %3382 = vmatpush2.msra.mxu0 0.0
    %3383 = vmatprep.subr.mxu0 0.0
    %3384 = vmatpush2.msra.mxu0 0.0
    %3385 = vmatprep.subr.mxu0 0.0
    %3386 = vmatpush2.msra.mxu0 0.0
    %3387 = vmatprep.subr.mxu0 0.0
    %3388 = vmatpush2.msra.mxu0 0.0
    %3389 = vmatprep.subr.mxu0 0.0
    %3390 = vmatpush2.msra.mxu0 0.0
    %3391 = vmatprep.subr.mxu0 0.0
    %3392 = vmatpush2.msra.mxu0 0.0
    %3393 = vmatprep.subr.mxu0 0.0
    %3394 = vmatpush2.msra.mxu0 0.0
    %3395 = vmatprep.subr.mxu0 0.0
    %3396 = vmatpush2.msra.mxu0 0.0
    %3397 = vmatprep.subr.mxu0 0.0
    %3398 = vmatpush2.msra.mxu0 0.0
    %3399 = vmatprep.subr.mxu0 0.0
    %3400 = vmatpush2.msra.mxu0 0.0
    %3401 = vmatprep.subr.mxu0 0.0
    %3402 = vmatpush2.msra.mxu0 0.0
    %3403 = vmatprep.mubr.f32.mxu0 0.0
    %3404 = vmatmul.mubr.f32.gmra.mxu0 %v3335
    %v3405 = vpop.f32.mrf.mxu0
    %v3406 = vadd.f32 0.0, %v3405
    %v3407 = vpop.f32.mrf.mxu0
    %3408 = vdwg.mxu0
    %3409 = vrot.lane.b32.xlu0 %v2128, 100
    %v3410 = vpop.permute.xlu0 %3409
    %3411 = vrot.lane.b32.xlu0 %v2135, 100
    %v3412 = vpop.permute.xlu0 %3411
    %v3415 = vsel %vm2231, %v3328, 0
    %v3417 = vsel %vm2268, %v3412, 0
    %3419 = vmatprep.subr.mxu0 0.0
    %3420 = vmatpush1.msra.mxu0 0.0
    %3421 = vmatprep.subr.mxu0 0.0
    %3422 = vmatpush1.msra.mxu0 0.0
    %3423 = vmatprep.subr.mxu0 0.0
    %3424 = vmatpush1.msra.mxu0 0.0
    %3425 = vmatprep.subr.mxu0 0.0
    %3426 = vmatpush1.msra.mxu0 0.0
    %3427 = vmatprep.subr.mxu0 0.0
    %3428 = vmatpush1.msra.mxu0 0.0
    %3429 = vmatprep.subr.mxu0 0.0
    %3430 = vmatpush1.msra.mxu0 0.0
    %3431 = vmatprep.subr.mxu0 0.0
    %3432 = vmatpush1.msra.mxu0 0.0
    %3433 = vmatprep.subr.mxu0 0.0
    %3434 = vmatpush1.msra.mxu0 0.0
    %3435 = vmatprep.subr.mxu0 0.0
    %3436 = vmatpush1.msra.mxu0 0.0
    %3437 = vmatprep.subr.mxu0 0.0
    %3438 = vmatpush1.msra.mxu0 0.0
    %3439 = vmatprep.subr.mxu0 0.0
    %3440 = vmatpush1.msra.mxu0 0.0
    %3441 = vmatprep.subr.mxu0 0.0
    %3442 = vmatpush1.msra.mxu0 0.0
    %3443 = vmatprep.subr.mxu0 0.0
    %3444 = vmatpush1.msra.mxu0 0.0
    %3445 = vmatprep.subr.mxu0 0.0
    %3446 = vmatpush1.msra.mxu0 0.0
    %3447 = vmatprep.subr.mxu0 0.0
    %3448 = vmatpush1.msra.mxu0 %v3417
    %3449 = vmatprep.subr.mxu0 0.0
    %3450 = vmatpush1.msra.mxu0 %v3410
    %3451 = vmatprep.subr.mxu0 0.0
    %3452 = vmatpush2.msra.mxu0 0.0
    %3453 = vmatprep.subr.mxu0 0.0
    %3454 = vmatpush2.msra.mxu0 0.0
    %3455 = vmatprep.subr.mxu0 0.0
    %3456 = vmatpush2.msra.mxu0 0.0
    %3457 = vmatprep.subr.mxu0 0.0
    %3458 = vmatpush2.msra.mxu0 0.0
    %3459 = vmatprep.subr.mxu0 0.0
    %3460 = vmatpush2.msra.mxu0 0.0
    %3461 = vmatprep.subr.mxu0 0.0
    %3462 = vmatpush2.msra.mxu0 0.0
    %3463 = vmatprep.subr.mxu0 0.0
    %3464 = vmatpush2.msra.mxu0 0.0
    %3465 = vmatprep.subr.mxu0 0.0
    %3466 = vmatpush2.msra.mxu0 0.0
    %3467 = vmatprep.subr.mxu0 0.0
    %3468 = vmatpush2.msra.mxu0 0.0
    %3469 = vmatprep.subr.mxu0 0.0
    %3470 = vmatpush2.msra.mxu0 0.0
    %3471 = vmatprep.subr.mxu0 0.0
    %3472 = vmatpush2.msra.mxu0 0.0
    %3473 = vmatprep.subr.mxu0 0.0
    %3474 = vmatpush2.msra.mxu0 0.0
    %3475 = vmatprep.subr.mxu0 0.0
    %3476 = vmatpush2.msra.mxu0 0.0
    %3477 = vmatprep.subr.mxu0 0.0
    %3478 = vmatpush2.msra.mxu0 0.0
    %3479 = vmatprep.subr.mxu0 0.0
    %3480 = vmatpush2.msra.mxu0 0.0
    %3481 = vmatprep.subr.mxu0 0.0
    %3482 = vmatpush2.msra.mxu0 0.0
    %3483 = vmatprep.mubr.f32.mxu0 0.0
    %3484 = vmatmul.mubr.f32.gmra.mxu0 %v3415
    %v3485 = vpop.f32.mrf.mxu0
    %v3486 = vadd.f32 0.0, %v3485
    %v3487 = vpop.f32.mrf.mxu0
    %3488 = vdwg.mxu0
    %3491 = vrot.lane.b32.xlu0 %v2694, 4
    %v3492 = vpop.permute.xlu0 %3491
    %3493 = vrot.lane.b32.xlu0 %v2774, 4
    %v3494 = vpop.permute.xlu0 %3493
    %3499 = vrot.lane.b32.xlu0 %v3050, 8
    %v3500 = vpop.permute.xlu0 %3499
    %3501 = vrot.lane.b32.xlu0 %v3130, 8
    %v3502 = vpop.permute.xlu0 %3501
    %3507 = vrot.lane.b32.xlu0 %v3406, 12
    %v3508 = vpop.permute.xlu0 %3507
    %3509 = vrot.lane.b32.xlu0 %v3486, 12
    %v3510 = vpop.permute.xlu0 %3509
    %v3513 = vsel %vm222, %v2338, %v3492
    %v3514 = vsel %vm222, %v2418, %v3494
    %v3515 = vsel %vm380, %v3513, %v3500
    %v3516 = vsel %vm380, %v3514, %v3502
    %v3517 = vsel %vm1609, %v3515, %v3508
    %v3518 = vsel %vm1609, %v3516, %v3510
    %v3520 = vsel %vm137, %v3517, 0
    %v3523 = vsel %vm137, %v3518, 0
    %3525 = vmatprep.subr.mxu0 0.0
    %3526 = vmatpush1.msra.mxu0 0.0
    %3527 = vmatprep.subr.mxu0 0.0
    %3528 = vmatpush1.msra.mxu0 0.0
    %3529 = vmatprep.subr.mxu0 0.0
    %3530 = vmatpush1.msra.mxu0 0.0
    %3531 = vmatprep.subr.mxu0 0.0
    %3532 = vmatpush1.msra.mxu0 0.0
    %3533 = vmatprep.subr.mxu0 0.0
    %3534 = vmatpush1.msra.mxu0 0.0
    %3535 = vmatprep.subr.mxu0 0.0
    %3536 = vmatpush1.msra.mxu0 0.0
    %3537 = vmatprep.subr.mxu0 0.0
    %3538 = vmatpush1.msra.mxu0 0.0
    %3539 = vmatprep.subr.mxu0 0.0
    %3540 = vmatpush1.msra.mxu0 0.0
    %3541 = vmatprep.subr.mxu0 0.0
    %3542 = vmatpush1.msra.mxu0 0.0
    %3543 = vmatprep.subr.mxu0 0.0
    %3544 = vmatpush1.msra.mxu0 0.0
    %3545 = vmatprep.subr.mxu0 0.0
    %3546 = vmatpush1.msra.mxu0 0.0
    %3547 = vmatprep.subr.mxu0 0.0
    %3548 = vmatpush1.msra.mxu0 0.0
    %3549 = vmatprep.subr.mxu0 0.0
    %3550 = vmatpush1.msra.mxu0 0.0
    %3551 = vmatprep.subr.mxu0 0.0
    %3552 = vmatpush1.msra.mxu0 0.0
    %3553 = vmatprep.subr.mxu0 0.0
    %3554 = vmatpush1.msra.mxu0 %v77
    %3555 = vmatprep.subr.mxu0 0.0
    %3556 = vmatpush1.msra.mxu0 %v76
    %3557 = vmatprep.subr.mxu0 0.0
    %3558 = vmatpush2.msra.mxu0 0.0
    %3559 = vmatprep.subr.mxu0 0.0
    %3560 = vmatpush2.msra.mxu0 0.0
    %3561 = vmatprep.subr.mxu0 0.0
    %3562 = vmatpush2.msra.mxu0 0.0
    %3563 = vmatprep.subr.mxu0 0.0
    %3564 = vmatpush2.msra.mxu0 0.0
    %3565 = vmatprep.subr.mxu0 0.0
    %3566 = vmatpush2.msra.mxu0 0.0
    %3567 = vmatprep.subr.mxu0 0.0
    %3568 = vmatpush2.msra.mxu0 0.0
    %3569 = vmatprep.subr.mxu0 0.0
    %3570 = vmatpush2.msra.mxu0 0.0
    %3571 = vmatprep.subr.mxu0 0.0
    %3572 = vmatpush2.msra.mxu0 0.0
    %3573 = vmatprep.subr.mxu0 0.0
    %3574 = vmatpush2.msra.mxu0 0.0
    %3575 = vmatprep.subr.mxu0 0.0
    %3576 = vmatpush2.msra.mxu0 0.0
    %3577 = vmatprep.subr.mxu0 0.0
    %3578 = vmatpush2.msra.mxu0 0.0
    %3579 = vmatprep.subr.mxu0 0.0
    %3580 = vmatpush2.msra.mxu0 0.0
    %3581 = vmatprep.subr.mxu0 0.0
    %3582 = vmatpush2.msra.mxu0 0.0
    %3583 = vmatprep.subr.mxu0 0.0
    %3584 = vmatpush2.msra.mxu0 0.0
    %3585 = vmatprep.subr.mxu0 0.0
    %3586 = vmatpush2.msra.mxu0 0.0
    %3587 = vmatprep.subr.mxu0 0.0
    %3588 = vmatpush2.msra.mxu0 0.0
    %3589 = vmatprep.mubr.f32.mxu0 0.0
    %3590 = vmatmul.mubr.f32.gmra.mxu0 %v3520
    %v3591 = vpop.f32.mrf.mxu0
    %v3592 = vadd.f32 %v1616, %v3591
    %v3593 = vpop.f32.mrf.mxu0
    %3594 = vmatprep.mubr.f32.mxu0 0.0
    %3595 = vmatmul.mubr.f32.gmra.mxu0 %v3523
    %v3596 = vpop.f32.mrf.mxu0
    %v3597 = vadd.f32 %v1616, %v3596
    %v3598 = vpop.f32.mrf.mxu0
    %3599 = vdwg.mxu0
    %v3600 = vadd.f32 %v1744, %v3592
    %v3601 = vadd.f32 %v1745, %v3597
    %v3602 = vld [vmem:[%s10] sm:$0x1]
    %v3603 = vld [vmem:[%s11] sm:$0x1]
    %v3604 = vsel %vm137, %v3600, 0.0
    %3605 = vadd.xlane.f32.xlu0 %v3604
    %v3606 = vpop.xlane.xlu0 %3605
    %v3607 = vsel %vm137, %v3601, 0.0
    %3608 = vadd.xlane.f32.xlu0 %v3607
    %v3609 = vpop.xlane.xlu0 %3608
    %v3610 = vmul.f32 %v3606, %v1709
    %v3611 = vmul.f32 %v3609, %v1709
    %v3612 = vsub.f32 %v3600, %v3610
    %v3613 = vsub.f32 %v3601, %v3611
    %v3614 = vmul.f32 %v3612, %v3612
    %v3615 = vmul.f32 %v3613, %v3613
    %v3616 = vsel %vm137, %v3614, 0.0
    %3617 = vadd.xlane.f32.xlu0 %v3616
    %v3618 = vpop.xlane.xlu0 %3617
    %v3619 = vsel %vm137, %v3615, 0.0
    %3620 = vadd.xlane.f32.xlu0 %v3619
    %v3621 = vpop.xlane.xlu0 %3620
    %v3622 = vmul.f32 %v3618, %v1709
    %v3623 = vmul.f32 %v3621, %v1709
    %v3624 = vadd.f32 %v3622, 1e-05
    %v3625 = vadd.f32 %v3623, 1e-05
    %v3626 = vrsqrt.pop %v3624
    %v3627 = vrsqrt.pop %v3625
    %v3628 = vmul.f32 %v3612, %v3626
    %v3629 = vmul.f32 %v3613, %v3627
    %v3631 = vlaneseq
    %v3632 = vshrl.u32 %v3631, 7
    %v3633 = vsub.s32 0, %v3632
    %v3634 = vrot.slane %v3602, %v3633
    %v3636 = vmul.f32 %v3628, %v3634
    %v3637 = vmul.f32 %v3629, %v3634
    %v3639 = vlaneseq
    %v3640 = vshrl.u32 %v3639, 7
    %v3641 = vsub.s32 0, %v3640
    %v3642 = vrot.slane %v3603, %v3641
    %v3644 = vadd.f32 %v3636, %v3642
    %v3645 = vadd.f32 %v3637, %v3642
    %v3646 = vld [vmem:[%s12] sm:$0xff]
    %v3647 = vld [vmem:[%s12 + $0x8] sm:$0xff]
    %v3648 = vld [vmem:[%s13] sm:$0x1]
    %v3650 = vlaneseq
    %v3651 = vshrl.u32 %v3650, 7
    %v3652 = vsub.s32 0, %v3651
    %v3653 = vrot.slane %v3648, %v3652
    %v3656 = vsel %vm137, %v3644, 0
    %v3659 = vsel %vm137, %v3645, 0
    %3661 = vmatprep.subr.mxu0 0.0
    %3662 = vmatpush1.msra.mxu0 0.0
    %3663 = vmatprep.subr.mxu0 0.0
    %3664 = vmatpush1.msra.mxu0 0.0
    %3665 = vmatprep.subr.mxu0 0.0
    %3666 = vmatpush1.msra.mxu0 0.0
    %3667 = vmatprep.subr.mxu0 0.0
    %3668 = vmatpush1.msra.mxu0 0.0
    %3669 = vmatprep.subr.mxu0 0.0
    %3670 = vmatpush1.msra.mxu0 0.0
    %3671 = vmatprep.subr.mxu0 0.0
    %3672 = vmatpush1.msra.mxu0 0.0
    %3673 = vmatprep.subr.mxu0 0.0
    %3674 = vmatpush1.msra.mxu0 0.0
    %3675 = vmatprep.subr.mxu0 0.0
    %3676 = vmatpush1.msra.mxu0 0.0
    %3677 = vmatprep.subr.mxu0 0.0
    %3678 = vmatpush1.msra.mxu0 0.0
    %3679 = vmatprep.subr.mxu0 0.0
    %3680 = vmatpush1.msra.mxu0 0.0
    %3681 = vmatprep.subr.mxu0 0.0
    %3682 = vmatpush1.msra.mxu0 0.0
    %3683 = vmatprep.subr.mxu0 0.0
    %3684 = vmatpush1.msra.mxu0 0.0
    %3685 = vmatprep.subr.mxu0 0.0
    %3686 = vmatpush1.msra.mxu0 0.0
    %3687 = vmatprep.subr.mxu0 0.0
    %3688 = vmatpush1.msra.mxu0 0.0
    %3689 = vmatprep.subr.mxu0 0.0
    %3690 = vmatpush1.msra.mxu0 %v3647
    %3691 = vmatprep.subr.mxu0 0.0
    %3692 = vmatpush1.msra.mxu0 %v3646
    %3693 = vmatprep.subr.mxu0 0.0
    %3694 = vmatpush2.msra.mxu0 0.0
    %3695 = vmatprep.subr.mxu0 0.0
    %3696 = vmatpush2.msra.mxu0 0.0
    %3697 = vmatprep.subr.mxu0 0.0
    %3698 = vmatpush2.msra.mxu0 0.0
    %3699 = vmatprep.subr.mxu0 0.0
    %3700 = vmatpush2.msra.mxu0 0.0
    %3701 = vmatprep.subr.mxu0 0.0
    %3702 = vmatpush2.msra.mxu0 0.0
    %3703 = vmatprep.subr.mxu0 0.0
    %3704 = vmatpush2.msra.mxu0 0.0
    %3705 = vmatprep.subr.mxu0 0.0
    %3706 = vmatpush2.msra.mxu0 0.0
    %3707 = vmatprep.subr.mxu0 0.0
    %3708 = vmatpush2.msra.mxu0 0.0
    %3709 = vmatprep.subr.mxu0 0.0
    %3710 = vmatpush2.msra.mxu0 0.0
    %3711 = vmatprep.subr.mxu0 0.0
    %3712 = vmatpush2.msra.mxu0 0.0
    %3713 = vmatprep.subr.mxu0 0.0
    %3714 = vmatpush2.msra.mxu0 0.0
    %3715 = vmatprep.subr.mxu0 0.0
    %3716 = vmatpush2.msra.mxu0 0.0
    %3717 = vmatprep.subr.mxu0 0.0
    %3718 = vmatpush2.msra.mxu0 0.0
    %3719 = vmatprep.subr.mxu0 0.0
    %3720 = vmatpush2.msra.mxu0 0.0
    %3721 = vmatprep.subr.mxu0 0.0
    %3722 = vmatpush2.msra.mxu0 0.0
    %3723 = vmatprep.subr.mxu0 0.0
    %3724 = vmatpush2.msra.mxu0 0.0
    %3725 = vmatprep.mubr.f32.mxu0 0.0
    %3726 = vmatmul.mubr.f32.gmra.mxu0 %v3656
    %v3727 = vpop.f32.mrf.mxu0
    %v3728 = vadd.f32 %v3653, %v3727
    %v3729 = vpop.f32.mrf.mxu0
    %3730 = vmatprep.mubr.f32.mxu0 0.0
    %3731 = vmatmul.mubr.f32.gmra.mxu0 %v3659
    %v3732 = vpop.f32.mrf.mxu0
    %v3733 = vadd.f32 %v3653, %v3732
    %v3734 = vpop.f32.mrf.mxu0
    %3735 = vdwg.mxu0
    %v3736 = vmax.f32 %v3728, 0.0
    %v3737 = vmax.f32 %v3733, 0.0
    %v3738 = vld [vmem:[%s14] sm:$0xff]
    %v3739 = vld [vmem:[%s14 + $0x8] sm:$0xff]
    %v3740 = vld [vmem:[%s14 + $0x10] sm:$0xff]
    %v3741 = vld [vmem:[%s14 + $0x18] sm:$0xff]
    %v3742 = vld [vmem:[%s15] sm:$0x1]
    %v3744 = vlaneseq
    %v3745 = vshrl.u32 %v3744, 7
    %v3746 = vsub.s32 0, %v3745
    %v3747 = vrot.slane %v3742, %v3746
    %vm3749 = vcmask 261120
    %v3751 = vsel %vm3749, %v3736, 0
    %v3754 = vsel %vm3749, %v3737, 0
    %3756 = vmatprep.subr.mxu0 0.0
    %3757 = vmatpush1.msra.mxu0 0.0
    %3758 = vmatprep.subr.mxu0 0.0
    %3759 = vmatpush1.msra.mxu0 0.0
    %3760 = vmatprep.subr.mxu0 0.0
    %3761 = vmatpush1.msra.mxu0 0.0
    %3762 = vmatprep.subr.mxu0 0.0
    %3763 = vmatpush1.msra.mxu0 0.0
    %3764 = vmatprep.subr.mxu0 0.0
    %3765 = vmatpush1.msra.mxu0 0.0
    %3766 = vmatprep.subr.mxu0 0.0
    %3767 = vmatpush1.msra.mxu0 0.0
    %3768 = vmatprep.subr.mxu0 0.0
    %3769 = vmatpush1.msra.mxu0 0.0
    %3770 = vmatprep.subr.mxu0 0.0
    %3771 = vmatpush1.msra.mxu0 0.0
    %3772 = vmatprep.subr.mxu0 0.0
    %3773 = vmatpush1.msra.mxu0 0.0
    %3774 = vmatprep.subr.mxu0 0.0
    %3775 = vmatpush1.msra.mxu0 0.0
    %3776 = vmatprep.subr.mxu0 0.0
    %3777 = vmatpush1.msra.mxu0 0.0
    %3778 = vmatprep.subr.mxu0 0.0
    %3779 = vmatpush1.msra.mxu0 0.0
    %3780 = vmatprep.subr.mxu0 0.0
    %3781 = vmatpush1.msra.mxu0 %v3741
    %3782 = vmatprep.subr.mxu0 0.0
    %3783 = vmatpush1.msra.mxu0 %v3740
    %3784 = vmatprep.subr.mxu0 0.0
    %3785 = vmatpush1.msra.mxu0 %v3739
    %3786 = vmatprep.subr.mxu0 0.0
    %3787 = vmatpush1.msra.mxu0 %v3738
    %3788 = vmatprep.subr.mxu0 0.0
    %3789 = vmatpush2.msra.mxu0 0.0
    %3790 = vmatprep.subr.mxu0 0.0
    %3791 = vmatpush2.msra.mxu0 0.0
    %3792 = vmatprep.subr.mxu0 0.0
    %3793 = vmatpush2.msra.mxu0 0.0
    %3794 = vmatprep.subr.mxu0 0.0
    %3795 = vmatpush2.msra.mxu0 0.0
    %3796 = vmatprep.subr.mxu0 0.0
    %3797 = vmatpush2.msra.mxu0 0.0
    %3798 = vmatprep.subr.mxu0 0.0
    %3799 = vmatpush2.msra.mxu0 0.0
    %3800 = vmatprep.subr.mxu0 0.0
    %3801 = vmatpush2.msra.mxu0 0.0
    %3802 = vmatprep.subr.mxu0 0.0
    %3803 = vmatpush2.msra.mxu0 0.0
    %3804 = vmatprep.subr.mxu0 0.0
    %3805 = vmatpush2.msra.mxu0 0.0
    %3806 = vmatprep.subr.mxu0 0.0
    %3807 = vmatpush2.msra.mxu0 0.0
    %3808 = vmatprep.subr.mxu0 0.0
    %3809 = vmatpush2.msra.mxu0 0.0
    %3810 = vmatprep.subr.mxu0 0.0
    %3811 = vmatpush2.msra.mxu0 0.0
    %3812 = vmatprep.subr.mxu0 0.0
    %3813 = vmatpush2.msra.mxu0 0.0
    %3814 = vmatprep.subr.mxu0 0.0
    %3815 = vmatpush2.msra.mxu0 0.0
    %3816 = vmatprep.subr.mxu0 0.0
    %3817 = vmatpush2.msra.mxu0 0.0
    %3818 = vmatprep.subr.mxu0 0.0
    %3819 = vmatpush2.msra.mxu0 0.0
    %3820 = vmatprep.mubr.f32.mxu0 0.0
    %3821 = vmatmul.mubr.f32.gmra.mxu0 %v3751
    %v3822 = vpop.f32.mrf.mxu0
    %v3823 = vadd.f32 %v3747, %v3822
    %v3824 = vpop.f32.mrf.mxu0
    %3825 = vmatprep.mubr.f32.mxu0 0.0
    %3826 = vmatmul.mubr.f32.gmra.mxu0 %v3754
    %v3827 = vpop.f32.mrf.mxu0
    %v3828 = vadd.f32 %v3747, %v3827
    %v3829 = vpop.f32.mrf.mxu0
    %3830 = vdwg.mxu0
    %v3831 = vadd.f32 %v3644, %v3823
    %v3832 = vadd.f32 %v3645, %v3828
    %v3833 = vld [vmem:[%s16] sm:$0x1]
    %v3834 = vld [vmem:[%s17] sm:$0x1]
    %v3835 = vsel %vm137, %v3831, 0.0
    %3836 = vadd.xlane.f32.xlu0 %v3835
    %v3837 = vpop.xlane.xlu0 %3836
    %v3838 = vsel %vm137, %v3832, 0.0
    %3839 = vadd.xlane.f32.xlu0 %v3838
    %v3840 = vpop.xlane.xlu0 %3839
    %v3841 = vmul.f32 %v3837, %v1709
    %v3842 = vmul.f32 %v3840, %v1709
    %v3843 = vsub.f32 %v3831, %v3841
    %v3844 = vsub.f32 %v3832, %v3842
    %v3845 = vmul.f32 %v3843, %v3843
    %v3846 = vmul.f32 %v3844, %v3844
    %v3847 = vsel %vm137, %v3845, 0.0
    %3848 = vadd.xlane.f32.xlu0 %v3847
    %v3849 = vpop.xlane.xlu0 %3848
    %v3850 = vsel %vm137, %v3846, 0.0
    %3851 = vadd.xlane.f32.xlu0 %v3850
    %v3852 = vpop.xlane.xlu0 %3851
    %v3853 = vmul.f32 %v3849, %v1709
    %v3854 = vmul.f32 %v3852, %v1709
    %v3855 = vadd.f32 %v3853, 1e-05
    %v3856 = vadd.f32 %v3854, 1e-05
    %v3857 = vrsqrt.pop %v3855
    %v3858 = vrsqrt.pop %v3856
    %v3859 = vmul.f32 %v3843, %v3857
    %v3860 = vmul.f32 %v3844, %v3858
    %v3862 = vlaneseq
    %v3863 = vshrl.u32 %v3862, 7
    %v3864 = vsub.s32 0, %v3863
    %v3865 = vrot.slane %v3833, %v3864
    %v3867 = vmul.f32 %v3859, %v3865
    %v3868 = vmul.f32 %v3860, %v3865
    %v3870 = vlaneseq
    %v3871 = vshrl.u32 %v3870, 7
    %v3872 = vsub.s32 0, %v3871
    %v3873 = vrot.slane %v3834, %v3872
    %v3875 = vadd.f32 %v3867, %v3873
    %v3876 = vadd.f32 %v3868, %v3873
    %3877 = vst.msk [vmem:[#allocation2] sm:$0xff] %vm137, %v3875
    %3878 = vst.msk [vmem:[#allocation2 + $0x8] sm:$0xff] %vm137, %v3876
    %3879 = vst.msk [vmem:[#allocation4] sm:$0xff] %vm2231, %v2258
    %3880 = vst.msk [vmem:[#allocation4 + $0x8] sm:$0xff] %vm2231, %v2615
    %3881 = vst.msk [vmem:[#allocation4 + $0x10] sm:$0xff] %vm2231, %v2971
    %3882 = vst.msk [vmem:[#allocation4 + $0x18] sm:$0xff] %vm2231, %v3327
    %3883 = vst.msk [vmem:[#allocation4 + $0x20] sm:$0xff] %vm2231, %v2259
    %3884 = vst.msk [vmem:[#allocation4 + $0x28] sm:$0xff] %vm2231, %v2616
    %3885 = vst.msk [vmem:[#allocation4 + $0x30] sm:$0xff] %vm2231, %v2972
    %3886 = vst.msk [vmem:[#allocation4 + $0x38] sm:$0xff] %vm2231, %v3328
    // Predicated region
    $region74: #{tpu_custom_call.1} parent=1 // pred_check
      _
    $region75: #{tpu_custom_call.1} parent=1 // pred_check_branch
      %3888 = sbr.rel (0) target = $region77
    $region76: #{tpu_custom_call.1} parent=1 // pred_region
      %s3890 = ssub.s32 256, 256
      %3891 = vsyncadd [#allocation3], %s3890
      %s3892 = sshll.u32 [#allocation2], 4
      %s3893 = int_to_ptr.vmem [resolvable:$true] %s3892
      %3898 = dma.vmem_to_hbm [thread:$0]  %s3893, 256, %s18, [#allocation3], 128, 128, 8
    $region77: #{tpu_custom_call.1} parent=1 // pred_fallthru
      _
    // Predicated region
    $region78: #{tpu_custom_call.1} parent=1 // pred_check
      _
    $region79: #{tpu_custom_call.1} parent=1 // pred_check_branch
      %3900 = sbr.rel (0) target = $region81
    $region80: #{tpu_custom_call.1} parent=1 // pred_region
      %s3902 = ssub.s32 1024, 1024
      %3903 = vsyncadd [#allocation5], %s3902
      %s3904 = sshll.u32 [#allocation4], 4
      %s3905 = int_to_ptr.vmem [resolvable:$true] %s3904
      %3910 = dma.vmem_to_hbm [thread:$0]  %s3905, 1024, %s19, [#allocation5], 128, 128, 8
    $region81: #{tpu_custom_call.1} parent=1 // pred_fallthru
      _
    // Predicated region
    $region82: #{tpu_custom_call.1} parent=1 // pred_check
      _
    $region83: #{tpu_custom_call.1} parent=1 // pred_check_branch
      %3912 = sbr.rel (0) target = $region85
    $region84: #{tpu_custom_call.1} parent=1 // pred_region
      %3913 = dma.done [#allocation3], 256
    $region85: #{tpu_custom_call.1} parent=1 // pred_fallthru
      _
    // Predicated region
    $region86: #{tpu_custom_call.1} parent=1 // pred_check
      _
    $region87: #{tpu_custom_call.1} parent=1 // pred_check_branch
      %3915 = sbr.rel (0) target = $region89
    $region88: #{tpu_custom_call.1} parent=1 // pred_region
      %3916 = dma.done [#allocation5], 1024
    $region89: #{tpu_custom_call.1} parent=1 // pred_fallthru
      _
    %3917 = vsyncpa [#allocation3], 1
    %3918 = vsyncpa [#allocation5], 1

</llo_original>
